<compile_context>
chip_gen: v7x
topology: tpu7x:2x2x1
jax: 0.10.0
libtpu: 0.0.40
codegen_flags: <defaults>
</compile_context>

<pallas_src>
import jax
import jax.numpy as jnp
from jax import lax
from jax.experimental import pallas as pl
from jax.experimental.pallas import tpu as pltpu


# ------------------------------ fused kernel ------------------------------- #

def _pnet_fused_kernel(x_ref,
                       w1_ref, b1_ref, a1_ref,
                       w2_ref, b2_ref, a2_ref,
                       w3_ref, b3_ref, a3_ref,
                       wh_ref, bh_ref,
                       out_ref):
    f32 = jnp.float32

    def conv_prelu(rows, w2d, bias, alpha, KH, KW):
        """VALID KxK conv (stride 1) + bias + per-channel PReLU.

        `rows` is a list of H (W, Cin) values.  All output pixels go through
        ONE im2col matmul: (Ho*Wo, KH*KW*Cin) x (KH*KW*Cin, Cout).
        Returns the stacked (Ho*Wo, Cout) activation and (Ho, Wo).
        """
        H = len(rows)
        W, _ = rows[0].shape
        Ho, Wo = H - KH + 1, W - KW + 1
        # De-duplicated per-tap sublane slices, shared across output rows.
        sh = [[rows[r][kw:kw + Wo, :] for kw in range(KW)] for r in range(H)]
        patch_rows = [
            jnp.concatenate([sh[h + kh][kw]
                             for kh in range(KH) for kw in range(KW)], axis=-1)
            for h in range(Ho)]                              # Ho x (Wo, K)
        patches = (jnp.concatenate(patch_rows, axis=0)
                   if Ho > 1 else patch_rows[0])             # (Ho*Wo, K)
        y = jnp.dot(patches, w2d, preferred_element_type=f32) + bias
        y = jnp.where(y > 0.0, y, y * alpha)                 # PReLU
        return y, Ho, Wo

    def unstack(y, Ho, Wo):
        return [y[h * Wo:(h + 1) * Wo, :] for h in range(Ho)]

    def maxpool(rows):
        """MaxPool2d(kernel=2, stride=2, ceil_mode=True) — 2 matmuls total.

        Row pairs are reduced with jnp.maximum (VPU), the Hp reduced rows are
        stacked along the lane axis, and the width downsample is two 0/1
        selection matmuls over all rows at once (exact: each selector row has
        a single 1).  Avoids strided-slice / reshape relayout lowering risk.
        """
        H = len(rows)
        W, C = rows[0].shape
        Hp, Wp = -(-H // 2), -(-W // 2)
        rp = []
        for i in range(Hp):
            r = rows[2 * i]
            if 2 * i + 1 < H:                                # ceil-mode H tail
                r = jnp.maximum(r, rows[2 * i + 1])
            rp.append(r)
        lanes = jnp.concatenate(rp, axis=-1) if Hp > 1 else rp[0]  # (W, Hp*C)
        ridx = lax.broadcasted_iota(jnp.int32, (Wp, W), 0)
        cidx = lax.broadcasted_iota(jnp.int32, (Wp, W), 1)
        sel_even = (cidx == 2 * ridx).astype(f32)
        sel_odd = (cidx == 2 * ridx + 1).astype(f32)
        even = jnp.dot(sel_even, lanes, preferred_element_type=f32)  # (Wp, Hp*C)
        odd = jnp.dot(sel_odd, lanes, preferred_element_type=f32)
        if W % 2 != 0:   # ceil-mode width tail: last "odd" column is invalid
            odd_valid = (2 * lax.broadcasted_iota(jnp.int32, (Wp, 1), 0) + 1) < W
            odd = jnp.where(odd_valid, odd, -jnp.inf)
        pooled = jnp.maximum(even, odd)                      # (Wp, Hp*C)
        return [pooled[:, i * C:(i + 1) * C] for i in range(Hp)]

    # Load all weights / biases / alphas once per grid step.
    w1 = w1_ref[...]; b1 = b1_ref[...]; a1 = a1_ref[...]
    w2 = w2_ref[...]; b2 = b2_ref[...]; a2 = a2_ref[...]
    w3 = w3_ref[...]; b3 = b3_ref[...]; a3 = a3_ref[...]
    wh = wh_ref[...]; bh = bh_ref[...]

    x = x_ref[0]                                             # (H, W, Cin)
    rows = [x[h] for h in range(x.shape[0])]

    y, Ho, Wo = conv_prelu(rows, w1, b1, a1, 3, 3)           # conv1 + prelu1
    rows = maxpool(unstack(y, Ho, Wo))                       # pool1 (ceil mode)
    y, Ho, Wo = conv_prelu(rows, w2, b2, a2, 3, 3)           # conv2 + prelu2
    y, Hf, Wf = conv_prelu(unstack(y, Ho, Wo), w3, b3, a3, 3, 3)  # conv3+prelu3

    # Fused 1x1 heads over all final pixels: one (Hf*Wf, 32) x (32, 8) matmul.
    # Columns: [conv4_2 reg (4) | conv4_1 logits -> softmax prob (2) | pad (2)].
    yh = jnp.dot(y, wh, preferred_element_type=f32) + bh     # (Hf*Wf, 8)
    logits = yh[:, 4:6]
    m = jnp.max(logits, axis=-1, keepdims=True)
    e = jnp.exp(logits - m)
    prob = e / jnp.sum(e, axis=-1, keepdims=True)            # softmax over C
    out = jnp.concatenate(
        [yh[:, 0:4], prob, jnp.zeros((Hf * Wf, 2), f32)], axis=-1)
    out_ref[0] = out.astype(out_ref.dtype)                   # single store


# --------------------------------- wrapper ---------------------------------- #

@jax.jit
def pnet_forward(x_nchw, p):
    """Matches PyTorch PNet.forward: input NCHW, returns (b, a) in NCHW."""
    x = jnp.transpose(x_nchw, (0, 2, 3, 1)).astype(jnp.float32)      # -> NHWC
    N, H, W, Cin = x.shape

    # Static output spatial sizes (VALID 3x3 convs, ceil-mode 2x2 pool).
    H1, W1 = H - 2, W - 2
    Hp, Wp = -(-H1 // 2), -(-W1 // 2)
    H2, W2 = Hp - 2, Wp - 2
    Hf, Wf = H2 - 2, W2 - 2

    def row2(v):
        return v.reshape(1, -1)

    # Pre-flatten conv weights HWIO -> (KH*KW*Cin, Cout) for im2col matmuls.
    w1 = p["w1"].reshape(-1, p["w1"].shape[-1])
    w2 = p["w2"].reshape(-1, p["w2"].shape[-1])
    w3 = p["w3"].reshape(-1, p["w3"].shape[-1])
    # Fused lane-dense head weight/bias: [conv4_2 (4) | conv4_1 (2) | pad (2)].
    wh = jnp.concatenate(
        [p["w4_2"], p["w4_1"], jnp.zeros((p["w4_1"].shape[0], 2), jnp.float32)],
        axis=1)                                                       # (32, 8)
    bh = jnp.concatenate(
        [p["b4_2"], p["b4_1"], jnp.zeros((2,), jnp.float32)]).reshape(1, 8)

    args = (x,
            w1, row2(p["b1"]), row2(p["a1"]),
            w2, row2(p["b2"]), row2(p["a2"]),
            w3, row2(p["b3"]), row2(p["a3"]),
            wh, bh)

    in_specs = [pl.BlockSpec((1, H, W, Cin), lambda n: (n, 0, 0, 0))]
    in_specs += [pl.BlockSpec(a.shape, lambda n: (0, 0)) for a in args[1:]]

    out = pl.pallas_call(
        _pnet_fused_kernel,
        out_shape=jax.ShapeDtypeStruct((N, Hf * Wf, 8), jnp.float32),
        grid=(N,),
        in_specs=in_specs,
        out_specs=pl.BlockSpec((1, Hf * Wf, 8), lambda n: (n, 0, 0)),
        compiler_params=pltpu.CompilerParams(
            dimension_semantics=("parallel",),          # batch across TCs (v7x)
            vmem_limit_bytes=32 * 1024 * 1024),
    )(*args)

    out = out.reshape(N, Hf, Wf, 8)
    b = jnp.transpose(out[..., 0:4], (0, 3, 1, 2))       # (N, 4, Hf, Wf)
    a = jnp.transpose(out[..., 4:6], (0, 3, 1, 2))       # (N, 2, Hf, Wf)
    return b, a


# --------------------------- deterministic params ---------------------------- #

def init_params(key):
    ks = jax.random.split(key, 10)

    def w(k, shape):
        fan_in = shape[0] * shape[1] * shape[2] if len(shape) == 4 else shape[0]
        return jax.random.normal(k, shape, jnp.float32) / jnp.sqrt(fan_in)

    return {
        "w1": w(ks[0], (3, 3, 3, 10)),
        "b1": 0.1 * jax.random.normal(ks[1], (10,), jnp.float32),
        "a1": jnp.full((10,), 0.25, jnp.float32),
        "w2": w(ks[2], (3, 3, 10, 16)),
        "b2": 0.1 * jax.random.normal(ks[3], (16,), jnp.float32),
        "a2": jnp.full((16,), 0.25, jnp.float32),
        "w3": w(ks[4], (3, 3, 16, 32)),
        "b3": 0.1 * jax.random.normal(ks[5], (32,), jnp.float32),
        "a3": jnp.full((32,), 0.25, jnp.float32),
        "w4_1": w(ks[6], (32, 2)),
        "b4_1": 0.1 * jax.random.normal(ks[7], (2,), jnp.float32),
        "w4_2": w(ks[8], (32, 4)),
        "b4_2": 0.1 * jax.random.normal(ks[9], (4,), jnp.float32),
    }


# ---------------------------- pure-JAX reference ----------------------------- #

def ref_forward(x_nchw, p):
    x = jnp.transpose(x_nchw, (0, 2, 3, 1)).astype(jnp.float32)

    def conv(x, w, b):
        return lax.conv_general_dilated(
            x, w, (1, 1), "VALID",
            dimension_numbers=("NHWC", "HWIO", "NHWC")) + b

    def prelu(x, a):
        return jnp.where(x > 0, x, x * a)

    x = prelu(conv(x, p["w1"], p["b1"]), p["a1"])
    N, H, W, C = x.shape
    Ho, Wo = -(-H // 2), -(-W // 2)
    xp = jnp.pad(x, ((0, 0), (0, 2 * Ho - H), (0, 2 * Wo - W), (0, 0)),
                 constant_values=-jnp.inf)
    x = xp.reshape(N, Ho, 2, Wo, 2, C).max(axis=(2, 4))
    x = prelu(conv(x, p["w2"], p["b2"]), p["a2"])
    x = prelu(conv(x, p["w3"], p["b3"]), p["a3"])
    logits = jnp.einsum("nhwc,co->nhwo", x, p["w4_1"]) + p["b4_1"]
    a = jax.nn.softmax(logits, axis=-1)
    b = jnp.einsum("nhwc,co->nhwo", x, p["w4_2"]) + p["b4_2"]
    return jnp.transpose(b, (0, 3, 1, 2)), jnp.transpose(a, (0, 3, 1, 2))


# ----------------------------------- main ------------------------------------ #

if __name__ == "__main__":
    key = jax.random.PRNGKey(0)
    kx, kp = jax.random.split(key)
    x = jax.random.normal(kx, (2, 3, 16, 16), jnp.float32)   # NCHW, like PyTorch
    params = init_params(kp)

    b_out, a_out = pnet_forward(x, params)
    jax.block_until_ready((b_out, a_out))

    b_ref, a_ref = ref_forward(x, params)
    assert b_out.shape == (2, 4, 3, 3) and a_out.shape == (2, 2, 3, 3)
    assert jnp.allclose(b_out, b_ref, atol=1e-4, rtol=1e-4)
    assert jnp.allclose(a_out, a_ref, atol=1e-4, rtol=1e-4)

    print("KERNEL_OK")
</pallas_src>

<mosaic_0001>
module attributes {stable_mosaic.version = 11 : i64} {
  func.func @_pnet_fused_kernel(%arg0: i32, %arg1: memref<1x16x16x3xf32, #tpu.memory_space<vmem>>, %arg2: memref<27x10xf32, #tpu.memory_space<vmem>>, %arg3: memref<1x10xf32, #tpu.memory_space<vmem>>, %arg4: memref<1x10xf32, #tpu.memory_space<vmem>>, %arg5: memref<90x16xf32, #tpu.memory_space<vmem>>, %arg6: memref<1x16xf32, #tpu.memory_space<vmem>>, %arg7: memref<1x16xf32, #tpu.memory_space<vmem>>, %arg8: memref<144x32xf32, #tpu.memory_space<vmem>>, %arg9: memref<1x32xf32, #tpu.memory_space<vmem>>, %arg10: memref<1x32xf32, #tpu.memory_space<vmem>>, %arg11: memref<32x8xf32, #tpu.memory_space<vmem>>, %arg12: memref<1x8xf32, #tpu.memory_space<vmem>>, %arg13: memref<1x9x8xf32, #tpu.memory_space<vmem>>) attributes {dimension_semantics = [#tpu.dimension_semantics<parallel>], iteration_bounds = array<i64: 2>, scalar_prefetch = 0 : i64, scratch_operands = 0 : i64, tpu.core_type = #tpu.core_type<tc>, window_params = [{transform_indices = @transform_0, window_bounds = array<i64: 1, 16, 16, 3>}, {pipeline_mode = #tpu.pipeline_mode<synchronous>, transform_indices = @transform_1, window_bounds = array<i64: 27, 10>}, {pipeline_mode = #tpu.pipeline_mode<synchronous>, transform_indices = @transform_2, window_bounds = array<i64: 1, 10>}, {pipeline_mode = #tpu.pipeline_mode<synchronous>, transform_indices = @transform_3, window_bounds = array<i64: 1, 10>}, {pipeline_mode = #tpu.pipeline_mode<synchronous>, transform_indices = @transform_4, window_bounds = array<i64: 90, 16>}, {pipeline_mode = #tpu.pipeline_mode<synchronous>, transform_indices = @transform_5, window_bounds = array<i64: 1, 16>}, {pipeline_mode = #tpu.pipeline_mode<synchronous>, transform_indices = @transform_6, window_bounds = array<i64: 1, 16>}, {pipeline_mode = #tpu.pipeline_mode<synchronous>, transform_indices = @transform_7, window_bounds = array<i64: 144, 32>}, {pipeline_mode = #tpu.pipeline_mode<synchronous>, transform_indices = @transform_8, window_bounds = array<i64: 1, 32>}, {pipeline_mode = #tpu.pipeline_mode<synchronous>, transform_indices = @transform_9, window_bounds = array<i64: 1, 32>}, {pipeline_mode = #tpu.pipeline_mode<synchronous>, transform_indices = @transform_10, window_bounds = array<i64: 32, 8>}, {pipeline_mode = #tpu.pipeline_mode<synchronous>, transform_indices = @transform_11, window_bounds = array<i64: 1, 8>}, {transform_indices = @transform_12, window_bounds = array<i64: 1, 9, 8>}]} {
    %c0 = arith.constant 0 : index
    %c0_0 = arith.constant 0 : index
    %0 = vector.load %arg2[%c0, %c0_0] : memref<27x10xf32, #tpu.memory_space<vmem>>, vector<27x10xf32>
    %c0_1 = arith.constant 0 : index
    %c0_2 = arith.constant 0 : index
    %1 = vector.load %arg3[%c0_1, %c0_2] : memref<1x10xf32, #tpu.memory_space<vmem>>, vector<1x10xf32>
    %c0_3 = arith.constant 0 : index
    %c0_4 = arith.constant 0 : index
    %2 = vector.load %arg4[%c0_3, %c0_4] : memref<1x10xf32, #tpu.memory_space<vmem>>, vector<1x10xf32>
    %c0_5 = arith.constant 0 : index
    %c0_6 = arith.constant 0 : index
    %3 = vector.load %arg5[%c0_5, %c0_6] : memref<90x16xf32, #tpu.memory_space<vmem>>, vector<90x16xf32>
    %c0_7 = arith.constant 0 : index
    %c0_8 = arith.constant 0 : index
    %4 = vector.load %arg6[%c0_7, %c0_8] : memref<1x16xf32, #tpu.memory_space<vmem>>, vector<1x16xf32>
    %c0_9 = arith.constant 0 : index
    %c0_10 = arith.constant 0 : index
    %5 = vector.load %arg7[%c0_9, %c0_10] : memref<1x16xf32, #tpu.memory_space<vmem>>, vector<1x16xf32>
    %c0_11 = arith.constant 0 : index
    %c0_12 = arith.constant 0 : index
    %6 = vector.load %arg8[%c0_11, %c0_12] : memref<144x32xf32, #tpu.memory_space<vmem>>, vector<144x32xf32>
    %c0_13 = arith.constant 0 : index
    %c0_14 = arith.constant 0 : index
    %7 = vector.load %arg9[%c0_13, %c0_14] : memref<1x32xf32, #tpu.memory_space<vmem>>, vector<1x32xf32>
    %c0_15 = arith.constant 0 : index
    %c0_16 = arith.constant 0 : index
    %8 = vector.load %arg10[%c0_15, %c0_16] : memref<1x32xf32, #tpu.memory_space<vmem>>, vector<1x32xf32>
    %c0_17 = arith.constant 0 : index
    %c0_18 = arith.constant 0 : index
    %9 = vector.load %arg11[%c0_17, %c0_18] : memref<32x8xf32, #tpu.memory_space<vmem>>, vector<32x8xf32>
    %c0_19 = arith.constant 0 : index
    %c0_20 = arith.constant 0 : index
    %10 = vector.load %arg12[%c0_19, %c0_20] : memref<1x8xf32, #tpu.memory_space<vmem>>, vector<1x8xf32>
    %c0_21 = arith.constant 0 : index
    %c0_22 = arith.constant 0 : index
    %c0_23 = arith.constant 0 : index
    %c0_24 = arith.constant 0 : index
    %11 = vector.load %arg1[%c0_21, %c0_22, %c0_23, %c0_24] : memref<1x16x16x3xf32, #tpu.memory_space<vmem>>, vector<1x16x16x3xf32>
    %12 = vector.shape_cast %11 : vector<1x16x16x3xf32> to vector<16x16x3xf32>
    %13 = vector.extract_strided_slice %12 {offsets = [0, 0, 0], sizes = [1, 16, 3], strides = [1, 1, 1]} : vector<16x16x3xf32> to vector<1x16x3xf32>
    %14 = vector.shape_cast %13 : vector<1x16x3xf32> to vector<16x3xf32>
    %15 = vector.extract_strided_slice %12 {offsets = [1, 0, 0], sizes = [1, 16, 3], strides = [1, 1, 1]} : vector<16x16x3xf32> to vector<1x16x3xf32>
    %16 = vector.shape_cast %15 : vector<1x16x3xf32> to vector<16x3xf32>
    %17 = vector.extract_strided_slice %12 {offsets = [2, 0, 0], sizes = [1, 16, 3], strides = [1, 1, 1]} : vector<16x16x3xf32> to vector<1x16x3xf32>
    %18 = vector.shape_cast %17 : vector<1x16x3xf32> to vector<16x3xf32>
    %19 = vector.extract_strided_slice %12 {offsets = [3, 0, 0], sizes = [1, 16, 3], strides = [1, 1, 1]} : vector<16x16x3xf32> to vector<1x16x3xf32>
    %20 = vector.shape_cast %19 : vector<1x16x3xf32> to vector<16x3xf32>
    %21 = vector.extract_strided_slice %12 {offsets = [4, 0, 0], sizes = [1, 16, 3], strides = [1, 1, 1]} : vector<16x16x3xf32> to vector<1x16x3xf32>
    %22 = vector.shape_cast %21 : vector<1x16x3xf32> to vector<16x3xf32>
    %23 = vector.extract_strided_slice %12 {offsets = [5, 0, 0], sizes = [1, 16, 3], strides = [1, 1, 1]} : vector<16x16x3xf32> to vector<1x16x3xf32>
    %24 = vector.shape_cast %23 : vector<1x16x3xf32> to vector<16x3xf32>
    %25 = vector.extract_strided_slice %12 {offsets = [6, 0, 0], sizes = [1, 16, 3], strides = [1, 1, 1]} : vector<16x16x3xf32> to vector<1x16x3xf32>
    %26 = vector.shape_cast %25 : vector<1x16x3xf32> to vector<16x3xf32>
    %27 = vector.extract_strided_slice %12 {offsets = [7, 0, 0], sizes = [1, 16, 3], strides = [1, 1, 1]} : vector<16x16x3xf32> to vector<1x16x3xf32>
    %28 = vector.shape_cast %27 : vector<1x16x3xf32> to vector<16x3xf32>
    %29 = vector.extract_strided_slice %12 {offsets = [8, 0, 0], sizes = [1, 16, 3], strides = [1, 1, 1]} : vector<16x16x3xf32> to vector<1x16x3xf32>
    %30 = vector.shape_cast %29 : vector<1x16x3xf32> to vector<16x3xf32>
    %31 = vector.extract_strided_slice %12 {offsets = [9, 0, 0], sizes = [1, 16, 3], strides = [1, 1, 1]} : vector<16x16x3xf32> to vector<1x16x3xf32>
    %32 = vector.shape_cast %31 : vector<1x16x3xf32> to vector<16x3xf32>
    %33 = vector.extract_strided_slice %12 {offsets = [10, 0, 0], sizes = [1, 16, 3], strides = [1, 1, 1]} : vector<16x16x3xf32> to vector<1x16x3xf32>
    %34 = vector.shape_cast %33 : vector<1x16x3xf32> to vector<16x3xf32>
    %35 = vector.extract_strided_slice %12 {offsets = [11, 0, 0], sizes = [1, 16, 3], strides = [1, 1, 1]} : vector<16x16x3xf32> to vector<1x16x3xf32>
    %36 = vector.shape_cast %35 : vector<1x16x3xf32> to vector<16x3xf32>
    %37 = vector.extract_strided_slice %12 {offsets = [12, 0, 0], sizes = [1, 16, 3], strides = [1, 1, 1]} : vector<16x16x3xf32> to vector<1x16x3xf32>
    %38 = vector.shape_cast %37 : vector<1x16x3xf32> to vector<16x3xf32>
    %39 = vector.extract_strided_slice %12 {offsets = [13, 0, 0], sizes = [1, 16, 3], strides = [1, 1, 1]} : vector<16x16x3xf32> to vector<1x16x3xf32>
    %40 = vector.shape_cast %39 : vector<1x16x3xf32> to vector<16x3xf32>
    %41 = vector.extract_strided_slice %12 {offsets = [14, 0, 0], sizes = [1, 16, 3], strides = [1, 1, 1]} : vector<16x16x3xf32> to vector<1x16x3xf32>
    %42 = vector.shape_cast %41 : vector<1x16x3xf32> to vector<16x3xf32>
    %43 = vector.extract_strided_slice %12 {offsets = [15, 0, 0], sizes = [1, 16, 3], strides = [1, 1, 1]} : vector<16x16x3xf32> to vector<1x16x3xf32>
    %44 = vector.shape_cast %43 : vector<1x16x3xf32> to vector<16x3xf32>
    %45 = vector.extract_strided_slice %14 {offsets = [0, 0], sizes = [14, 3], strides = [1, 1]} : vector<16x3xf32> to vector<14x3xf32>
    %46 = vector.extract_strided_slice %14 {offsets = [1, 0], sizes = [14, 3], strides = [1, 1]} : vector<16x3xf32> to vector<14x3xf32>
    %47 = vector.extract_strided_slice %14 {offsets = [2, 0], sizes = [14, 3], strides = [1, 1]} : vector<16x3xf32> to vector<14x3xf32>
    %48 = vector.extract_strided_slice %16 {offsets = [0, 0], sizes = [14, 3], strides = [1, 1]} : vector<16x3xf32> to vector<14x3xf32>
    %49 = vector.extract_strided_slice %16 {offsets = [1, 0], sizes = [14, 3], strides = [1, 1]} : vector<16x3xf32> to vector<14x3xf32>
    %50 = vector.extract_strided_slice %16 {offsets = [2, 0], sizes = [14, 3], strides = [1, 1]} : vector<16x3xf32> to vector<14x3xf32>
    %51 = vector.extract_strided_slice %18 {offsets = [0, 0], sizes = [14, 3], strides = [1, 1]} : vector<16x3xf32> to vector<14x3xf32>
    %52 = vector.extract_strided_slice %18 {offsets = [1, 0], sizes = [14, 3], strides = [1, 1]} : vector<16x3xf32> to vector<14x3xf32>
    %53 = vector.extract_strided_slice %18 {offsets = [2, 0], sizes = [14, 3], strides = [1, 1]} : vector<16x3xf32> to vector<14x3xf32>
    %54 = vector.extract_strided_slice %20 {offsets = [0, 0], sizes = [14, 3], strides = [1, 1]} : vector<16x3xf32> to vector<14x3xf32>
    %55 = vector.extract_strided_slice %20 {offsets = [1, 0], sizes = [14, 3], strides = [1, 1]} : vector<16x3xf32> to vector<14x3xf32>
    %56 = vector.extract_strided_slice %20 {offsets = [2, 0], sizes = [14, 3], strides = [1, 1]} : vector<16x3xf32> to vector<14x3xf32>
    %57 = vector.extract_strided_slice %22 {offsets = [0, 0], sizes = [14, 3], strides = [1, 1]} : vector<16x3xf32> to vector<14x3xf32>
    %58 = vector.extract_strided_slice %22 {offsets = [1, 0], sizes = [14, 3], strides = [1, 1]} : vector<16x3xf32> to vector<14x3xf32>
    %59 = vector.extract_strided_slice %22 {offsets = [2, 0], sizes = [14, 3], strides = [1, 1]} : vector<16x3xf32> to vector<14x3xf32>
    %60 = vector.extract_strided_slice %24 {offsets = [0, 0], sizes = [14, 3], strides = [1, 1]} : vector<16x3xf32> to vector<14x3xf32>
    %61 = vector.extract_strided_slice %24 {offsets = [1, 0], sizes = [14, 3], strides = [1, 1]} : vector<16x3xf32> to vector<14x3xf32>
    %62 = vector.extract_strided_slice %24 {offsets = [2, 0], sizes = [14, 3], strides = [1, 1]} : vector<16x3xf32> to vector<14x3xf32>
    %63 = vector.extract_strided_slice %26 {offsets = [0, 0], sizes = [14, 3], strides = [1, 1]} : vector<16x3xf32> to vector<14x3xf32>
    %64 = vector.extract_strided_slice %26 {offsets = [1, 0], sizes = [14, 3], strides = [1, 1]} : vector<16x3xf32> to vector<14x3xf32>
    %65 = vector.extract_strided_slice %26 {offsets = [2, 0], sizes = [14, 3], strides = [1, 1]} : vector<16x3xf32> to vector<14x3xf32>
    %66 = vector.extract_strided_slice %28 {offsets = [0, 0], sizes = [14, 3], strides = [1, 1]} : vector<16x3xf32> to vector<14x3xf32>
    %67 = vector.extract_strided_slice %28 {offsets = [1, 0], sizes = [14, 3], strides = [1, 1]} : vector<16x3xf32> to vector<14x3xf32>
    %68 = vector.extract_strided_slice %28 {offsets = [2, 0], sizes = [14, 3], strides = [1, 1]} : vector<16x3xf32> to vector<14x3xf32>
    %69 = vector.extract_strided_slice %30 {offsets = [0, 0], sizes = [14, 3], strides = [1, 1]} : vector<16x3xf32> to vector<14x3xf32>
    %70 = vector.extract_strided_slice %30 {offsets = [1, 0], sizes = [14, 3], strides = [1, 1]} : vector<16x3xf32> to vector<14x3xf32>
    %71 = vector.extract_strided_slice %30 {offsets = [2, 0], sizes = [14, 3], strides = [1, 1]} : vector<16x3xf32> to vector<14x3xf32>
    %72 = vector.extract_strided_slice %32 {offsets = [0, 0], sizes = [14, 3], strides = [1, 1]} : vector<16x3xf32> to vector<14x3xf32>
    %73 = vector.extract_strided_slice %32 {offsets = [1, 0], sizes = [14, 3], strides = [1, 1]} : vector<16x3xf32> to vector<14x3xf32>
    %74 = vector.extract_strided_slice %32 {offsets = [2, 0], sizes = [14, 3], strides = [1, 1]} : vector<16x3xf32> to vector<14x3xf32>
    %75 = vector.extract_strided_slice %34 {offsets = [0, 0], sizes = [14, 3], strides = [1, 1]} : vector<16x3xf32> to vector<14x3xf32>
    %76 = vector.extract_strided_slice %34 {offsets = [1, 0], sizes = [14, 3], strides = [1, 1]} : vector<16x3xf32> to vector<14x3xf32>
    %77 = vector.extract_strided_slice %34 {offsets = [2, 0], sizes = [14, 3], strides = [1, 1]} : vector<16x3xf32> to vector<14x3xf32>
    %78 = vector.extract_strided_slice %36 {offsets = [0, 0], sizes = [14, 3], strides = [1, 1]} : vector<16x3xf32> to vector<14x3xf32>
    %79 = vector.extract_strided_slice %36 {offsets = [1, 0], sizes = [14, 3], strides = [1, 1]} : vector<16x3xf32> to vector<14x3xf32>
    %80 = vector.extract_strided_slice %36 {offsets = [2, 0], sizes = [14, 3], strides = [1, 1]} : vector<16x3xf32> to vector<14x3xf32>
    %81 = vector.extract_strided_slice %38 {offsets = [0, 0], sizes = [14, 3], strides = [1, 1]} : vector<16x3xf32> to vector<14x3xf32>
    %82 = vector.extract_strided_slice %38 {offsets = [1, 0], sizes = [14, 3], strides = [1, 1]} : vector<16x3xf32> to vector<14x3xf32>
    %83 = vector.extract_strided_slice %38 {offsets = [2, 0], sizes = [14, 3], strides = [1, 1]} : vector<16x3xf32> to vector<14x3xf32>
    %84 = vector.extract_strided_slice %40 {offsets = [0, 0], sizes = [14, 3], strides = [1, 1]} : vector<16x3xf32> to vector<14x3xf32>
    %85 = vector.extract_strided_slice %40 {offsets = [1, 0], sizes = [14, 3], strides = [1, 1]} : vector<16x3xf32> to vector<14x3xf32>
    %86 = vector.extract_strided_slice %40 {offsets = [2, 0], sizes = [14, 3], strides = [1, 1]} : vector<16x3xf32> to vector<14x3xf32>
    %87 = vector.extract_strided_slice %42 {offsets = [0, 0], sizes = [14, 3], strides = [1, 1]} : vector<16x3xf32> to vector<14x3xf32>
    %88 = vector.extract_strided_slice %42 {offsets = [1, 0], sizes = [14, 3], strides = [1, 1]} : vector<16x3xf32> to vector<14x3xf32>
    %89 = vector.extract_strided_slice %42 {offsets = [2, 0], sizes = [14, 3], strides = [1, 1]} : vector<16x3xf32> to vector<14x3xf32>
    %90 = vector.extract_strided_slice %44 {offsets = [0, 0], sizes = [14, 3], strides = [1, 1]} : vector<16x3xf32> to vector<14x3xf32>
    %91 = vector.extract_strided_slice %44 {offsets = [1, 0], sizes = [14, 3], strides = [1, 1]} : vector<16x3xf32> to vector<14x3xf32>
    %92 = vector.extract_strided_slice %44 {offsets = [2, 0], sizes = [14, 3], strides = [1, 1]} : vector<16x3xf32> to vector<14x3xf32>
    %93 = tpu.concatenate %45, %46, %47, %48, %49, %50, %51, %52, %53 in 1 : vector<14x3xf32>, vector<14x3xf32>, vector<14x3xf32>, vector<14x3xf32>, vector<14x3xf32>, vector<14x3xf32>, vector<14x3xf32>, vector<14x3xf32>, vector<14x3xf32> -> vector<14x27xf32>
    %94 = tpu.concatenate %48, %49, %50, %51, %52, %53, %54, %55, %56 in 1 : vector<14x3xf32>, vector<14x3xf32>, vector<14x3xf32>, vector<14x3xf32>, vector<14x3xf32>, vector<14x3xf32>, vector<14x3xf32>, vector<14x3xf32>, vector<14x3xf32> -> vector<14x27xf32>
    %95 = tpu.concatenate %51, %52, %53, %54, %55, %56, %57, %58, %59 in 1 : vector<14x3xf32>, vector<14x3xf32>, vector<14x3xf32>, vector<14x3xf32>, vector<14x3xf32>, vector<14x3xf32>, vector<14x3xf32>, vector<14x3xf32>, vector<14x3xf32> -> vector<14x27xf32>
    %96 = tpu.concatenate %54, %55, %56, %57, %58, %59, %60, %61, %62 in 1 : vector<14x3xf32>, vector<14x3xf32>, vector<14x3xf32>, vector<14x3xf32>, vector<14x3xf32>, vector<14x3xf32>, vector<14x3xf32>, vector<14x3xf32>, vector<14x3xf32> -> vector<14x27xf32>
    %97 = tpu.concatenate %57, %58, %59, %60, %61, %62, %63, %64, %65 in 1 : vector<14x3xf32>, vector<14x3xf32>, vector<14x3xf32>, vector<14x3xf32>, vector<14x3xf32>, vector<14x3xf32>, vector<14x3xf32>, vector<14x3xf32>, vector<14x3xf32> -> vector<14x27xf32>
    %98 = tpu.concatenate %60, %61, %62, %63, %64, %65, %66, %67, %68 in 1 : vector<14x3xf32>, vector<14x3xf32>, vector<14x3xf32>, vector<14x3xf32>, vector<14x3xf32>, vector<14x3xf32>, vector<14x3xf32>, vector<14x3xf32>, vector<14x3xf32> -> vector<14x27xf32>
    %99 = tpu.concatenate %63, %64, %65, %66, %67, %68, %69, %70, %71 in 1 : vector<14x3xf32>, vector<14x3xf32>, vector<14x3xf32>, vector<14x3xf32>, vector<14x3xf32>, vector<14x3xf32>, vector<14x3xf32>, vector<14x3xf32>, vector<14x3xf32> -> vector<14x27xf32>
    %100 = tpu.concatenate %66, %67, %68, %69, %70, %71, %72, %73, %74 in 1 : vector<14x3xf32>, vector<14x3xf32>, vector<14x3xf32>, vector<14x3xf32>, vector<14x3xf32>, vector<14x3xf32>, vector<14x3xf32>, vector<14x3xf32>, vector<14x3xf32> -> vector<14x27xf32>
    %101 = tpu.concatenate %69, %70, %71, %72, %73, %74, %75, %76, %77 in 1 : vector<14x3xf32>, vector<14x3xf32>, vector<14x3xf32>, vector<14x3xf32>, vector<14x3xf32>, vector<14x3xf32>, vector<14x3xf32>, vector<14x3xf32>, vector<14x3xf32> -> vector<14x27xf32>
    %102 = tpu.concatenate %72, %73, %74, %75, %76, %77, %78, %79, %80 in 1 : vector<14x3xf32>, vector<14x3xf32>, vector<14x3xf32>, vector<14x3xf32>, vector<14x3xf32>, vector<14x3xf32>, vector<14x3xf32>, vector<14x3xf32>, vector<14x3xf32> -> vector<14x27xf32>
    %103 = tpu.concatenate %75, %76, %77, %78, %79, %80, %81, %82, %83 in 1 : vector<14x3xf32>, vector<14x3xf32>, vector<14x3xf32>, vector<14x3xf32>, vector<14x3xf32>, vector<14x3xf32>, vector<14x3xf32>, vector<14x3xf32>, vector<14x3xf32> -> vector<14x27xf32>
    %104 = tpu.concatenate %78, %79, %80, %81, %82, %83, %84, %85, %86 in 1 : vector<14x3xf32>, vector<14x3xf32>, vector<14x3xf32>, vector<14x3xf32>, vector<14x3xf32>, vector<14x3xf32>, vector<14x3xf32>, vector<14x3xf32>, vector<14x3xf32> -> vector<14x27xf32>
    %105 = tpu.concatenate %81, %82, %83, %84, %85, %86, %87, %88, %89 in 1 : vector<14x3xf32>, vector<14x3xf32>, vector<14x3xf32>, vector<14x3xf32>, vector<14x3xf32>, vector<14x3xf32>, vector<14x3xf32>, vector<14x3xf32>, vector<14x3xf32> -> vector<14x27xf32>
    %106 = tpu.concatenate %84, %85, %86, %87, %88, %89, %90, %91, %92 in 1 : vector<14x3xf32>, vector<14x3xf32>, vector<14x3xf32>, vector<14x3xf32>, vector<14x3xf32>, vector<14x3xf32>, vector<14x3xf32>, vector<14x3xf32>, vector<14x3xf32> -> vector<14x27xf32>
    %107 = tpu.concatenate %93, %94, %95, %96, %97, %98, %99, %100, %101, %102, %103, %104, %105, %106 in 0 : vector<14x27xf32>, vector<14x27xf32>, vector<14x27xf32>, vector<14x27xf32>, vector<14x27xf32>, vector<14x27xf32>, vector<14x27xf32>, vector<14x27xf32>, vector<14x27xf32>, vector<14x27xf32>, vector<14x27xf32>, vector<14x27xf32>, vector<14x27xf32>, vector<14x27xf32> -> vector<196x27xf32>
    %cst = arith.constant dense<0.000000e+00> : vector<196x10xf32>
    %108 = tpu.matmul %107, %0, %cst {dimension_numbers = #tpu.dot_dimension_numbers<[1], [0], [0], [1], [0, 0, 1, 1], [], []>} : vector<196x27xf32>, vector<27x10xf32>, vector<196x10xf32> -> vector<196x10xf32>
    %109 = vector.broadcast %1 : vector<1x10xf32> to vector<196x10xf32>
    %110 = arith.addf %108, %109 : vector<196x10xf32>
    %cst_25 = arith.constant 0.000000e+00 : f32
    %111 = vector.broadcast %cst_25 : f32 to vector<196x10xf32>
    %112 = arith.cmpf ogt, %110, %111 : vector<196x10xf32>
    %113 = vector.broadcast %2 : vector<1x10xf32> to vector<196x10xf32>
    %114 = arith.mulf %110, %113 : vector<196x10xf32>
    %115 = arith.select %112, %110, %114 : vector<196x10xi1>, vector<196x10xf32>
    %116 = vector.extract_strided_slice %115 {offsets = [0, 0], sizes = [14, 10], strides = [1, 1]} : vector<196x10xf32> to vector<14x10xf32>
    %117 = vector.extract_strided_slice %115 {offsets = [14, 0], sizes = [14, 10], strides = [1, 1]} : vector<196x10xf32> to vector<14x10xf32>
    %118 = vector.extract_strided_slice %115 {offsets = [28, 0], sizes = [14, 10], strides = [1, 1]} : vector<196x10xf32> to vector<14x10xf32>
    %119 = vector.extract_strided_slice %115 {offsets = [42, 0], sizes = [14, 10], strides = [1, 1]} : vector<196x10xf32> to vector<14x10xf32>
    %120 = vector.extract_strided_slice %115 {offsets = [56, 0], sizes = [14, 10], strides = [1, 1]} : vector<196x10xf32> to vector<14x10xf32>
    %121 = vector.extract_strided_slice %115 {offsets = [70, 0], sizes = [14, 10], strides = [1, 1]} : vector<196x10xf32> to vector<14x10xf32>
    %122 = vector.extract_strided_slice %115 {offsets = [84, 0], sizes = [14, 10], strides = [1, 1]} : vector<196x10xf32> to vector<14x10xf32>
    %123 = vector.extract_strided_slice %115 {offsets = [98, 0], sizes = [14, 10], strides = [1, 1]} : vector<196x10xf32> to vector<14x10xf32>
    %124 = vector.extract_strided_slice %115 {offsets = [112, 0], sizes = [14, 10], strides = [1, 1]} : vector<196x10xf32> to vector<14x10xf32>
    %125 = vector.extract_strided_slice %115 {offsets = [126, 0], sizes = [14, 10], strides = [1, 1]} : vector<196x10xf32> to vector<14x10xf32>
    %126 = vector.extract_strided_slice %115 {offsets = [140, 0], sizes = [14, 10], strides = [1, 1]} : vector<196x10xf32> to vector<14x10xf32>
    %127 = vector.extract_strided_slice %115 {offsets = [154, 0], sizes = [14, 10], strides = [1, 1]} : vector<196x10xf32> to vector<14x10xf32>
    %128 = vector.extract_strided_slice %115 {offsets = [168, 0], sizes = [14, 10], strides = [1, 1]} : vector<196x10xf32> to vector<14x10xf32>
    %129 = vector.extract_strided_slice %115 {offsets = [182, 0], sizes = [14, 10], strides = [1, 1]} : vector<196x10xf32> to vector<14x10xf32>
    %130 = arith.maximumf %116, %117 : vector<14x10xf32>
    %131 = arith.maximumf %118, %119 : vector<14x10xf32>
    %132 = arith.maximumf %120, %121 : vector<14x10xf32>
    %133 = arith.maximumf %122, %123 : vector<14x10xf32>
    %134 = arith.maximumf %124, %125 : vector<14x10xf32>
    %135 = arith.maximumf %126, %127 : vector<14x10xf32>
    %136 = arith.maximumf %128, %129 : vector<14x10xf32>
    %137 = tpu.concatenate %130, %131, %132, %133, %134, %135, %136 in 1 : vector<14x10xf32>, vector<14x10xf32>, vector<14x10xf32>, vector<14x10xf32>, vector<14x10xf32>, vector<14x10xf32>, vector<14x10xf32> -> vector<14x70xf32>
    %138 = tpu.iota {dimensions = array<i32: 0>} : vector<7x14xi32>
    %139 = tpu.iota {dimensions = array<i32: 1>} : vector<7x14xi32>
    %c2_i32 = arith.constant 2 : i32
    %140 = vector.broadcast %c2_i32 : i32 to vector<7x14xi32>
    %141 = arith.muli %140, %138 : vector<7x14xi32>
    %142 = arith.cmpi eq, %139, %141 : vector<7x14xi32>
    %143 = arith.extui %142 : vector<7x14xi1> to vector<7x14xi32>
    %144 = arith.sitofp %143 : vector<7x14xi32> to vector<7x14xf32>
    %c2_i32_26 = arith.constant 2 : i32
    %145 = vector.broadcast %c2_i32_26 : i32 to vector<7x14xi32>
    %146 = arith.muli %145, %138 : vector<7x14xi32>
    %c1_i32 = arith.constant 1 : i32
    %147 = vector.broadcast %c1_i32 : i32 to vector<7x14xi32>
    %148 = arith.addi %146, %147 : vector<7x14xi32>
    %149 = arith.cmpi eq, %139, %148 : vector<7x14xi32>
    %150 = arith.extui %149 : vector<7x14xi1> to vector<7x14xi32>
    %151 = arith.sitofp %150 : vector<7x14xi32> to vector<7x14xf32>
    %cst_27 = arith.constant dense<0.000000e+00> : vector<7x70xf32>
    %152 = tpu.matmul %144, %137, %cst_27 {dimension_numbers = #tpu.dot_dimension_numbers<[1], [0], [0], [1], [0, 0, 1, 1], [], []>} : vector<7x14xf32>, vector<14x70xf32>, vector<7x70xf32> -> vector<7x70xf32>
    %cst_28 = arith.constant dense<0.000000e+00> : vector<7x70xf32>
    %153 = tpu.matmul %151, %137, %cst_28 {dimension_numbers = #tpu.dot_dimension_numbers<[1], [0], [0], [1], [0, 0, 1, 1], [], []>} : vector<7x14xf32>, vector<14x70xf32>, vector<7x70xf32> -> vector<7x70xf32>
    %154 = arith.maximumf %152, %153 : vector<7x70xf32>
    %155 = vector.extract_strided_slice %154 {offsets = [0, 0], sizes = [7, 10], strides = [1, 1]} : vector<7x70xf32> to vector<7x10xf32>
    %156 = vector.extract_strided_slice %154 {offsets = [0, 10], sizes = [7, 10], strides = [1, 1]} : vector<7x70xf32> to vector<7x10xf32>
    %157 = vector.extract_strided_slice %154 {offsets = [0, 20], sizes = [7, 10], strides = [1, 1]} : vector<7x70xf32> to vector<7x10xf32>
    %158 = vector.extract_strided_slice %154 {offsets = [0, 30], sizes = [7, 10], strides = [1, 1]} : vector<7x70xf32> to vector<7x10xf32>
    %159 = vector.extract_strided_slice %154 {offsets = [0, 40], sizes = [7, 10], strides = [1, 1]} : vector<7x70xf32> to vector<7x10xf32>
    %160 = vector.extract_strided_slice %154 {offsets = [0, 50], sizes = [7, 10], strides = [1, 1]} : vector<7x70xf32> to vector<7x10xf32>
    %161 = vector.extract_strided_slice %154 {offsets = [0, 60], sizes = [7, 10], strides = [1, 1]} : vector<7x70xf32> to vector<7x10xf32>
    %162 = vector.extract_strided_slice %155 {offsets = [0, 0], sizes = [5, 10], strides = [1, 1]} : vector<7x10xf32> to vector<5x10xf32>
    %163 = vector.extract_strided_slice %155 {offsets = [1, 0], sizes = [5, 10], strides = [1, 1]} : vector<7x10xf32> to vector<5x10xf32>
    %164 = vector.extract_strided_slice %155 {offsets = [2, 0], sizes = [5, 10], strides = [1, 1]} : vector<7x10xf32> to vector<5x10xf32>
    %165 = vector.extract_strided_slice %156 {offsets = [0, 0], sizes = [5, 10], strides = [1, 1]} : vector<7x10xf32> to vector<5x10xf32>
    %166 = vector.extract_strided_slice %156 {offsets = [1, 0], sizes = [5, 10], strides = [1, 1]} : vector<7x10xf32> to vector<5x10xf32>
    %167 = vector.extract_strided_slice %156 {offsets = [2, 0], sizes = [5, 10], strides = [1, 1]} : vector<7x10xf32> to vector<5x10xf32>
    %168 = vector.extract_strided_slice %157 {offsets = [0, 0], sizes = [5, 10], strides = [1, 1]} : vector<7x10xf32> to vector<5x10xf32>
    %169 = vector.extract_strided_slice %157 {offsets = [1, 0], sizes = [5, 10], strides = [1, 1]} : vector<7x10xf32> to vector<5x10xf32>
    %170 = vector.extract_strided_slice %157 {offsets = [2, 0], sizes = [5, 10], strides = [1, 1]} : vector<7x10xf32> to vector<5x10xf32>
    %171 = vector.extract_strided_slice %158 {offsets = [0, 0], sizes = [5, 10], strides = [1, 1]} : vector<7x10xf32> to vector<5x10xf32>
    %172 = vector.extract_strided_slice %158 {offsets = [1, 0], sizes = [5, 10], strides = [1, 1]} : vector<7x10xf32> to vector<5x10xf32>
    %173 = vector.extract_strided_slice %158 {offsets = [2, 0], sizes = [5, 10], strides = [1, 1]} : vector<7x10xf32> to vector<5x10xf32>
    %174 = vector.extract_strided_slice %159 {offsets = [0, 0], sizes = [5, 10], strides = [1, 1]} : vector<7x10xf32> to vector<5x10xf32>
    %175 = vector.extract_strided_slice %159 {offsets = [1, 0], sizes = [5, 10], strides = [1, 1]} : vector<7x10xf32> to vector<5x10xf32>
    %176 = vector.extract_strided_slice %159 {offsets = [2, 0], sizes = [5, 10], strides = [1, 1]} : vector<7x10xf32> to vector<5x10xf32>
    %177 = vector.extract_strided_slice %160 {offsets = [0, 0], sizes = [5, 10], strides = [1, 1]} : vector<7x10xf32> to vector<5x10xf32>
    %178 = vector.extract_strided_slice %160 {offsets = [1, 0], sizes = [5, 10], strides = [1, 1]} : vector<7x10xf32> to vector<5x10xf32>
    %179 = vector.extract_strided_slice %160 {offsets = [2, 0], sizes = [5, 10], strides = [1, 1]} : vector<7x10xf32> to vector<5x10xf32>
    %180 = vector.extract_strided_slice %161 {offsets = [0, 0], sizes = [5, 10], strides = [1, 1]} : vector<7x10xf32> to vector<5x10xf32>
    %181 = vector.extract_strided_slice %161 {offsets = [1, 0], sizes = [5, 10], strides = [1, 1]} : vector<7x10xf32> to vector<5x10xf32>
    %182 = vector.extract_strided_slice %161 {offsets = [2, 0], sizes = [5, 10], strides = [1, 1]} : vector<7x10xf32> to vector<5x10xf32>
    %183 = tpu.concatenate %162, %163, %164, %165, %166, %167, %168, %169, %170 in 1 : vector<5x10xf32>, vector<5x10xf32>, vector<5x10xf32>, vector<5x10xf32>, vector<5x10xf32>, vector<5x10xf32>, vector<5x10xf32>, vector<5x10xf32>, vector<5x10xf32> -> vector<5x90xf32>
    %184 = tpu.concatenate %165, %166, %167, %168, %169, %170, %171, %172, %173 in 1 : vector<5x10xf32>, vector<5x10xf32>, vector<5x10xf32>, vector<5x10xf32>, vector<5x10xf32>, vector<5x10xf32>, vector<5x10xf32>, vector<5x10xf32>, vector<5x10xf32> -> vector<5x90xf32>
    %185 = tpu.concatenate %168, %169, %170, %171, %172, %173, %174, %175, %176 in 1 : vector<5x10xf32>, vector<5x10xf32>, vector<5x10xf32>, vector<5x10xf32>, vector<5x10xf32>, vector<5x10xf32>, vector<5x10xf32>, vector<5x10xf32>, vector<5x10xf32> -> vector<5x90xf32>
    %186 = tpu.concatenate %171, %172, %173, %174, %175, %176, %177, %178, %179 in 1 : vector<5x10xf32>, vector<5x10xf32>, vector<5x10xf32>, vector<5x10xf32>, vector<5x10xf32>, vector<5x10xf32>, vector<5x10xf32>, vector<5x10xf32>, vector<5x10xf32> -> vector<5x90xf32>
    %187 = tpu.concatenate %174, %175, %176, %177, %178, %179, %180, %181, %182 in 1 : vector<5x10xf32>, vector<5x10xf32>, vector<5x10xf32>, vector<5x10xf32>, vector<5x10xf32>, vector<5x10xf32>, vector<5x10xf32>, vector<5x10xf32>, vector<5x10xf32> -> vector<5x90xf32>
    %188 = tpu.concatenate %183, %184, %185, %186, %187 in 0 : vector<5x90xf32>, vector<5x90xf32>, vector<5x90xf32>, vector<5x90xf32>, vector<5x90xf32> -> vector<25x90xf32>
    %cst_29 = arith.constant dense<0.000000e+00> : vector<25x16xf32>
    %189 = tpu.matmul %188, %3, %cst_29 {dimension_numbers = #tpu.dot_dimension_numbers<[1], [0], [0], [1], [0, 0, 1, 1], [], []>} : vector<25x90xf32>, vector<90x16xf32>, vector<25x16xf32> -> vector<25x16xf32>
    %190 = vector.broadcast %4 : vector<1x16xf32> to vector<25x16xf32>
    %191 = arith.addf %189, %190 : vector<25x16xf32>
    %cst_30 = arith.constant 0.000000e+00 : f32
    %192 = vector.broadcast %cst_30 : f32 to vector<25x16xf32>
    %193 = arith.cmpf ogt, %191, %192 : vector<25x16xf32>
    %194 = vector.broadcast %5 : vector<1x16xf32> to vector<25x16xf32>
    %195 = arith.mulf %191, %194 : vector<25x16xf32>
    %196 = arith.select %193, %191, %195 : vector<25x16xi1>, vector<25x16xf32>
    %197 = vector.extract_strided_slice %196 {offsets = [0, 0], sizes = [5, 16], strides = [1, 1]} : vector<25x16xf32> to vector<5x16xf32>
    %198 = vector.extract_strided_slice %196 {offsets = [5, 0], sizes = [5, 16], strides = [1, 1]} : vector<25x16xf32> to vector<5x16xf32>
    %199 = vector.extract_strided_slice %196 {offsets = [10, 0], sizes = [5, 16], strides = [1, 1]} : vector<25x16xf32> to vector<5x16xf32>
    %200 = vector.extract_strided_slice %196 {offsets = [15, 0], sizes = [5, 16], strides = [1, 1]} : vector<25x16xf32> to vector<5x16xf32>
    %201 = vector.extract_strided_slice %196 {offsets = [20, 0], sizes = [5, 16], strides = [1, 1]} : vector<25x16xf32> to vector<5x16xf32>
    %202 = vector.extract_strided_slice %197 {offsets = [0, 0], sizes = [3, 16], strides = [1, 1]} : vector<5x16xf32> to vector<3x16xf32>
    %203 = vector.extract_strided_slice %197 {offsets = [1, 0], sizes = [3, 16], strides = [1, 1]} : vector<5x16xf32> to vector<3x16xf32>
    %204 = vector.extract_strided_slice %197 {offsets = [2, 0], sizes = [3, 16], strides = [1, 1]} : vector<5x16xf32> to vector<3x16xf32>
    %205 = vector.extract_strided_slice %198 {offsets = [0, 0], sizes = [3, 16], strides = [1, 1]} : vector<5x16xf32> to vector<3x16xf32>
    %206 = vector.extract_strided_slice %198 {offsets = [1, 0], sizes = [3, 16], strides = [1, 1]} : vector<5x16xf32> to vector<3x16xf32>
    %207 = vector.extract_strided_slice %198 {offsets = [2, 0], sizes = [3, 16], strides = [1, 1]} : vector<5x16xf32> to vector<3x16xf32>
    %208 = vector.extract_strided_slice %199 {offsets = [0, 0], sizes = [3, 16], strides = [1, 1]} : vector<5x16xf32> to vector<3x16xf32>
    %209 = vector.extract_strided_slice %199 {offsets = [1, 0], sizes = [3, 16], strides = [1, 1]} : vector<5x16xf32> to vector<3x16xf32>
    %210 = vector.extract_strided_slice %199 {offsets = [2, 0], sizes = [3, 16], strides = [1, 1]} : vector<5x16xf32> to vector<3x16xf32>
    %211 = vector.extract_strided_slice %200 {offsets = [0, 0], sizes = [3, 16], strides = [1, 1]} : vector<5x16xf32> to vector<3x16xf32>
    %212 = vector.extract_strided_slice %200 {offsets = [1, 0], sizes = [3, 16], strides = [1, 1]} : vector<5x16xf32> to vector<3x16xf32>
    %213 = vector.extract_strided_slice %200 {offsets = [2, 0], sizes = [3, 16], strides = [1, 1]} : vector<5x16xf32> to vector<3x16xf32>
    %214 = vector.extract_strided_slice %201 {offsets = [0, 0], sizes = [3, 16], strides = [1, 1]} : vector<5x16xf32> to vector<3x16xf32>
    %215 = vector.extract_strided_slice %201 {offsets = [1, 0], sizes = [3, 16], strides = [1, 1]} : vector<5x16xf32> to vector<3x16xf32>
    %216 = vector.extract_strided_slice %201 {offsets = [2, 0], sizes = [3, 16], strides = [1, 1]} : vector<5x16xf32> to vector<3x16xf32>
    %217 = tpu.concatenate %202, %203, %204, %205, %206, %207, %208, %209, %210 in 1 : vector<3x16xf32>, vector<3x16xf32>, vector<3x16xf32>, vector<3x16xf32>, vector<3x16xf32>, vector<3x16xf32>, vector<3x16xf32>, vector<3x16xf32>, vector<3x16xf32> -> vector<3x144xf32>
    %218 = tpu.concatenate %205, %206, %207, %208, %209, %210, %211, %212, %213 in 1 : vector<3x16xf32>, vector<3x16xf32>, vector<3x16xf32>, vector<3x16xf32>, vector<3x16xf32>, vector<3x16xf32>, vector<3x16xf32>, vector<3x16xf32>, vector<3x16xf32> -> vector<3x144xf32>
    %219 = tpu.concatenate %208, %209, %210, %211, %212, %213, %214, %215, %216 in 1 : vector<3x16xf32>, vector<3x16xf32>, vector<3x16xf32>, vector<3x16xf32>, vector<3x16xf32>, vector<3x16xf32>, vector<3x16xf32>, vector<3x16xf32>, vector<3x16xf32> -> vector<3x144xf32>
    %220 = tpu.concatenate %217, %218, %219 in 0 : vector<3x144xf32>, vector<3x144xf32>, vector<3x144xf32> -> vector<9x144xf32>
    %cst_31 = arith.constant dense<0.000000e+00> : vector<9x32xf32>
    %221 = tpu.matmul %220, %6, %cst_31 {dimension_numbers = #tpu.dot_dimension_numbers<[1], [0], [0], [1], [0, 0, 1, 1], [], []>} : vector<9x144xf32>, vector<144x32xf32>, vector<9x32xf32> -> vector<9x32xf32>
    %222 = vector.broadcast %7 : vector<1x32xf32> to vector<9x32xf32>
    %223 = arith.addf %221, %222 : vector<9x32xf32>
    %cst_32 = arith.constant 0.000000e+00 : f32
    %224 = vector.broadcast %cst_32 : f32 to vector<9x32xf32>
    %225 = arith.cmpf ogt, %223, %224 : vector<9x32xf32>
    %226 = vector.broadcast %8 : vector<1x32xf32> to vector<9x32xf32>
    %227 = arith.mulf %223, %226 : vector<9x32xf32>
    %228 = arith.select %225, %223, %227 : vector<9x32xi1>, vector<9x32xf32>
    %cst_33 = arith.constant dense<0.000000e+00> : vector<9x8xf32>
    %229 = tpu.matmul %228, %9, %cst_33 {dimension_numbers = #tpu.dot_dimension_numbers<[1], [0], [0], [1], [0, 0, 1, 1], [], []>} : vector<9x32xf32>, vector<32x8xf32>, vector<9x8xf32> -> vector<9x8xf32>
    %230 = vector.broadcast %10 : vector<1x8xf32> to vector<9x8xf32>
    %231 = arith.addf %229, %230 : vector<9x8xf32>
    %232 = vector.extract_strided_slice %231 {offsets = [0, 4], sizes = [9, 2], strides = [1, 1]} : vector<9x8xf32> to vector<9x2xf32>
    %cst_34 = arith.constant dense<0xFF800000> : vector<9xf32>
    %233 = vector.multi_reduction <maximumf>, %232, %cst_34 [1] : vector<9x2xf32> to vector<9xf32>
    %234 = vector.shape_cast %233 : vector<9xf32> to vector<9x1xf32>
    %235 = vector.broadcast %234 : vector<9x1xf32> to vector<9x2xf32>
    %236 = arith.subf %232, %235 : vector<9x2xf32>
    %237 = math.exp %236 : vector<9x2xf32>
    %cst_35 = arith.constant dense<0.000000e+00> : vector<9xf32>
    %238 = vector.multi_reduction <add>, %237, %cst_35 [1] : vector<9x2xf32> to vector<9xf32>
    %239 = vector.shape_cast %238 : vector<9xf32> to vector<9x1xf32>
    %240 = vector.broadcast %239 : vector<9x1xf32> to vector<9x2xf32>
    %241 = arith.divf %237, %240 : vector<9x2xf32>
    %242 = vector.extract_strided_slice %231 {offsets = [0, 0], sizes = [9, 4], strides = [1, 1]} : vector<9x8xf32> to vector<9x4xf32>
    %cst_36 = arith.constant 0.000000e+00 : f32
    %243 = vector.broadcast %cst_36 : f32 to vector<9x2xf32>
    %244 = tpu.concatenate %242, %241, %243 in 1 : vector<9x4xf32>, vector<9x2xf32>, vector<9x2xf32> -> vector<9x8xf32>
    %c0_37 = arith.constant 0 : index
    %c0_38 = arith.constant 0 : index
    %c0_39 = arith.constant 0 : index
    %245 = vector.load %arg13[%c0_37, %c0_38, %c0_39] : memref<1x9x8xf32, #tpu.memory_space<vmem>>, vector<1x9x8xf32>
    %246 = vector.shape_cast %245 : vector<1x9x8xf32> to vector<9x8xf32>
    %247 = vector.shape_cast %244 : vector<9x8xf32> to vector<1x9x8xf32>
    tpu.vector_store %arg13[%c0_37, %c0_38, %c0_39], %247 {strides = array<i32>} : memref<1x9x8xf32, #tpu.memory_space<vmem>>, vector<1x9x8xf32>,
    return
  }
  func.func @transform_0(%arg0: i32) -> (i32, i32, i32, i32) {
    %c0_i32 = arith.constant 0 : i32
    %c0_i32_0 = arith.constant 0 : i32
    %c0_i32_1 = arith.constant 0 : i32
    %c0_i32_2 = arith.constant 0 : i32
    return %arg0, %c0_i32, %c0_i32_0, %c0_i32_1 : i32, i32, i32, i32
  }
  func.func @transform_1(%arg0: i32) -> (i32, i32) {
    %c0_i32 = arith.constant 0 : i32
    %c0_i32_0 = arith.constant 0 : i32
    %c0_i32_1 = arith.constant 0 : i32
    return %c0_i32, %c0_i32_0 : i32, i32
  }
  func.func @transform_2(%arg0: i32) -> (i32, i32) {
    %c0_i32 = arith.constant 0 : i32
    %c0_i32_0 = arith.constant 0 : i32
    %c0_i32_1 = arith.constant 0 : i32
    return %c0_i32, %c0_i32_0 : i32, i32
  }
  func.func @transform_3(%arg0: i32) -> (i32, i32) {
    %c0_i32 = arith.constant 0 : i32
    %c0_i32_0 = arith.constant 0 : i32
    %c0_i32_1 = arith.constant 0 : i32
    return %c0_i32, %c0_i32_0 : i32, i32
  }
  func.func @transform_4(%arg0: i32) -> (i32, i32) {
    %c0_i32 = arith.constant 0 : i32
    %c0_i32_0 = arith.constant 0 : i32
    %c0_i32_1 = arith.constant 0 : i32
    return %c0_i32, %c0_i32_0 : i32, i32
  }
  func.func @transform_5(%arg0: i32) -> (i32, i32) {
    %c0_i32 = arith.constant 0 : i32
    %c0_i32_0 = arith.constant 0 : i32
    %c0_i32_1 = arith.constant 0 : i32
    return %c0_i32, %c0_i32_0 : i32, i32
  }
  func.func @transform_6(%arg0: i32) -> (i32, i32) {
    %c0_i32 = arith.constant 0 : i32
    %c0_i32_0 = arith.constant 0 : i32
    %c0_i32_1 = arith.constant 0 : i32
    return %c0_i32, %c0_i32_0 : i32, i32
  }
  func.func @transform_7(%arg0: i32) -> (i32, i32) {
    %c0_i32 = arith.constant 0 : i32
    %c0_i32_0 = arith.constant 0 : i32
    %c0_i32_1 = arith.constant 0 : i32
    return %c0_i32, %c0_i32_0 : i32, i32
  }
  func.func @transform_8(%arg0: i32) -> (i32, i32) {
    %c0_i32 = arith.constant 0 : i32
    %c0_i32_0 = arith.constant 0 : i32
    %c0_i32_1 = arith.constant 0 : i32
    return %c0_i32, %c0_i32_0 : i32, i32
  }
  func.func @transform_9(%arg0: i32) -> (i32, i32) {
    %c0_i32 = arith.constant 0 : i32
    %c0_i32_0 = arith.constant 0 : i32
    %c0_i32_1 = arith.constant 0 : i32
    return %c0_i32, %c0_i32_0 : i32, i32
  }
  func.func @transform_10(%arg0: i32) -> (i32, i32) {
    %c0_i32 = arith.constant 0 : i32
    %c0_i32_0 = arith.constant 0 : i32
    %c0_i32_1 = arith.constant 0 : i32
    return %c0_i32, %c0_i32_0 : i32, i32
  }
  func.func @transform_11(%arg0: i32) -> (i32, i32) {
    %c0_i32 = arith.constant 0 : i32
    %c0_i32_0 = arith.constant 0 : i32
    %c0_i32_1 = arith.constant 0 : i32
    return %c0_i32, %c0_i32_0 : i32, i32
  }
  func.func @transform_12(%arg0: i32) -> (i32, i32, i32) {
    %c0_i32 = arith.constant 0 : i32
    %c0_i32_0 = arith.constant 0 : i32
    %c0_i32_1 = arith.constant 0 : i32
    return %arg0, %c0_i32, %c0_i32_0 : i32, i32, i32
  }
}

</mosaic_0001>

<llo_original>
// kernel: pnet_forward.1
$region0: #{pnet_forward.1}
  #allocation0 [shape = 'u32[]', space=smem, size = 0x4, offset = 0x4, fixed_abs, tag = 'smem constant byte address 0x4 - core index']
  #allocation1 [shape = 'u32[144,128]{1,0:T(1,128)}', space=vmem, size = 0x12000, scoped, tag = 'internal scratch']
  %s0 = inlined_call_operand.vmem [shape: f32[2,16,16,3], index: 0, kind: input, shape index: {}]
  %s1 = inlined_call_operand.vmem [shape: f32[27,10], index: 1, kind: input, shape index: {}]
  %s2 = inlined_call_operand.vmem [shape: f32[1,10], index: 2, kind: input, shape index: {}]
  %s3 = inlined_call_operand.vmem [shape: f32[1,10], index: 3, kind: input, shape index: {}]
  %s4 = inlined_call_operand.vmem [shape: f32[90,16], index: 4, kind: input, shape index: {}]
  %s5 = inlined_call_operand.vmem [shape: f32[1,16], index: 5, kind: input, shape index: {}]
  %s6 = inlined_call_operand.vmem [shape: f32[1,16], index: 6, kind: input, shape index: {}]
  %s7 = inlined_call_operand.vmem [shape: f32[144,32], index: 7, kind: input, shape index: {}]
  %s8 = inlined_call_operand.vmem [shape: f32[1,32], index: 8, kind: input, shape index: {}]
  %s9 = inlined_call_operand.vmem [shape: f32[1,32], index: 9, kind: input, shape index: {}]
  %s10 = inlined_call_operand.vmem [shape: f32[32,8], index: 10, kind: input, shape index: {}]
  %s11 = inlined_call_operand.vmem [shape: f32[1,8], index: 11, kind: input, shape index: {}]
  %s12 = inlined_call_operand.vmem [shape: f32[2,9,8], index: 12, kind: output, shape index: {}]
  %s13 = sld [smem:[#allocation0]]
  $region81: #{pnet_forward.1} parent=0
    _
  %s15 = ssub.s32 1, %s13
  %s16 = scalar_select 0, %s15, %s13
  loop: start=0, step=1, limit=4
  $region2: #{pnet_forward.1} parent=0 // loop_pre_header
    _
  $region3: #{pnet_forward.1} parent=0 // loop_header
    %s18 = sphi 0, %s22
    %p19 = scmp.ge.s32.totalorder %s18, 4
    %s28 = sphi 0, %s30
    %s31 = sphi 0, %s28
    %s32 = sphi 0, %s31
    %s48 = sphi 0, %s32
    %s52 = sphi 0, %s52
    %s54 = sphi 0, %s52
    %s55 = sphi 0, %s54
    %s69 = sphi 0, %s55
    %s73 = sphi 0, %s73
    %s75 = sphi 0, %s73
    %s76 = sphi 0, %s75
    %s90 = sphi 0, %s76
    %s94 = sphi 0, %s94
    %s96 = sphi 0, %s94
    %s97 = sphi 0, %s96
    %s111 = sphi 0, %s97
    %s115 = sphi 0, %s115
    %s117 = sphi 0, %s115
    %s118 = sphi 0, %s117
    %s132 = sphi 0, %s118
    %s136 = sphi 0, %s136
    %s138 = sphi 0, %s136
    %s139 = sphi 0, %s138
    %s153 = sphi 0, %s139
    %s157 = sphi 0, %s157
    %s159 = sphi 0, %s157
    %s160 = sphi 0, %s159
    %s174 = sphi 0, %s160
    %s178 = sphi 0, %s178
    %s180 = sphi 0, %s178
    %s181 = sphi 0, %s180
    %s195 = sphi 0, %s181
    %s199 = sphi 0, %s199
    %s201 = sphi 0, %s199
    %s202 = sphi 0, %s201
    %s216 = sphi 0, %s202
    %s220 = sphi 0, %s220
    %s222 = sphi 0, %s220
    %s223 = sphi 0, %s222
    %s237 = sphi 0, %s223
    %s241 = sphi 0, %s241
    %s243 = sphi 0, %s241
    %s244 = sphi 0, %s243
    %s258 = sphi 0, %s244
    %s262 = sphi 0, %s262
    %s264 = sphi 0, %s262
    %s265 = sphi 0, %s264
    %s279 = sphi 0, %s265
    %s285 = sphi 0, %s287
    %s288 = sphi 0, %s285
    %s289 = sphi 0, %s288
    %s305 = sphi 0, %s289
  $region4: #{pnet_forward.1} parent=0 // loop_header_branch
    %21 = sbr.rel (%p19) target = $region8
  $region5: #{pnet_forward.1} parent=0 // loop_body
    %s23 = ssub.s32 %s18, 1
    %s24 = ssub.s32 %s18, 2
    %s25 = sadd.s32 %s18, 1
    %s26 = ssub.s32 %s18, %s25
    %p27 = scmp.eq.s32.totalorder %s26, 0
    %s29 = sadd.s32 %s28, 1
    %s30 = scalar_select %p27, %s28, %s29
    %p33 = pneg %p27
    %p34 = scmp.eq.s32.totalorder %s18, 1
    %p35 = por %p33, %p34
    %p36 = scmp.ne.s32.totalorder %s28, %s31
    %p37 = scmp.eq.s32.totalorder %s18, 0
    %p38 = por %p36, %p37
    %p39 = scmp.ne.s32.totalorder %s28, %s31
    %p40 = scmp.eq.s32.totalorder %s23, 1
    %p41 = por %p39, %p40
    %p42 = scmp.ne.s32.totalorder %s31, %s32
    %p43 = scmp.eq.s32.totalorder %s23, 0
    %p44 = por %p42, %p43
    %p45 = scmp.ne.s32.totalorder %s31, %s32
    %p46 = scmp.eq.s32.totalorder %s24, 1
    %p47 = por %p45, %p46
    %p49 = scmp.ne.s32.totalorder %s32, %s48
    %p50 = scmp.eq.s32.totalorder %s24, 0
    %p51 = por %p49, %p50
    %s53 = sadd.s32 %s52, 1
    %p56 = scmp.eq.s32.totalorder %s18, 1
    %p57 = scmp.ne.s32.totalorder %s52, %s54
    %p58 = scmp.eq.s32.totalorder %s18, 0
    %p59 = por %p57, %p58
    %p60 = scmp.ne.s32.totalorder %s52, %s54
    %p61 = scmp.eq.s32.totalorder %s23, 1
    %p62 = por %p60, %p61
    %p63 = scmp.ne.s32.totalorder %s54, %s55
    %p64 = scmp.eq.s32.totalorder %s23, 0
    %p65 = por %p63, %p64
    %p66 = scmp.ne.s32.totalorder %s54, %s55
    %p67 = scmp.eq.s32.totalorder %s24, 1
    %p68 = por %p66, %p67
    %p70 = scmp.ne.s32.totalorder %s55, %s69
    %p71 = scmp.eq.s32.totalorder %s24, 0
    %p72 = por %p70, %p71
    %s74 = sadd.s32 %s73, 1
    %p77 = scmp.eq.s32.totalorder %s18, 1
    %p78 = scmp.ne.s32.totalorder %s73, %s75
    %p79 = scmp.eq.s32.totalorder %s18, 0
    %p80 = por %p78, %p79
    %p81 = scmp.ne.s32.totalorder %s73, %s75
    %p82 = scmp.eq.s32.totalorder %s23, 1
    %p83 = por %p81, %p82
    %p84 = scmp.ne.s32.totalorder %s75, %s76
    %p85 = scmp.eq.s32.totalorder %s23, 0
    %p86 = por %p84, %p85
    %p87 = scmp.ne.s32.totalorder %s75, %s76
    %p88 = scmp.eq.s32.totalorder %s24, 1
    %p89 = por %p87, %p88
    %p91 = scmp.ne.s32.totalorder %s76, %s90
    %p92 = scmp.eq.s32.totalorder %s24, 0
    %p93 = por %p91, %p92
    %s95 = sadd.s32 %s94, 1
    %p98 = scmp.eq.s32.totalorder %s18, 1
    %p99 = scmp.ne.s32.totalorder %s94, %s96
    %p100 = scmp.eq.s32.totalorder %s18, 0
    %p101 = por %p99, %p100
    %p102 = scmp.ne.s32.totalorder %s94, %s96
    %p103 = scmp.eq.s32.totalorder %s23, 1
    %p104 = por %p102, %p103
    %p105 = scmp.ne.s32.totalorder %s96, %s97
    %p106 = scmp.eq.s32.totalorder %s23, 0
    %p107 = por %p105, %p106
    %p108 = scmp.ne.s32.totalorder %s96, %s97
    %p109 = scmp.eq.s32.totalorder %s24, 1
    %p110 = por %p108, %p109
    %p112 = scmp.ne.s32.totalorder %s97, %s111
    %p113 = scmp.eq.s32.totalorder %s24, 0
    %p114 = por %p112, %p113
    %s116 = sadd.s32 %s115, 1
    %p119 = scmp.eq.s32.totalorder %s18, 1
    %p120 = scmp.ne.s32.totalorder %s115, %s117
    %p121 = scmp.eq.s32.totalorder %s18, 0
    %p122 = por %p120, %p121
    %p123 = scmp.ne.s32.totalorder %s115, %s117
    %p124 = scmp.eq.s32.totalorder %s23, 1
    %p125 = por %p123, %p124
    %p126 = scmp.ne.s32.totalorder %s117, %s118
    %p127 = scmp.eq.s32.totalorder %s23, 0
    %p128 = por %p126, %p127
    %p129 = scmp.ne.s32.totalorder %s117, %s118
    %p130 = scmp.eq.s32.totalorder %s24, 1
    %p131 = por %p129, %p130
    %p133 = scmp.ne.s32.totalorder %s118, %s132
    %p134 = scmp.eq.s32.totalorder %s24, 0
    %p135 = por %p133, %p134
    %s137 = sadd.s32 %s136, 1
    %p140 = scmp.eq.s32.totalorder %s18, 1
    %p141 = scmp.ne.s32.totalorder %s136, %s138
    %p142 = scmp.eq.s32.totalorder %s18, 0
    %p143 = por %p141, %p142
    %p144 = scmp.ne.s32.totalorder %s136, %s138
    %p145 = scmp.eq.s32.totalorder %s23, 1
    %p146 = por %p144, %p145
    %p147 = scmp.ne.s32.totalorder %s138, %s139
    %p148 = scmp.eq.s32.totalorder %s23, 0
    %p149 = por %p147, %p148
    %p150 = scmp.ne.s32.totalorder %s138, %s139
    %p151 = scmp.eq.s32.totalorder %s24, 1
    %p152 = por %p150, %p151
    %p154 = scmp.ne.s32.totalorder %s139, %s153
    %p155 = scmp.eq.s32.totalorder %s24, 0
    %p156 = por %p154, %p155
    %s158 = sadd.s32 %s157, 1
    %p161 = scmp.eq.s32.totalorder %s18, 1
    %p162 = scmp.ne.s32.totalorder %s157, %s159
    %p163 = scmp.eq.s32.totalorder %s18, 0
    %p164 = por %p162, %p163
    %p165 = scmp.ne.s32.totalorder %s157, %s159
    %p166 = scmp.eq.s32.totalorder %s23, 1
    %p167 = por %p165, %p166
    %p168 = scmp.ne.s32.totalorder %s159, %s160
    %p169 = scmp.eq.s32.totalorder %s23, 0
    %p170 = por %p168, %p169
    %p171 = scmp.ne.s32.totalorder %s159, %s160
    %p172 = scmp.eq.s32.totalorder %s24, 1
    %p173 = por %p171, %p172
    %p175 = scmp.ne.s32.totalorder %s160, %s174
    %p176 = scmp.eq.s32.totalorder %s24, 0
    %p177 = por %p175, %p176
    %s179 = sadd.s32 %s178, 1
    %p182 = scmp.eq.s32.totalorder %s18, 1
    %p183 = scmp.ne.s32.totalorder %s178, %s180
    %p184 = scmp.eq.s32.totalorder %s18, 0
    %p185 = por %p183, %p184
    %p186 = scmp.ne.s32.totalorder %s178, %s180
    %p187 = scmp.eq.s32.totalorder %s23, 1
    %p188 = por %p186, %p187
    %p189 = scmp.ne.s32.totalorder %s180, %s181
    %p190 = scmp.eq.s32.totalorder %s23, 0
    %p191 = por %p189, %p190
    %p192 = scmp.ne.s32.totalorder %s180, %s181
    %p193 = scmp.eq.s32.totalorder %s24, 1
    %p194 = por %p192, %p193
    %p196 = scmp.ne.s32.totalorder %s181, %s195
    %p197 = scmp.eq.s32.totalorder %s24, 0
    %p198 = por %p196, %p197
    %s200 = sadd.s32 %s199, 1
    %p203 = scmp.eq.s32.totalorder %s18, 1
    %p204 = scmp.ne.s32.totalorder %s199, %s201
    %p205 = scmp.eq.s32.totalorder %s18, 0
    %p206 = por %p204, %p205
    %p207 = scmp.ne.s32.totalorder %s199, %s201
    %p208 = scmp.eq.s32.totalorder %s23, 1
    %p209 = por %p207, %p208
    %p210 = scmp.ne.s32.totalorder %s201, %s202
    %p211 = scmp.eq.s32.totalorder %s23, 0
    %p212 = por %p210, %p211
    %p213 = scmp.ne.s32.totalorder %s201, %s202
    %p214 = scmp.eq.s32.totalorder %s24, 1
    %p215 = por %p213, %p214
    %p217 = scmp.ne.s32.totalorder %s202, %s216
    %p218 = scmp.eq.s32.totalorder %s24, 0
    %p219 = por %p217, %p218
    %s221 = sadd.s32 %s220, 1
    %p224 = scmp.eq.s32.totalorder %s18, 1
    %p225 = scmp.ne.s32.totalorder %s220, %s222
    %p226 = scmp.eq.s32.totalorder %s18, 0
    %p227 = por %p225, %p226
    %p228 = scmp.ne.s32.totalorder %s220, %s222
    %p229 = scmp.eq.s32.totalorder %s23, 1
    %p230 = por %p228, %p229
    %p231 = scmp.ne.s32.totalorder %s222, %s223
    %p232 = scmp.eq.s32.totalorder %s23, 0
    %p233 = por %p231, %p232
    %p234 = scmp.ne.s32.totalorder %s222, %s223
    %p235 = scmp.eq.s32.totalorder %s24, 1
    %p236 = por %p234, %p235
    %p238 = scmp.ne.s32.totalorder %s223, %s237
    %p239 = scmp.eq.s32.totalorder %s24, 0
    %p240 = por %p238, %p239
    %s242 = sadd.s32 %s241, 1
    %p245 = scmp.eq.s32.totalorder %s18, 1
    %p246 = scmp.ne.s32.totalorder %s241, %s243
    %p247 = scmp.eq.s32.totalorder %s18, 0
    %p248 = por %p246, %p247
    %p249 = scmp.ne.s32.totalorder %s241, %s243
    %p250 = scmp.eq.s32.totalorder %s23, 1
    %p251 = por %p249, %p250
    %p252 = scmp.ne.s32.totalorder %s243, %s244
    %p253 = scmp.eq.s32.totalorder %s23, 0
    %p254 = por %p252, %p253
    %p255 = scmp.ne.s32.totalorder %s243, %s244
    %p256 = scmp.eq.s32.totalorder %s24, 1
    %p257 = por %p255, %p256
    %p259 = scmp.ne.s32.totalorder %s244, %s258
    %p260 = scmp.eq.s32.totalorder %s24, 0
    %p261 = por %p259, %p260
    %s263 = sadd.s32 %s262, 1
    %p266 = scmp.eq.s32.totalorder %s18, 1
    %p267 = scmp.ne.s32.totalorder %s262, %s264
    %p268 = scmp.eq.s32.totalorder %s18, 0
    %p269 = por %p267, %p268
    %p270 = scmp.ne.s32.totalorder %s262, %s264
    %p271 = scmp.eq.s32.totalorder %s23, 1
    %p272 = por %p270, %p271
    %p273 = scmp.ne.s32.totalorder %s264, %s265
    %p274 = scmp.eq.s32.totalorder %s23, 0
    %p275 = por %p273, %p274
    %p276 = scmp.ne.s32.totalorder %s264, %s265
    %p277 = scmp.eq.s32.totalorder %s24, 1
    %p278 = por %p276, %p277
    %p280 = scmp.ne.s32.totalorder %s265, %s279
    %p281 = scmp.eq.s32.totalorder %s24, 0
    %p282 = por %p280, %p281
    %s283 = ssub.s32 %s18, %s25
    %p284 = scmp.eq.s32.totalorder %s283, 0
    %s286 = sadd.s32 %s285, 1
    %s287 = scalar_select %p284, %s285, %s286
    %p290 = pneg %p284
    %p291 = scmp.eq.s32.totalorder %s18, 1
    %p292 = por %p290, %p291
    %p293 = scmp.ne.s32.totalorder %s285, %s288
    %p294 = scmp.eq.s32.totalorder %s18, 0
    %p295 = por %p293, %p294
    %p296 = scmp.ne.s32.totalorder %s285, %s288
    %p297 = scmp.eq.s32.totalorder %s23, 1
    %p298 = por %p296, %p297
    %p299 = scmp.ne.s32.totalorder %s288, %s289
    %p300 = scmp.eq.s32.totalorder %s23, 0
    %p301 = por %p299, %p300
    %p302 = scmp.ne.s32.totalorder %s288, %s289
    %p303 = scmp.eq.s32.totalorder %s24, 1
    %p304 = por %p302, %p303
    %p306 = scmp.ne.s32.totalorder %s289, %s305
    %p307 = scmp.eq.s32.totalorder %s24, 0
    %p308 = por %p306, %p307
    %p309 = scmp.le.s32.totalorder 1, %s18
    %p310 = scmp.lt.s32.totalorder %s18, 3
    %p311 = pnand %p309, %p310
    %p312 = pneg %p311
    // Predicated region
    $region9: #{pnet_forward.1} parent=5 // pred_check
      _
    $region10: #{pnet_forward.1} parent=5 // pred_check_branch
      %314 = sbr.rel (%p311) target = $region12
    $region11: #{pnet_forward.1} parent=5 // pred_region
      %s315 = ssub.s32 %s18, 1
      // Predicated region
      $region13: #{pnet_forward.1} parent=11 // pred_check
        %p316 = pneg %p65
      $region14: #{pnet_forward.1} parent=11 // pred_check_branch
        %318 = sbr.rel (%p316) target = $region16
      $region15: #{pnet_forward.1} parent=11 // pred_region
        _
      $region16: #{pnet_forward.1} parent=11 // pred_fallthru
        _
      // Predicated region
      $region17: #{pnet_forward.1} parent=11 // pred_check
        %p319 = pneg %p86
      $region18: #{pnet_forward.1} parent=11 // pred_check_branch
        %321 = sbr.rel (%p319) target = $region20
      $region19: #{pnet_forward.1} parent=11 // pred_region
        _
      $region20: #{pnet_forward.1} parent=11 // pred_fallthru
        _
      // Predicated region
      $region21: #{pnet_forward.1} parent=11 // pred_check
        %p322 = pneg %p107
      $region22: #{pnet_forward.1} parent=11 // pred_check_branch
        %324 = sbr.rel (%p322) target = $region24
      $region23: #{pnet_forward.1} parent=11 // pred_region
        _
      $region24: #{pnet_forward.1} parent=11 // pred_fallthru
        _
      // Predicated region
      $region25: #{pnet_forward.1} parent=11 // pred_check
        %p325 = pneg %p128
      $region26: #{pnet_forward.1} parent=11 // pred_check_branch
        %327 = sbr.rel (%p325) target = $region28
      $region27: #{pnet_forward.1} parent=11 // pred_region
        _
      $region28: #{pnet_forward.1} parent=11 // pred_fallthru
        _
      // Predicated region
      $region29: #{pnet_forward.1} parent=11 // pred_check
        %p328 = pneg %p149
      $region30: #{pnet_forward.1} parent=11 // pred_check_branch
        %330 = sbr.rel (%p328) target = $region32
      $region31: #{pnet_forward.1} parent=11 // pred_region
        _
      $region32: #{pnet_forward.1} parent=11 // pred_fallthru
        _
      // Predicated region
      $region33: #{pnet_forward.1} parent=11 // pred_check
        %p331 = pneg %p170
      $region34: #{pnet_forward.1} parent=11 // pred_check_branch
        %333 = sbr.rel (%p331) target = $region36
      $region35: #{pnet_forward.1} parent=11 // pred_region
        _
      $region36: #{pnet_forward.1} parent=11 // pred_fallthru
        _
      // Predicated region
      $region37: #{pnet_forward.1} parent=11 // pred_check
        %p334 = pneg %p191
      $region38: #{pnet_forward.1} parent=11 // pred_check_branch
        %336 = sbr.rel (%p334) target = $region40
      $region39: #{pnet_forward.1} parent=11 // pred_region
        _
      $region40: #{pnet_forward.1} parent=11 // pred_fallthru
        _
      // Predicated region
      $region41: #{pnet_forward.1} parent=11 // pred_check
        %p337 = pneg %p212
      $region42: #{pnet_forward.1} parent=11 // pred_check_branch
        %339 = sbr.rel (%p337) target = $region44
      $region43: #{pnet_forward.1} parent=11 // pred_region
        _
      $region44: #{pnet_forward.1} parent=11 // pred_fallthru
        _
      // Predicated region
      $region45: #{pnet_forward.1} parent=11 // pred_check
        %p340 = pneg %p233
      $region46: #{pnet_forward.1} parent=11 // pred_check_branch
        %342 = sbr.rel (%p340) target = $region48
      $region47: #{pnet_forward.1} parent=11 // pred_region
        _
      $region48: #{pnet_forward.1} parent=11 // pred_fallthru
        _
      // Predicated region
      $region49: #{pnet_forward.1} parent=11 // pred_check
        %p343 = pneg %p254
      $region50: #{pnet_forward.1} parent=11 // pred_check_branch
        %345 = sbr.rel (%p343) target = $region52
      $region51: #{pnet_forward.1} parent=11 // pred_region
        _
      $region52: #{pnet_forward.1} parent=11 // pred_fallthru
        _
      // Predicated region
      $region53: #{pnet_forward.1} parent=11 // pred_check
        %p346 = pneg %p275
      $region54: #{pnet_forward.1} parent=11 // pred_check_branch
        %348 = sbr.rel (%p346) target = $region56
      $region55: #{pnet_forward.1} parent=11 // pred_region
        _
      $region56: #{pnet_forward.1} parent=11 // pred_fallthru
        _
    $region12: #{pnet_forward.1} parent=5 // pred_fallthru
      _
    %p349 = scmp.lt.s32.totalorder %s18, 2
    // Predicated region
    $region57: #{pnet_forward.1} parent=5 // pred_check
      %p350 = pneg %p349
    $region58: #{pnet_forward.1} parent=5 // pred_check_branch
      %352 = sbr.rel (%p350) target = $region60
    $region59: #{pnet_forward.1} parent=5 // pred_region
      // Predicated region
      $region61: #{pnet_forward.1} parent=59 // pred_check
        %p353 = pneg %p38
      $region62: #{pnet_forward.1} parent=59 // pred_check_branch
        %355 = sbr.rel (%p353) target = $region64
      $region63: #{pnet_forward.1} parent=59 // pred_region
        %p356 = scmp.lt.s32.totalorder %s18, 1
        %s357 = scalar_select %p356, %s18, 1
        %s358 = smul.addr %s357, 32
        %s359 = smul.addr %s358, 8
        %s360 = scalar_lea.vmem %s0, %s359
      $region64: #{pnet_forward.1} parent=59 // pred_fallthru
        _
    $region60: #{pnet_forward.1} parent=5 // pred_fallthru
      _
    %p361 = scmp.le.s32.totalorder 1, %s18
    %p362 = scmp.lt.s32.totalorder %s18, 3
    %p363 = pnand %p361, %p362
    %p364 = pneg %p363
    // Predicated region
    $region65: #{pnet_forward.1} parent=5 // pred_check
      _
    $region66: #{pnet_forward.1} parent=5 // pred_check_branch
      %366 = sbr.rel (%p363) target = $region68
    $region67: #{pnet_forward.1} parent=5 // pred_region
      %s367 = ssub.s32 %s18, 1
      %p368 = scmp.lt.s32.totalorder %s23, 1
      %s369 = scalar_select %p368, %s23, 1
      %s370 = smul.addr %s369, 32
      %s371 = smul.addr %s370, 8
      %s372 = scalar_lea.vmem %s0, %s371
      %p373 = pneg %p44
      %p374 = pneg %p41
      %p375 = pneg %p65
      %p376 = pneg %p62
      %p377 = pneg %p86
      %p378 = pneg %p83
      %p379 = pneg %p107
      %p380 = pneg %p104
      %p381 = pneg %p128
      %p382 = pneg %p125
      %p383 = pneg %p149
      %p384 = pneg %p146
      %p385 = pneg %p170
      %p386 = pneg %p167
      %p387 = pneg %p191
      %p388 = pneg %p188
      %p389 = pneg %p212
      %p390 = pneg %p209
      %p391 = pneg %p233
      %p392 = pneg %p230
      %p393 = pneg %p254
      %p394 = pneg %p251
      %p395 = pneg %p275
      %p396 = pneg %p272
      %p397 = pneg %p301
      %p398 = pneg %p298
      %p399 = scmp.lt.s32.totalorder %s23, 1
      %s400 = scalar_select %p399, %s23, 1
      %s401 = smul.addr %s400, 2
      %s402 = smul.addr %s401, 8
      %s403 = scalar_lea.vmem %s12, %s402
      %p404 = scmp.lt.s32.totalorder %s23, 1
      %s405 = scalar_select %p404, %s23, 1
      %s406 = smul.addr %s405, 32
      %s407 = smul.addr %s406, 8
      %s408 = scalar_lea.vmem %s0, %s407
      %p409 = scmp.lt.s32.totalorder %s23, 1
      %s410 = scalar_select %p409, %s23, 1
      %s411 = smul.addr %s410, 2
      %s412 = smul.addr %s411, 8
      %s413 = scalar_lea.vmem %s12, %s412
      %v414 = vld [vmem:[%s1] sm:$0xff]
      %v415 = vld [vmem:[%s1 + $0x8] sm:$0xff]
      %v416 = vld [vmem:[%s1 + $0x10] sm:$0xff]
      %v417 = vld [vmem:[%s1 + $0x18] sm:$0x7]
      %v418 = vld [vmem:[%s2] sm:$0x1]
      %v419 = vld [vmem:[%s3] sm:$0x1]
      %v420 = vld [vmem:[%s4] sm:$0xff]
      %v421 = vld [vmem:[%s4 + $0x8] sm:$0xff]
      %v422 = vld [vmem:[%s4 + $0x10] sm:$0xff]
      %v423 = vld [vmem:[%s4 + $0x18] sm:$0xff]
      %v424 = vld [vmem:[%s4 + $0x20] sm:$0xff]
      %v425 = vld [vmem:[%s4 + $0x28] sm:$0xff]
      %v426 = vld [vmem:[%s4 + $0x30] sm:$0xff]
      %v427 = vld [vmem:[%s4 + $0x38] sm:$0xff]
      %v428 = vld [vmem:[%s4 + $0x40] sm:$0xff]
      %v429 = vld [vmem:[%s4 + $0x48] sm:$0xff]
      %v430 = vld [vmem:[%s4 + $0x50] sm:$0xff]
      %v431 = vld [vmem:[%s4 + $0x58] sm:$0x3]
      %v432 = vld [vmem:[%s5] sm:$0x1]
      %v433 = vld [vmem:[%s6] sm:$0x1]
      %v434 = vld [vmem:[%s7] sm:$0xff]
      %v435 = vld [vmem:[%s7 + $0x8] sm:$0xff]
      %v436 = vld [vmem:[%s7 + $0x10] sm:$0xff]
      %v437 = vld [vmem:[%s7 + $0x18] sm:$0xff]
      %v438 = vld [vmem:[%s7 + $0x20] sm:$0xff]
      %v439 = vld [vmem:[%s7 + $0x28] sm:$0xff]
      %v440 = vld [vmem:[%s7 + $0x30] sm:$0xff]
      %v441 = vld [vmem:[%s7 + $0x38] sm:$0xff]
      %v442 = vld [vmem:[%s7 + $0x40] sm:$0xff]
      %v443 = vld [vmem:[%s7 + $0x48] sm:$0xff]
      %v444 = vld [vmem:[%s7 + $0x50] sm:$0xff]
      %v445 = vld [vmem:[%s7 + $0x58] sm:$0xff]
      %v446 = vld [vmem:[%s7 + $0x60] sm:$0xff]
      %v447 = vld [vmem:[%s7 + $0x68] sm:$0xff]
      %v448 = vld [vmem:[%s7 + $0x70] sm:$0xff]
      %v449 = vld [vmem:[%s7 + $0x78] sm:$0xff]
      %v450 = vld [vmem:[%s7 + $0x80] sm:$0xff]
      %v451 = vld [vmem:[%s7 + $0x88] sm:$0xff]
      %v452 = vld [vmem:[%s8] sm:$0x1]
      %v453 = vld [vmem:[%s9] sm:$0x1]
      %v454 = vld [vmem:[%s10] sm:$0xff]
      %v455 = vld [vmem:[%s10 + $0x8] sm:$0xff]
      %v456 = vld [vmem:[%s10 + $0x10] sm:$0xff]
      %v457 = vld [vmem:[%s10 + $0x18] sm:$0xff]
      %v458 = vld [vmem:[%s11] sm:$0x1]
      %v459 = vld [vmem:[%s408] sm:$0xff]
      %v460 = vld [vmem:[%s408 + $0x8] sm:$0xff]
      %v461 = vld [vmem:[%s408 + $0x10] sm:$0xff]
      %v462 = vld [vmem:[%s408 + $0x18] sm:$0xff]
      %v463 = vld [vmem:[%s408 + $0x20] sm:$0xff]
      %v464 = vld [vmem:[%s408 + $0x28] sm:$0xff]
      %v465 = vld [vmem:[%s408 + $0x30] sm:$0xff]
      %v466 = vld [vmem:[%s408 + $0x38] sm:$0xff]
      %v467 = vld [vmem:[%s408 + $0x40] sm:$0xff]
      %v468 = vld [vmem:[%s408 + $0x48] sm:$0xff]
      %v469 = vld [vmem:[%s408 + $0x50] sm:$0xff]
      %v470 = vld [vmem:[%s408 + $0x58] sm:$0xff]
      %v471 = vld [vmem:[%s408 + $0x60] sm:$0xff]
      %v472 = vld [vmem:[%s408 + $0x68] sm:$0xff]
      %v473 = vld [vmem:[%s408 + $0x70] sm:$0xff]
      %v474 = vld [vmem:[%s408 + $0x78] sm:$0xff]
      %v475 = vld [vmem:[%s408 + $0x80] sm:$0xff]
      %v476 = vld [vmem:[%s408 + $0x88] sm:$0xff]
      %v477 = vld [vmem:[%s408 + $0x90] sm:$0xff]
      %v478 = vld [vmem:[%s408 + $0x98] sm:$0xff]
      %v479 = vld [vmem:[%s408 + $0xa0] sm:$0xff]
      %v480 = vld [vmem:[%s408 + $0xa8] sm:$0xff]
      %v481 = vld [vmem:[%s408 + $0xb0] sm:$0xff]
      %v482 = vld [vmem:[%s408 + $0xb8] sm:$0xff]
      %v483 = vld [vmem:[%s408 + $0xc0] sm:$0xff]
      %v484 = vld [vmem:[%s408 + $0xc8] sm:$0xff]
      %v485 = vld [vmem:[%s408 + $0xd0] sm:$0xff]
      %v486 = vld [vmem:[%s408 + $0xd8] sm:$0xff]
      %v487 = vld [vmem:[%s408 + $0xe0] sm:$0xff]
      %v488 = vld [vmem:[%s408 + $0xe8] sm:$0xff]
      %v489 = vld [vmem:[%s408 + $0xf0] sm:$0xff]
      %v490 = vld [vmem:[%s408 + $0xf8] sm:$0xff]
      %vm493 = vcmask 1046528
      %v494 = vrot.slane %v459, 1
      %v495 = vrot.slane %v460, 1
      %v496 = vsel %vm493, %v494, %v495
      %497 = vrot.lane.b32.xlu0 %v496, 3
      %v498 = vpop.permute.xlu0 %497
      %499 = vrot.lane.b32.xlu0 %v495, 3
      %v500 = vpop.permute.xlu0 %499
      %vm503 = vcmask 1045504
      %v504 = vrot.slane %v459, 2
      %v505 = vrot.slane %v460, 2
      %v506 = vsel %vm503, %v504, %v505
      %507 = vrot.lane.b32.xlu0 %v506, 6
      %v508 = vpop.permute.xlu0 %507
      %509 = vrot.lane.b32.xlu0 %v505, 6
      %v510 = vpop.permute.xlu0 %509
      %515 = vrot.lane.b32.xlu0 %v461, 9
      %v516 = vpop.permute.xlu0 %515
      %517 = vrot.lane.b32.xlu0 %v462, 9
      %v518 = vpop.permute.xlu0 %517
      %v521 = vrot.slane %v461, 1
      %v522 = vrot.slane %v462, 1
      %v523 = vsel %vm493, %v521, %v522
      %524 = vrot.lane.b32.xlu0 %v523, 12
      %v525 = vpop.permute.xlu0 %524
      %526 = vrot.lane.b32.xlu0 %v522, 12
      %v527 = vpop.permute.xlu0 %526
      %v530 = vrot.slane %v461, 2
      %v531 = vrot.slane %v462, 2
      %v532 = vsel %vm503, %v530, %v531
      %533 = vrot.lane.b32.xlu0 %v532, 15
      %v534 = vpop.permute.xlu0 %533
      %535 = vrot.lane.b32.xlu0 %v531, 15
      %v536 = vpop.permute.xlu0 %535
      %541 = vrot.lane.b32.xlu0 %v463, 18
      %v542 = vpop.permute.xlu0 %541
      %543 = vrot.lane.b32.xlu0 %v464, 18
      %v544 = vpop.permute.xlu0 %543
      %v547 = vrot.slane %v463, 1
      %v548 = vrot.slane %v464, 1
      %v549 = vsel %vm493, %v547, %v548
      %550 = vrot.lane.b32.xlu0 %v549, 21
      %v551 = vpop.permute.xlu0 %550
      %552 = vrot.lane.b32.xlu0 %v548, 21
      %v553 = vpop.permute.xlu0 %552
      %v556 = vrot.slane %v463, 2
      %v557 = vrot.slane %v464, 2
      %v558 = vsel %vm503, %v556, %v557
      %559 = vrot.lane.b32.xlu0 %v558, 24
      %v560 = vpop.permute.xlu0 %559
      %561 = vrot.lane.b32.xlu0 %v557, 24
      %v562 = vpop.permute.xlu0 %561
      %vm565 = vcmask 23552
      %v566 = vsel %vm565, %v459, %v498
      %v567 = vsel %vm565, %v460, %v500
      %vm568 = vcmask 48128
      %v569 = vsel %vm568, %v566, %v508
      %v570 = vsel %vm568, %v567, %v510
      %vm571 = vcmask 72704
      %v572 = vsel %vm571, %v569, %v516
      %v573 = vsel %vm571, %v570, %v518
      %vm574 = vcmask 97280
      %v575 = vsel %vm574, %v572, %v525
      %v576 = vsel %vm574, %v573, %v527
      %vm577 = vcmask 121856
      %v578 = vsel %vm577, %v575, %v534
      %v579 = vsel %vm577, %v576, %v536
      %vm580 = vcmask 146432
      %v581 = vsel %vm580, %v578, %v542
      %v582 = vsel %vm580, %v579, %v544
      %vm583 = vcmask 171008
      %v584 = vsel %vm583, %v581, %v551
      %v585 = vsel %vm583, %v582, %v553
      %vm586 = vcmask 195584
      %v587 = vsel %vm586, %v584, %v560
      %v588 = vsel %vm586, %v585, %v562
      %589 = vrot.lane.b32.xlu0 %v523, 3
      %v590 = vpop.permute.xlu0 %589
      %591 = vrot.lane.b32.xlu0 %v522, 3
      %v592 = vpop.permute.xlu0 %591
      %595 = vrot.lane.b32.xlu0 %v532, 6
      %v596 = vpop.permute.xlu0 %595
      %597 = vrot.lane.b32.xlu0 %v531, 6
      %v598 = vpop.permute.xlu0 %597
      %601 = vrot.lane.b32.xlu0 %v463, 9
      %v602 = vpop.permute.xlu0 %601
      %603 = vrot.lane.b32.xlu0 %v464, 9
      %v604 = vpop.permute.xlu0 %603
      %607 = vrot.lane.b32.xlu0 %v549, 12
      %v608 = vpop.permute.xlu0 %607
      %609 = vrot.lane.b32.xlu0 %v548, 12
      %v610 = vpop.permute.xlu0 %609
      %613 = vrot.lane.b32.xlu0 %v558, 15
      %v614 = vpop.permute.xlu0 %613
      %615 = vrot.lane.b32.xlu0 %v557, 15
      %v616 = vpop.permute.xlu0 %615
      %621 = vrot.lane.b32.xlu0 %v465, 18
      %v622 = vpop.permute.xlu0 %621
      %623 = vrot.lane.b32.xlu0 %v466, 18
      %v624 = vpop.permute.xlu0 %623
      %v627 = vrot.slane %v465, 1
      %v628 = vrot.slane %v466, 1
      %v629 = vsel %vm493, %v627, %v628
      %630 = vrot.lane.b32.xlu0 %v629, 21
      %v631 = vpop.permute.xlu0 %630
      %632 = vrot.lane.b32.xlu0 %v628, 21
      %v633 = vpop.permute.xlu0 %632
      %v636 = vrot.slane %v465, 2
      %v637 = vrot.slane %v466, 2
      %v638 = vsel %vm503, %v636, %v637
      %639 = vrot.lane.b32.xlu0 %v638, 24
      %v640 = vpop.permute.xlu0 %639
      %641 = vrot.lane.b32.xlu0 %v637, 24
      %v642 = vpop.permute.xlu0 %641
      %v645 = vsel %vm565, %v461, %v590
      %v646 = vsel %vm565, %v462, %v592
      %v647 = vsel %vm568, %v645, %v596
      %v648 = vsel %vm568, %v646, %v598
      %v649 = vsel %vm571, %v647, %v602
      %v650 = vsel %vm571, %v648, %v604
      %v651 = vsel %vm574, %v649, %v608
      %v652 = vsel %vm574, %v650, %v610
      %v653 = vsel %vm577, %v651, %v614
      %v654 = vsel %vm577, %v652, %v616
      %v655 = vsel %vm580, %v653, %v622
      %v656 = vsel %vm580, %v654, %v624
      %v657 = vsel %vm583, %v655, %v631
      %v658 = vsel %vm583, %v656, %v633
      %v659 = vsel %vm586, %v657, %v640
      %v660 = vsel %vm586, %v658, %v642
      %661 = vrot.lane.b32.xlu0 %v549, 3
      %v662 = vpop.permute.xlu0 %661
      %663 = vrot.lane.b32.xlu0 %v548, 3
      %v664 = vpop.permute.xlu0 %663
      %667 = vrot.lane.b32.xlu0 %v558, 6
      %v668 = vpop.permute.xlu0 %667
      %669 = vrot.lane.b32.xlu0 %v557, 6
      %v670 = vpop.permute.xlu0 %669
      %673 = vrot.lane.b32.xlu0 %v465, 9
      %v674 = vpop.permute.xlu0 %673
      %675 = vrot.lane.b32.xlu0 %v466, 9
      %v676 = vpop.permute.xlu0 %675
      %679 = vrot.lane.b32.xlu0 %v629, 12
      %v680 = vpop.permute.xlu0 %679
      %681 = vrot.lane.b32.xlu0 %v628, 12
      %v682 = vpop.permute.xlu0 %681
      %685 = vrot.lane.b32.xlu0 %v638, 15
      %v686 = vpop.permute.xlu0 %685
      %687 = vrot.lane.b32.xlu0 %v637, 15
      %v688 = vpop.permute.xlu0 %687
      %693 = vrot.lane.b32.xlu0 %v467, 18
      %v694 = vpop.permute.xlu0 %693
      %695 = vrot.lane.b32.xlu0 %v468, 18
      %v696 = vpop.permute.xlu0 %695
      %v699 = vrot.slane %v467, 1
      %v700 = vrot.slane %v468, 1
      %v701 = vsel %vm493, %v699, %v700
      %702 = vrot.lane.b32.xlu0 %v701, 21
      %v703 = vpop.permute.xlu0 %702
      %704 = vrot.lane.b32.xlu0 %v700, 21
      %v705 = vpop.permute.xlu0 %704
      %v708 = vrot.slane %v467, 2
      %v709 = vrot.slane %v468, 2
      %v710 = vsel %vm503, %v708, %v709
      %711 = vrot.lane.b32.xlu0 %v710, 24
      %v712 = vpop.permute.xlu0 %711
      %713 = vrot.lane.b32.xlu0 %v709, 24
      %v714 = vpop.permute.xlu0 %713
      %v717 = vsel %vm565, %v463, %v662
      %v718 = vsel %vm565, %v464, %v664
      %v719 = vsel %vm568, %v717, %v668
      %v720 = vsel %vm568, %v718, %v670
      %v721 = vsel %vm571, %v719, %v674
      %v722 = vsel %vm571, %v720, %v676
      %v723 = vsel %vm574, %v721, %v680
      %v724 = vsel %vm574, %v722, %v682
      %v725 = vsel %vm577, %v723, %v686
      %v726 = vsel %vm577, %v724, %v688
      %v727 = vsel %vm580, %v725, %v694
      %v728 = vsel %vm580, %v726, %v696
      %v729 = vsel %vm583, %v727, %v703
      %v730 = vsel %vm583, %v728, %v705
      %v731 = vsel %vm586, %v729, %v712
      %v732 = vsel %vm586, %v730, %v714
      %733 = vrot.lane.b32.xlu0 %v629, 3
      %v734 = vpop.permute.xlu0 %733
      %735 = vrot.lane.b32.xlu0 %v628, 3
      %v736 = vpop.permute.xlu0 %735
      %739 = vrot.lane.b32.xlu0 %v638, 6
      %v740 = vpop.permute.xlu0 %739
      %741 = vrot.lane.b32.xlu0 %v637, 6
      %v742 = vpop.permute.xlu0 %741
      %745 = vrot.lane.b32.xlu0 %v467, 9
      %v746 = vpop.permute.xlu0 %745
      %747 = vrot.lane.b32.xlu0 %v468, 9
      %v748 = vpop.permute.xlu0 %747
      %751 = vrot.lane.b32.xlu0 %v701, 12
      %v752 = vpop.permute.xlu0 %751
      %753 = vrot.lane.b32.xlu0 %v700, 12
      %v754 = vpop.permute.xlu0 %753
      %757 = vrot.lane.b32.xlu0 %v710, 15
      %v758 = vpop.permute.xlu0 %757
      %759 = vrot.lane.b32.xlu0 %v709, 15
      %v760 = vpop.permute.xlu0 %759
      %765 = vrot.lane.b32.xlu0 %v469, 18
      %v766 = vpop.permute.xlu0 %765
      %767 = vrot.lane.b32.xlu0 %v470, 18
      %v768 = vpop.permute.xlu0 %767
      %v771 = vrot.slane %v469, 1
      %v772 = vrot.slane %v470, 1
      %v773 = vsel %vm493, %v771, %v772
      %774 = vrot.lane.b32.xlu0 %v773, 21
      %v775 = vpop.permute.xlu0 %774
      %776 = vrot.lane.b32.xlu0 %v772, 21
      %v777 = vpop.permute.xlu0 %776
      %v780 = vrot.slane %v469, 2
      %v781 = vrot.slane %v470, 2
      %v782 = vsel %vm503, %v780, %v781
      %783 = vrot.lane.b32.xlu0 %v782, 24
      %v784 = vpop.permute.xlu0 %783
      %785 = vrot.lane.b32.xlu0 %v781, 24
      %v786 = vpop.permute.xlu0 %785
      %v789 = vsel %vm565, %v465, %v734
      %v790 = vsel %vm565, %v466, %v736
      %v791 = vsel %vm568, %v789, %v740
      %v792 = vsel %vm568, %v790, %v742
      %v793 = vsel %vm571, %v791, %v746
      %v794 = vsel %vm571, %v792, %v748
      %v795 = vsel %vm574, %v793, %v752
      %v796 = vsel %vm574, %v794, %v754
      %v797 = vsel %vm577, %v795, %v758
      %v798 = vsel %vm577, %v796, %v760
      %v799 = vsel %vm580, %v797, %v766
      %v800 = vsel %vm580, %v798, %v768
      %v801 = vsel %vm583, %v799, %v775
      %v802 = vsel %vm583, %v800, %v777
      %v803 = vsel %vm586, %v801, %v784
      %v804 = vsel %vm586, %v802, %v786
      %805 = vrot.lane.b32.xlu0 %v701, 3
      %v806 = vpop.permute.xlu0 %805
      %807 = vrot.lane.b32.xlu0 %v700, 3
      %v808 = vpop.permute.xlu0 %807
      %811 = vrot.lane.b32.xlu0 %v710, 6
      %v812 = vpop.permute.xlu0 %811
      %813 = vrot.lane.b32.xlu0 %v709, 6
      %v814 = vpop.permute.xlu0 %813
      %817 = vrot.lane.b32.xlu0 %v469, 9
      %v818 = vpop.permute.xlu0 %817
      %819 = vrot.lane.b32.xlu0 %v470, 9
      %v820 = vpop.permute.xlu0 %819
      %823 = vrot.lane.b32.xlu0 %v773, 12
      %v824 = vpop.permute.xlu0 %823
      %825 = vrot.lane.b32.xlu0 %v772, 12
      %v826 = vpop.permute.xlu0 %825
      %829 = vrot.lane.b32.xlu0 %v782, 15
      %v830 = vpop.permute.xlu0 %829
      %831 = vrot.lane.b32.xlu0 %v781, 15
      %v832 = vpop.permute.xlu0 %831
      %837 = vrot.lane.b32.xlu0 %v471, 18
      %v838 = vpop.permute.xlu0 %837
      %839 = vrot.lane.b32.xlu0 %v472, 18
      %v840 = vpop.permute.xlu0 %839
      %v843 = vrot.slane %v471, 1
      %v844 = vrot.slane %v472, 1
      %v845 = vsel %vm493, %v843, %v844
      %846 = vrot.lane.b32.xlu0 %v845, 21
      %v847 = vpop.permute.xlu0 %846
      %848 = vrot.lane.b32.xlu0 %v844, 21
      %v849 = vpop.permute.xlu0 %848
      %v852 = vrot.slane %v471, 2
      %v853 = vrot.slane %v472, 2
      %v854 = vsel %vm503, %v852, %v853
      %855 = vrot.lane.b32.xlu0 %v854, 24
      %v856 = vpop.permute.xlu0 %855
      %857 = vrot.lane.b32.xlu0 %v853, 24
      %v858 = vpop.permute.xlu0 %857
      %v861 = vsel %vm565, %v467, %v806
      %v862 = vsel %vm565, %v468, %v808
      %v863 = vsel %vm568, %v861, %v812
      %v864 = vsel %vm568, %v862, %v814
      %v865 = vsel %vm571, %v863, %v818
      %v866 = vsel %vm571, %v864, %v820
      %v867 = vsel %vm574, %v865, %v824
      %v868 = vsel %vm574, %v866, %v826
      %v869 = vsel %vm577, %v867, %v830
      %v870 = vsel %vm577, %v868, %v832
      %v871 = vsel %vm580, %v869, %v838
      %v872 = vsel %vm580, %v870, %v840
      %v873 = vsel %vm583, %v871, %v847
      %v874 = vsel %vm583, %v872, %v849
      %v875 = vsel %vm586, %v873, %v856
      %v876 = vsel %vm586, %v874, %v858
      %877 = vrot.lane.b32.xlu0 %v773, 3
      %v878 = vpop.permute.xlu0 %877
      %879 = vrot.lane.b32.xlu0 %v772, 3
      %v880 = vpop.permute.xlu0 %879
      %883 = vrot.lane.b32.xlu0 %v782, 6
      %v884 = vpop.permute.xlu0 %883
      %885 = vrot.lane.b32.xlu0 %v781, 6
      %v886 = vpop.permute.xlu0 %885
      %889 = vrot.lane.b32.xlu0 %v471, 9
      %v890 = vpop.permute.xlu0 %889
      %891 = vrot.lane.b32.xlu0 %v472, 9
      %v892 = vpop.permute.xlu0 %891
      %895 = vrot.lane.b32.xlu0 %v845, 12
      %v896 = vpop.permute.xlu0 %895
      %897 = vrot.lane.b32.xlu0 %v844, 12
      %v898 = vpop.permute.xlu0 %897
      %901 = vrot.lane.b32.xlu0 %v854, 15
      %v902 = vpop.permute.xlu0 %901
      %903 = vrot.lane.b32.xlu0 %v853, 15
      %v904 = vpop.permute.xlu0 %903
      %909 = vrot.lane.b32.xlu0 %v473, 18
      %v910 = vpop.permute.xlu0 %909
      %911 = vrot.lane.b32.xlu0 %v474, 18
      %v912 = vpop.permute.xlu0 %911
      %v915 = vrot.slane %v473, 1
      %v916 = vrot.slane %v474, 1
      %v917 = vsel %vm493, %v915, %v916
      %918 = vrot.lane.b32.xlu0 %v917, 21
      %v919 = vpop.permute.xlu0 %918
      %920 = vrot.lane.b32.xlu0 %v916, 21
      %v921 = vpop.permute.xlu0 %920
      %v924 = vrot.slane %v473, 2
      %v925 = vrot.slane %v474, 2
      %v926 = vsel %vm503, %v924, %v925
      %927 = vrot.lane.b32.xlu0 %v926, 24
      %v928 = vpop.permute.xlu0 %927
      %929 = vrot.lane.b32.xlu0 %v925, 24
      %v930 = vpop.permute.xlu0 %929
      %v933 = vsel %vm565, %v469, %v878
      %v934 = vsel %vm565, %v470, %v880
      %v935 = vsel %vm568, %v933, %v884
      %v936 = vsel %vm568, %v934, %v886
      %v937 = vsel %vm571, %v935, %v890
      %v938 = vsel %vm571, %v936, %v892
      %v939 = vsel %vm574, %v937, %v896
      %v940 = vsel %vm574, %v938, %v898
      %v941 = vsel %vm577, %v939, %v902
      %v942 = vsel %vm577, %v940, %v904
      %v943 = vsel %vm580, %v941, %v910
      %v944 = vsel %vm580, %v942, %v912
      %v945 = vsel %vm583, %v943, %v919
      %v946 = vsel %vm583, %v944, %v921
      %v947 = vsel %vm586, %v945, %v928
      %v948 = vsel %vm586, %v946, %v930
      %949 = vrot.lane.b32.xlu0 %v845, 3
      %v950 = vpop.permute.xlu0 %949
      %951 = vrot.lane.b32.xlu0 %v844, 3
      %v952 = vpop.permute.xlu0 %951
      %955 = vrot.lane.b32.xlu0 %v854, 6
      %v956 = vpop.permute.xlu0 %955
      %957 = vrot.lane.b32.xlu0 %v853, 6
      %v958 = vpop.permute.xlu0 %957
      %961 = vrot.lane.b32.xlu0 %v473, 9
      %v962 = vpop.permute.xlu0 %961
      %963 = vrot.lane.b32.xlu0 %v474, 9
      %v964 = vpop.permute.xlu0 %963
      %967 = vrot.lane.b32.xlu0 %v917, 12
      %v968 = vpop.permute.xlu0 %967
      %969 = vrot.lane.b32.xlu0 %v916, 12
      %v970 = vpop.permute.xlu0 %969
      %973 = vrot.lane.b32.xlu0 %v926, 15
      %v974 = vpop.permute.xlu0 %973
      %975 = vrot.lane.b32.xlu0 %v925, 15
      %v976 = vpop.permute.xlu0 %975
      %981 = vrot.lane.b32.xlu0 %v475, 18
      %v982 = vpop.permute.xlu0 %981
      %983 = vrot.lane.b32.xlu0 %v476, 18
      %v984 = vpop.permute.xlu0 %983
      %v987 = vrot.slane %v475, 1
      %v988 = vrot.slane %v476, 1
      %v989 = vsel %vm493, %v987, %v988
      %990 = vrot.lane.b32.xlu0 %v989, 21
      %v991 = vpop.permute.xlu0 %990
      %992 = vrot.lane.b32.xlu0 %v988, 21
      %v993 = vpop.permute.xlu0 %992
      %v996 = vrot.slane %v475, 2
      %v997 = vrot.slane %v476, 2
      %v998 = vsel %vm503, %v996, %v997
      %999 = vrot.lane.b32.xlu0 %v998, 24
      %v1000 = vpop.permute.xlu0 %999
      %1001 = vrot.lane.b32.xlu0 %v997, 24
      %v1002 = vpop.permute.xlu0 %1001
      %v1005 = vsel %vm565, %v471, %v950
      %v1006 = vsel %vm565, %v472, %v952
      %v1007 = vsel %vm568, %v1005, %v956
      %v1008 = vsel %vm568, %v1006, %v958
      %v1009 = vsel %vm571, %v1007, %v962
      %v1010 = vsel %vm571, %v1008, %v964
      %v1011 = vsel %vm574, %v1009, %v968
      %v1012 = vsel %vm574, %v1010, %v970
      %v1013 = vsel %vm577, %v1011, %v974
      %v1014 = vsel %vm577, %v1012, %v976
      %v1015 = vsel %vm580, %v1013, %v982
      %v1016 = vsel %vm580, %v1014, %v984
      %v1017 = vsel %vm583, %v1015, %v991
      %v1018 = vsel %vm583, %v1016, %v993
      %v1019 = vsel %vm586, %v1017, %v1000
      %v1020 = vsel %vm586, %v1018, %v1002
      %1021 = vrot.lane.b32.xlu0 %v917, 3
      %v1022 = vpop.permute.xlu0 %1021
      %1023 = vrot.lane.b32.xlu0 %v916, 3
      %v1024 = vpop.permute.xlu0 %1023
      %1027 = vrot.lane.b32.xlu0 %v926, 6
      %v1028 = vpop.permute.xlu0 %1027
      %1029 = vrot.lane.b32.xlu0 %v925, 6
      %v1030 = vpop.permute.xlu0 %1029
      %1033 = vrot.lane.b32.xlu0 %v475, 9
      %v1034 = vpop.permute.xlu0 %1033
      %1035 = vrot.lane.b32.xlu0 %v476, 9
      %v1036 = vpop.permute.xlu0 %1035
      %1039 = vrot.lane.b32.xlu0 %v989, 12
      %v1040 = vpop.permute.xlu0 %1039
      %1041 = vrot.lane.b32.xlu0 %v988, 12
      %v1042 = vpop.permute.xlu0 %1041
      %1045 = vrot.lane.b32.xlu0 %v998, 15
      %v1046 = vpop.permute.xlu0 %1045
      %1047 = vrot.lane.b32.xlu0 %v997, 15
      %v1048 = vpop.permute.xlu0 %1047
      %1053 = vrot.lane.b32.xlu0 %v477, 18
      %v1054 = vpop.permute.xlu0 %1053
      %1055 = vrot.lane.b32.xlu0 %v478, 18
      %v1056 = vpop.permute.xlu0 %1055
      %v1059 = vrot.slane %v477, 1
      %v1060 = vrot.slane %v478, 1
      %v1061 = vsel %vm493, %v1059, %v1060
      %1062 = vrot.lane.b32.xlu0 %v1061, 21
      %v1063 = vpop.permute.xlu0 %1062
      %1064 = vrot.lane.b32.xlu0 %v1060, 21
      %v1065 = vpop.permute.xlu0 %1064
      %v1068 = vrot.slane %v477, 2
      %v1069 = vrot.slane %v478, 2
      %v1070 = vsel %vm503, %v1068, %v1069
      %1071 = vrot.lane.b32.xlu0 %v1070, 24
      %v1072 = vpop.permute.xlu0 %1071
      %1073 = vrot.lane.b32.xlu0 %v1069, 24
      %v1074 = vpop.permute.xlu0 %1073
      %v1077 = vsel %vm565, %v473, %v1022
      %v1078 = vsel %vm565, %v474, %v1024
      %v1079 = vsel %vm568, %v1077, %v1028
      %v1080 = vsel %vm568, %v1078, %v1030
      %v1081 = vsel %vm571, %v1079, %v1034
      %v1082 = vsel %vm571, %v1080, %v1036
      %v1083 = vsel %vm574, %v1081, %v1040
      %v1084 = vsel %vm574, %v1082, %v1042
      %v1085 = vsel %vm577, %v1083, %v1046
      %v1086 = vsel %vm577, %v1084, %v1048
      %v1087 = vsel %vm580, %v1085, %v1054
      %v1088 = vsel %vm580, %v1086, %v1056
      %v1089 = vsel %vm583, %v1087, %v1063
      %v1090 = vsel %vm583, %v1088, %v1065
      %v1091 = vsel %vm586, %v1089, %v1072
      %v1092 = vsel %vm586, %v1090, %v1074
      %1093 = vrot.lane.b32.xlu0 %v989, 3
      %v1094 = vpop.permute.xlu0 %1093
      %1095 = vrot.lane.b32.xlu0 %v988, 3
      %v1096 = vpop.permute.xlu0 %1095
      %1099 = vrot.lane.b32.xlu0 %v998, 6
      %v1100 = vpop.permute.xlu0 %1099
      %1101 = vrot.lane.b32.xlu0 %v997, 6
      %v1102 = vpop.permute.xlu0 %1101
      %1105 = vrot.lane.b32.xlu0 %v477, 9
      %v1106 = vpop.permute.xlu0 %1105
      %1107 = vrot.lane.b32.xlu0 %v478, 9
      %v1108 = vpop.permute.xlu0 %1107
      %1111 = vrot.lane.b32.xlu0 %v1061, 12
      %v1112 = vpop.permute.xlu0 %1111
      %1113 = vrot.lane.b32.xlu0 %v1060, 12
      %v1114 = vpop.permute.xlu0 %1113
      %1117 = vrot.lane.b32.xlu0 %v1070, 15
      %v1118 = vpop.permute.xlu0 %1117
      %1119 = vrot.lane.b32.xlu0 %v1069, 15
      %v1120 = vpop.permute.xlu0 %1119
      %1125 = vrot.lane.b32.xlu0 %v479, 18
      %v1126 = vpop.permute.xlu0 %1125
      %1127 = vrot.lane.b32.xlu0 %v480, 18
      %v1128 = vpop.permute.xlu0 %1127
      %v1131 = vrot.slane %v479, 1
      %v1132 = vrot.slane %v480, 1
      %v1133 = vsel %vm493, %v1131, %v1132
      %1134 = vrot.lane.b32.xlu0 %v1133, 21
      %v1135 = vpop.permute.xlu0 %1134
      %1136 = vrot.lane.b32.xlu0 %v1132, 21
      %v1137 = vpop.permute.xlu0 %1136
      %v1140 = vrot.slane %v479, 2
      %v1141 = vrot.slane %v480, 2
      %v1142 = vsel %vm503, %v1140, %v1141
      %1143 = vrot.lane.b32.xlu0 %v1142, 24
      %v1144 = vpop.permute.xlu0 %1143
      %1145 = vrot.lane.b32.xlu0 %v1141, 24
      %v1146 = vpop.permute.xlu0 %1145
      %v1149 = vsel %vm565, %v475, %v1094
      %v1150 = vsel %vm565, %v476, %v1096
      %v1151 = vsel %vm568, %v1149, %v1100
      %v1152 = vsel %vm568, %v1150, %v1102
      %v1153 = vsel %vm571, %v1151, %v1106
      %v1154 = vsel %vm571, %v1152, %v1108
      %v1155 = vsel %vm574, %v1153, %v1112
      %v1156 = vsel %vm574, %v1154, %v1114
      %v1157 = vsel %vm577, %v1155, %v1118
      %v1158 = vsel %vm577, %v1156, %v1120
      %v1159 = vsel %vm580, %v1157, %v1126
      %v1160 = vsel %vm580, %v1158, %v1128
      %v1161 = vsel %vm583, %v1159, %v1135
      %v1162 = vsel %vm583, %v1160, %v1137
      %v1163 = vsel %vm586, %v1161, %v1144
      %v1164 = vsel %vm586, %v1162, %v1146
      %1165 = vrot.lane.b32.xlu0 %v1061, 3
      %v1166 = vpop.permute.xlu0 %1165
      %1167 = vrot.lane.b32.xlu0 %v1060, 3
      %v1168 = vpop.permute.xlu0 %1167
      %1171 = vrot.lane.b32.xlu0 %v1070, 6
      %v1172 = vpop.permute.xlu0 %1171
      %1173 = vrot.lane.b32.xlu0 %v1069, 6
      %v1174 = vpop.permute.xlu0 %1173
      %1177 = vrot.lane.b32.xlu0 %v479, 9
      %v1178 = vpop.permute.xlu0 %1177
      %1179 = vrot.lane.b32.xlu0 %v480, 9
      %v1180 = vpop.permute.xlu0 %1179
      %1183 = vrot.lane.b32.xlu0 %v1133, 12
      %v1184 = vpop.permute.xlu0 %1183
      %1185 = vrot.lane.b32.xlu0 %v1132, 12
      %v1186 = vpop.permute.xlu0 %1185
      %1189 = vrot.lane.b32.xlu0 %v1142, 15
      %v1190 = vpop.permute.xlu0 %1189
      %1191 = vrot.lane.b32.xlu0 %v1141, 15
      %v1192 = vpop.permute.xlu0 %1191
      %1197 = vrot.lane.b32.xlu0 %v481, 18
      %v1198 = vpop.permute.xlu0 %1197
      %1199 = vrot.lane.b32.xlu0 %v482, 18
      %v1200 = vpop.permute.xlu0 %1199
      %v1203 = vrot.slane %v481, 1
      %v1204 = vrot.slane %v482, 1
      %v1205 = vsel %vm493, %v1203, %v1204
      %1206 = vrot.lane.b32.xlu0 %v1205, 21
      %v1207 = vpop.permute.xlu0 %1206
      %1208 = vrot.lane.b32.xlu0 %v1204, 21
      %v1209 = vpop.permute.xlu0 %1208
      %v1212 = vrot.slane %v481, 2
      %v1213 = vrot.slane %v482, 2
      %v1214 = vsel %vm503, %v1212, %v1213
      %1215 = vrot.lane.b32.xlu0 %v1214, 24
      %v1216 = vpop.permute.xlu0 %1215
      %1217 = vrot.lane.b32.xlu0 %v1213, 24
      %v1218 = vpop.permute.xlu0 %1217
      %v1221 = vsel %vm565, %v477, %v1166
      %v1222 = vsel %vm565, %v478, %v1168
      %v1223 = vsel %vm568, %v1221, %v1172
      %v1224 = vsel %vm568, %v1222, %v1174
      %v1225 = vsel %vm571, %v1223, %v1178
      %v1226 = vsel %vm571, %v1224, %v1180
      %v1227 = vsel %vm574, %v1225, %v1184
      %v1228 = vsel %vm574, %v1226, %v1186
      %v1229 = vsel %vm577, %v1227, %v1190
      %v1230 = vsel %vm577, %v1228, %v1192
      %v1231 = vsel %vm580, %v1229, %v1198
      %v1232 = vsel %vm580, %v1230, %v1200
      %v1233 = vsel %vm583, %v1231, %v1207
      %v1234 = vsel %vm583, %v1232, %v1209
      %v1235 = vsel %vm586, %v1233, %v1216
      %v1236 = vsel %vm586, %v1234, %v1218
      %1237 = vrot.lane.b32.xlu0 %v1133, 3
      %v1238 = vpop.permute.xlu0 %1237
      %1239 = vrot.lane.b32.xlu0 %v1132, 3
      %v1240 = vpop.permute.xlu0 %1239
      %1243 = vrot.lane.b32.xlu0 %v1142, 6
      %v1244 = vpop.permute.xlu0 %1243
      %1245 = vrot.lane.b32.xlu0 %v1141, 6
      %v1246 = vpop.permute.xlu0 %1245
      %1249 = vrot.lane.b32.xlu0 %v481, 9
      %v1250 = vpop.permute.xlu0 %1249
      %1251 = vrot.lane.b32.xlu0 %v482, 9
      %v1252 = vpop.permute.xlu0 %1251
      %1255 = vrot.lane.b32.xlu0 %v1205, 12
      %v1256 = vpop.permute.xlu0 %1255
      %1257 = vrot.lane.b32.xlu0 %v1204, 12
      %v1258 = vpop.permute.xlu0 %1257
      %1261 = vrot.lane.b32.xlu0 %v1214, 15
      %v1262 = vpop.permute.xlu0 %1261
      %1263 = vrot.lane.b32.xlu0 %v1213, 15
      %v1264 = vpop.permute.xlu0 %1263
      %1269 = vrot.lane.b32.xlu0 %v483, 18
      %v1270 = vpop.permute.xlu0 %1269
      %1271 = vrot.lane.b32.xlu0 %v484, 18
      %v1272 = vpop.permute.xlu0 %1271
      %v1275 = vrot.slane %v483, 1
      %v1276 = vrot.slane %v484, 1
      %v1277 = vsel %vm493, %v1275, %v1276
      %1278 = vrot.lane.b32.xlu0 %v1277, 21
      %v1279 = vpop.permute.xlu0 %1278
      %1280 = vrot.lane.b32.xlu0 %v1276, 21
      %v1281 = vpop.permute.xlu0 %1280
      %v1284 = vrot.slane %v483, 2
      %v1285 = vrot.slane %v484, 2
      %v1286 = vsel %vm503, %v1284, %v1285
      %1287 = vrot.lane.b32.xlu0 %v1286, 24
      %v1288 = vpop.permute.xlu0 %1287
      %1289 = vrot.lane.b32.xlu0 %v1285, 24
      %v1290 = vpop.permute.xlu0 %1289
      %v1293 = vsel %vm565, %v479, %v1238
      %v1294 = vsel %vm565, %v480, %v1240
      %v1295 = vsel %vm568, %v1293, %v1244
      %v1296 = vsel %vm568, %v1294, %v1246
      %v1297 = vsel %vm571, %v1295, %v1250
      %v1298 = vsel %vm571, %v1296, %v1252
      %v1299 = vsel %vm574, %v1297, %v1256
      %v1300 = vsel %vm574, %v1298, %v1258
      %v1301 = vsel %vm577, %v1299, %v1262
      %v1302 = vsel %vm577, %v1300, %v1264
      %v1303 = vsel %vm580, %v1301, %v1270
      %v1304 = vsel %vm580, %v1302, %v1272
      %v1305 = vsel %vm583, %v1303, %v1279
      %v1306 = vsel %vm583, %v1304, %v1281
      %v1307 = vsel %vm586, %v1305, %v1288
      %v1308 = vsel %vm586, %v1306, %v1290
      %1309 = vrot.lane.b32.xlu0 %v1205, 3
      %v1310 = vpop.permute.xlu0 %1309
      %1311 = vrot.lane.b32.xlu0 %v1204, 3
      %v1312 = vpop.permute.xlu0 %1311
      %1315 = vrot.lane.b32.xlu0 %v1214, 6
      %v1316 = vpop.permute.xlu0 %1315
      %1317 = vrot.lane.b32.xlu0 %v1213, 6
      %v1318 = vpop.permute.xlu0 %1317
      %1321 = vrot.lane.b32.xlu0 %v483, 9
      %v1322 = vpop.permute.xlu0 %1321
      %1323 = vrot.lane.b32.xlu0 %v484, 9
      %v1324 = vpop.permute.xlu0 %1323
      %1327 = vrot.lane.b32.xlu0 %v1277, 12
      %v1328 = vpop.permute.xlu0 %1327
      %1329 = vrot.lane.b32.xlu0 %v1276, 12
      %v1330 = vpop.permute.xlu0 %1329
      %1333 = vrot.lane.b32.xlu0 %v1286, 15
      %v1334 = vpop.permute.xlu0 %1333
      %1335 = vrot.lane.b32.xlu0 %v1285, 15
      %v1336 = vpop.permute.xlu0 %1335
      %1341 = vrot.lane.b32.xlu0 %v485, 18
      %v1342 = vpop.permute.xlu0 %1341
      %1343 = vrot.lane.b32.xlu0 %v486, 18
      %v1344 = vpop.permute.xlu0 %1343
      %v1347 = vrot.slane %v485, 1
      %v1348 = vrot.slane %v486, 1
      %v1349 = vsel %vm493, %v1347, %v1348
      %1350 = vrot.lane.b32.xlu0 %v1349, 21
      %v1351 = vpop.permute.xlu0 %1350
      %1352 = vrot.lane.b32.xlu0 %v1348, 21
      %v1353 = vpop.permute.xlu0 %1352
      %v1356 = vrot.slane %v485, 2
      %v1357 = vrot.slane %v486, 2
      %v1358 = vsel %vm503, %v1356, %v1357
      %1359 = vrot.lane.b32.xlu0 %v1358, 24
      %v1360 = vpop.permute.xlu0 %1359
      %1361 = vrot.lane.b32.xlu0 %v1357, 24
      %v1362 = vpop.permute.xlu0 %1361
      %v1365 = vsel %vm565, %v481, %v1310
      %v1366 = vsel %vm565, %v482, %v1312
      %v1367 = vsel %vm568, %v1365, %v1316
      %v1368 = vsel %vm568, %v1366, %v1318
      %v1369 = vsel %vm571, %v1367, %v1322
      %v1370 = vsel %vm571, %v1368, %v1324
      %v1371 = vsel %vm574, %v1369, %v1328
      %v1372 = vsel %vm574, %v1370, %v1330
      %v1373 = vsel %vm577, %v1371, %v1334
      %v1374 = vsel %vm577, %v1372, %v1336
      %v1375 = vsel %vm580, %v1373, %v1342
      %v1376 = vsel %vm580, %v1374, %v1344
      %v1377 = vsel %vm583, %v1375, %v1351
      %v1378 = vsel %vm583, %v1376, %v1353
      %v1379 = vsel %vm586, %v1377, %v1360
      %v1380 = vsel %vm586, %v1378, %v1362
      %1381 = vrot.lane.b32.xlu0 %v1277, 3
      %v1382 = vpop.permute.xlu0 %1381
      %1383 = vrot.lane.b32.xlu0 %v1276, 3
      %v1384 = vpop.permute.xlu0 %1383
      %1387 = vrot.lane.b32.xlu0 %v1286, 6
      %v1388 = vpop.permute.xlu0 %1387
      %1389 = vrot.lane.b32.xlu0 %v1285, 6
      %v1390 = vpop.permute.xlu0 %1389
      %1393 = vrot.lane.b32.xlu0 %v485, 9
      %v1394 = vpop.permute.xlu0 %1393
      %1395 = vrot.lane.b32.xlu0 %v486, 9
      %v1396 = vpop.permute.xlu0 %1395
      %1399 = vrot.lane.b32.xlu0 %v1349, 12
      %v1400 = vpop.permute.xlu0 %1399
      %1401 = vrot.lane.b32.xlu0 %v1348, 12
      %v1402 = vpop.permute.xlu0 %1401
      %1405 = vrot.lane.b32.xlu0 %v1358, 15
      %v1406 = vpop.permute.xlu0 %1405
      %1407 = vrot.lane.b32.xlu0 %v1357, 15
      %v1408 = vpop.permute.xlu0 %1407
      %1413 = vrot.lane.b32.xlu0 %v487, 18
      %v1414 = vpop.permute.xlu0 %1413
      %1415 = vrot.lane.b32.xlu0 %v488, 18
      %v1416 = vpop.permute.xlu0 %1415
      %v1419 = vrot.slane %v487, 1
      %v1420 = vrot.slane %v488, 1
      %v1421 = vsel %vm493, %v1419, %v1420
      %1422 = vrot.lane.b32.xlu0 %v1421, 21
      %v1423 = vpop.permute.xlu0 %1422
      %1424 = vrot.lane.b32.xlu0 %v1420, 21
      %v1425 = vpop.permute.xlu0 %1424
      %v1428 = vrot.slane %v487, 2
      %v1429 = vrot.slane %v488, 2
      %v1430 = vsel %vm503, %v1428, %v1429
      %1431 = vrot.lane.b32.xlu0 %v1430, 24
      %v1432 = vpop.permute.xlu0 %1431
      %1433 = vrot.lane.b32.xlu0 %v1429, 24
      %v1434 = vpop.permute.xlu0 %1433
      %v1437 = vsel %vm565, %v483, %v1382
      %v1438 = vsel %vm565, %v484, %v1384
      %v1439 = vsel %vm568, %v1437, %v1388
      %v1440 = vsel %vm568, %v1438, %v1390
      %v1441 = vsel %vm571, %v1439, %v1394
      %v1442 = vsel %vm571, %v1440, %v1396
      %v1443 = vsel %vm574, %v1441, %v1400
      %v1444 = vsel %vm574, %v1442, %v1402
      %v1445 = vsel %vm577, %v1443, %v1406
      %v1446 = vsel %vm577, %v1444, %v1408
      %v1447 = vsel %vm580, %v1445, %v1414
      %v1448 = vsel %vm580, %v1446, %v1416
      %v1449 = vsel %vm583, %v1447, %v1423
      %v1450 = vsel %vm583, %v1448, %v1425
      %v1451 = vsel %vm586, %v1449, %v1432
      %v1452 = vsel %vm586, %v1450, %v1434
      %1453 = vrot.lane.b32.xlu0 %v1349, 3
      %v1454 = vpop.permute.xlu0 %1453
      %1455 = vrot.lane.b32.xlu0 %v1348, 3
      %v1456 = vpop.permute.xlu0 %1455
      %1459 = vrot.lane.b32.xlu0 %v1358, 6
      %v1460 = vpop.permute.xlu0 %1459
      %1461 = vrot.lane.b32.xlu0 %v1357, 6
      %v1462 = vpop.permute.xlu0 %1461
      %1465 = vrot.lane.b32.xlu0 %v487, 9
      %v1466 = vpop.permute.xlu0 %1465
      %1467 = vrot.lane.b32.xlu0 %v488, 9
      %v1468 = vpop.permute.xlu0 %1467
      %1471 = vrot.lane.b32.xlu0 %v1421, 12
      %v1472 = vpop.permute.xlu0 %1471
      %1473 = vrot.lane.b32.xlu0 %v1420, 12
      %v1474 = vpop.permute.xlu0 %1473
      %1477 = vrot.lane.b32.xlu0 %v1430, 15
      %v1478 = vpop.permute.xlu0 %1477
      %1479 = vrot.lane.b32.xlu0 %v1429, 15
      %v1480 = vpop.permute.xlu0 %1479
      %1485 = vrot.lane.b32.xlu0 %v489, 18
      %v1486 = vpop.permute.xlu0 %1485
      %1487 = vrot.lane.b32.xlu0 %v490, 18
      %v1488 = vpop.permute.xlu0 %1487
      %v1491 = vrot.slane %v489, 1
      %v1492 = vrot.slane %v490, 1
      %v1493 = vsel %vm493, %v1491, %v1492
      %1494 = vrot.lane.b32.xlu0 %v1493, 21
      %v1495 = vpop.permute.xlu0 %1494
      %1496 = vrot.lane.b32.xlu0 %v1492, 21
      %v1497 = vpop.permute.xlu0 %1496
      %v1500 = vrot.slane %v489, 2
      %v1501 = vrot.slane %v490, 2
      %v1502 = vsel %vm503, %v1500, %v1501
      %1503 = vrot.lane.b32.xlu0 %v1502, 24
      %v1504 = vpop.permute.xlu0 %1503
      %1505 = vrot.lane.b32.xlu0 %v1501, 24
      %v1506 = vpop.permute.xlu0 %1505
      %v1509 = vsel %vm565, %v485, %v1454
      %v1510 = vsel %vm565, %v486, %v1456
      %v1511 = vsel %vm568, %v1509, %v1460
      %v1512 = vsel %vm568, %v1510, %v1462
      %v1513 = vsel %vm571, %v1511, %v1466
      %v1514 = vsel %vm571, %v1512, %v1468
      %v1515 = vsel %vm574, %v1513, %v1472
      %v1516 = vsel %vm574, %v1514, %v1474
      %v1517 = vsel %vm577, %v1515, %v1478
      %v1518 = vsel %vm577, %v1516, %v1480
      %v1519 = vsel %vm580, %v1517, %v1486
      %v1520 = vsel %vm580, %v1518, %v1488
      %v1521 = vsel %vm583, %v1519, %v1495
      %v1522 = vsel %vm583, %v1520, %v1497
      %v1523 = vsel %vm586, %v1521, %v1504
      %v1524 = vsel %vm586, %v1522, %v1506
      %v1527 = vrot.slane %v659, 2
      %v1528 = vrot.slane %v660, 2
      %v1529 = vsel %vm503, %v1527, %v1528
      %vm1534 = vcmask 1043456
      %v1535 = vrot.slane %v731, 4
      %v1536 = vrot.slane %v732, 4
      %v1537 = vsel %vm1534, %v1535, %v1536
      %vm1542 = vcmask 1041408
      %v1543 = vrot.slane %v803, 6
      %v1544 = vrot.slane %v804, 6
      %v1545 = vsel %vm1542, %v1543, %v1544
      %v1549 = vrot.slane %v947, 2
      %v1550 = vrot.slane %v948, 2
      %v1551 = vsel %vm503, %v1549, %v1550
      %v1556 = vrot.slane %v1019, 4
      %v1557 = vrot.slane %v1020, 4
      %v1558 = vsel %vm1534, %v1556, %v1557
      %v1563 = vrot.slane %v1091, 6
      %v1564 = vrot.slane %v1092, 6
      %v1565 = vsel %vm1542, %v1563, %v1564
      %v1569 = vrot.slane %v1235, 2
      %v1570 = vrot.slane %v1236, 2
      %v1571 = vsel %vm503, %v1569, %v1570
      %v1576 = vrot.slane %v1307, 4
      %v1577 = vrot.slane %v1308, 4
      %v1578 = vsel %vm1534, %v1576, %v1577
      %v1583 = vrot.slane %v1379, 6
      %v1584 = vrot.slane %v1380, 6
      %v1585 = vsel %vm1542, %v1583, %v1584
      %v1589 = vrot.slane %v1523, 2
      %v1590 = vrot.slane %v1524, 2
      %v1591 = vsel %vm503, %v1589, %v1590
      %v1593 = vsel %vm503, %v588, %v1527
      %v1594 = vsel %vm1534, %v1528, %v1535
      %v1595 = vsel %vm1542, %v1536, %v1543
      %v1596 = vsel %vm503, %v876, %v1549
      %v1597 = vsel %vm1534, %v1550, %v1556
      %v1598 = vsel %vm1542, %v1557, %v1563
      %v1599 = vsel %vm503, %v1164, %v1569
      %v1600 = vsel %vm1534, %v1570, %v1576
      %v1601 = vsel %vm1542, %v1577, %v1583
      %v1602 = vsel %vm503, %v1452, %v1589
      %v1604 = vlaneseq
      %v1605 = vshrl.u32 %v1604, 7
      %v1606 = vsub.s32 0, %v1605
      %v1607 = vrot.slane %v418, %v1606
      %vm1609 = vcmask 220160
      %v1611 = vsel %vm1609, %v587, 0
      %v1614 = vsel %vm1609, %v1593, 0
      %v1616 = vsel %vm1609, %v1529, 0
      %v1619 = vsel %vm1609, %v1594, 0
      %v1621 = vsel %vm1609, %v1537, 0
      %v1624 = vsel %vm1609, %v1595, 0
      %v1626 = vsel %vm1609, %v1545, 0
      %v1629 = vsel %vm1609, %v875, 0
      %v1632 = vsel %vm1609, %v1596, 0
      %v1634 = vsel %vm1609, %v1551, 0
      %v1637 = vsel %vm1609, %v1597, 0
      %v1639 = vsel %vm1609, %v1558, 0
      %v1642 = vsel %vm1609, %v1598, 0
      %v1644 = vsel %vm1609, %v1565, 0
      %v1647 = vsel %vm1609, %v1163, 0
      %v1650 = vsel %vm1609, %v1599, 0
      %v1652 = vsel %vm1609, %v1571, 0
      %v1655 = vsel %vm1609, %v1600, 0
      %v1657 = vsel %vm1609, %v1578, 0
      %v1660 = vsel %vm1609, %v1601, 0
      %v1662 = vsel %vm1609, %v1585, 0
      %v1665 = vsel %vm1609, %v1451, 0
      %v1668 = vsel %vm1609, %v1602, 0
      %v1670 = vsel %vm1609, %v1591, 0
      %v1672 = vsel %vm1609, %v1590, 0
      %vm1674 = vcmask 1042432
      %v1676 = vsel %vm1674, %v417, 0
      %1678 = vmatprep.subr.mxu0 0.0
      %1679 = vmatpush1.msra.mxu0 %v414
      %1680 = vmatprep.subr.mxu0 0.0
      %1681 = vmatpush1.msra.mxu0 %v415
      %1682 = vmatprep.subr.mxu0 0.0
      %1683 = vmatpush1.msra.mxu0 %v416
      %1684 = vmatprep.subr.mxu0 0.0
      %1685 = vmatpush1.msra.mxu0 %v1676
      %1686 = vmatprep.subr.mxu0 0.0
      %1687 = vmatpush1.msra.mxu0 0.0
      %1688 = vmatprep.subr.mxu0 0.0
      %1689 = vmatpush1.msra.mxu0 0.0
      %1690 = vmatprep.subr.mxu0 0.0
      %1691 = vmatpush1.msra.mxu0 0.0
      %1692 = vmatprep.subr.mxu0 0.0
      %1693 = vmatpush1.msra.mxu0 0.0
      %1694 = vmatprep.subr.mxu0 0.0
      %1695 = vmatpush1.msra.mxu0 0.0
      %1696 = vmatprep.subr.mxu0 0.0
      %1697 = vmatpush1.msra.mxu0 0.0
      %1698 = vmatprep.subr.mxu0 0.0
      %1699 = vmatpush1.msra.mxu0 0.0
      %1700 = vmatprep.subr.mxu0 0.0
      %1701 = vmatpush1.msra.mxu0 0.0
      %1702 = vmatprep.subr.mxu0 0.0
      %1703 = vmatpush1.msra.mxu0 0.0
      %1704 = vmatprep.subr.mxu0 0.0
      %1705 = vmatpush1.msra.mxu0 0.0
      %1706 = vmatprep.subr.mxu0 0.0
      %1707 = vmatpush1.msra.mxu0 0.0
      %1708 = vmatprep.subr.mxu0 0.0
      %1709 = vmatpush1.msra.mxu0 0.0
      %1710 = vmatprep.subr.mxu0 0.0
      %1711 = vmatpush1.msra.mxu0 0.0
      %1712 = vmatprep.subr.mxu0 0.0
      %1713 = vmatpush1.msra.mxu0 0.0
      %1714 = vmatprep.subr.mxu0 0.0
      %1715 = vmatpush1.msra.mxu0 0.0
      %1716 = vmatprep.subr.mxu0 0.0
      %1717 = vmatpush1.msra.mxu0 0.0
      %1718 = vmatprep.subr.mxu0 0.0
      %1719 = vmatpush1.msra.mxu0 0.0
      %1720 = vmatprep.subr.mxu0 0.0
      %1721 = vmatpush1.msra.mxu0 0.0
      %1722 = vmatprep.subr.mxu0 0.0
      %1723 = vmatpush1.msra.mxu0 0.0
      %1724 = vmatprep.subr.mxu0 0.0
      %1725 = vmatpush1.msra.mxu0 0.0
      %1726 = vmatprep.subr.mxu0 0.0
      %1727 = vmatpush1.msra.mxu0 0.0
      %1728 = vmatprep.subr.mxu0 0.0
      %1729 = vmatpush1.msra.mxu0 0.0
      %1730 = vmatprep.subr.mxu0 0.0
      %1731 = vmatpush1.msra.mxu0 0.0
      %1732 = vmatprep.subr.mxu0 0.0
      %1733 = vmatpush1.msra.mxu0 0.0
      %1734 = vmatprep.subr.mxu0 0.0
      %1735 = vmatpush1.msra.mxu0 0.0
      %1736 = vmatprep.subr.mxu0 0.0
      %1737 = vmatpush1.msra.mxu0 0.0
      %1738 = vmatprep.subr.mxu0 0.0
      %1739 = vmatpush1.msra.mxu0 0.0
      %1740 = vmatprep.subr.mxu0 0.0
      %1741 = vmatpush1.msra.mxu0 0.0
      %1742 = vmatprep.mubr.f32.mxu0 0.0
      %1743 = vmatmul.mubr.f32.gmra.mrb[0].mxu0 %v1611
      %v1744 = vpop.f32.mrb[0].mxu0
      %v1745 = vadd.f32 %v1607, %v1744
      %v1746 = vpop.f32.mrb[0].mxu0
      %1747 = vmatprep.mubr.f32.mxu0 0.0
      %1748 = vmatmul.mubr.f32.gmra.mrb[0].mxu0 %v1614
      %v1749 = vpop.f32.mrb[0].mxu0
      %v1750 = vadd.f32 %v1607, %v1749
      %v1751 = vpop.f32.mrb[0].mxu0
      %1752 = vmatprep.mubr.f32.mxu0 0.0
      %1753 = vmatmul.mubr.f32.gmra.mrb[0].mxu0 %v1616
      %v1754 = vpop.f32.mrb[0].mxu0
      %v1755 = vadd.f32 %v1607, %v1754
      %v1756 = vpop.f32.mrb[0].mxu0
      %1757 = vmatprep.mubr.f32.mxu0 0.0
      %1758 = vmatmul.mubr.f32.gmra.mrb[0].mxu0 %v1619
      %v1759 = vpop.f32.mrb[0].mxu0
      %v1760 = vadd.f32 %v1607, %v1759
      %v1761 = vpop.f32.mrb[0].mxu0
      %1762 = vmatprep.mubr.f32.mxu0 0.0
      %1763 = vmatmul.mubr.f32.gmra.mrb[0].mxu0 %v1621
      %v1764 = vpop.f32.mrb[0].mxu0
      %v1765 = vadd.f32 %v1607, %v1764
      %v1766 = vpop.f32.mrb[0].mxu0
      %1767 = vmatprep.mubr.f32.mxu0 0.0
      %1768 = vmatmul.mubr.f32.gmra.mrb[0].mxu0 %v1624
      %v1769 = vpop.f32.mrb[0].mxu0
      %v1770 = vadd.f32 %v1607, %v1769
      %v1771 = vpop.f32.mrb[0].mxu0
      %1772 = vmatprep.mubr.f32.mxu0 0.0
      %1773 = vmatmul.mubr.f32.gmra.mrb[0].mxu0 %v1626
      %v1774 = vpop.f32.mrb[0].mxu0
      %v1775 = vadd.f32 %v1607, %v1774
      %v1776 = vpop.f32.mrb[0].mxu0
      %1777 = vmatprep.mubr.f32.mxu0 0.0
      %1778 = vmatmul.mubr.f32.gmra.mrb[0].mxu0 %v1629
      %v1779 = vpop.f32.mrb[0].mxu0
      %v1780 = vadd.f32 %v1607, %v1779
      %v1781 = vpop.f32.mrb[0].mxu0
      %1782 = vmatprep.mubr.f32.mxu0 0.0
      %1783 = vmatmul.mubr.f32.gmra.mrb[0].mxu0 %v1632
      %v1784 = vpop.f32.mrb[0].mxu0
      %v1785 = vadd.f32 %v1607, %v1784
      %v1786 = vpop.f32.mrb[0].mxu0
      %1787 = vmatprep.mubr.f32.mxu0 0.0
      %1788 = vmatmul.mubr.f32.gmra.mrb[0].mxu0 %v1634
      %v1789 = vpop.f32.mrb[0].mxu0
      %v1790 = vadd.f32 %v1607, %v1789
      %v1791 = vpop.f32.mrb[0].mxu0
      %1792 = vmatprep.mubr.f32.mxu0 0.0
      %1793 = vmatmul.mubr.f32.gmra.mrb[0].mxu0 %v1637
      %v1794 = vpop.f32.mrb[0].mxu0
      %v1795 = vadd.f32 %v1607, %v1794
      %v1796 = vpop.f32.mrb[0].mxu0
      %1797 = vmatprep.mubr.f32.mxu0 0.0
      %1798 = vmatmul.mubr.f32.gmra.mrb[0].mxu0 %v1639
      %v1799 = vpop.f32.mrb[0].mxu0
      %v1800 = vadd.f32 %v1607, %v1799
      %v1801 = vpop.f32.mrb[0].mxu0
      %1802 = vmatprep.mubr.f32.mxu0 0.0
      %1803 = vmatmul.mubr.f32.gmra.mrb[0].mxu0 %v1642
      %v1804 = vpop.f32.mrb[0].mxu0
      %v1805 = vadd.f32 %v1607, %v1804
      %v1806 = vpop.f32.mrb[0].mxu0
      %1807 = vmatprep.mubr.f32.mxu0 0.0
      %1808 = vmatmul.mubr.f32.gmra.mrb[0].mxu0 %v1644
      %v1809 = vpop.f32.mrb[0].mxu0
      %v1810 = vadd.f32 %v1607, %v1809
      %v1811 = vpop.f32.mrb[0].mxu0
      %1812 = vmatprep.mubr.f32.mxu0 0.0
      %1813 = vmatmul.mubr.f32.gmra.mrb[0].mxu0 %v1647
      %v1814 = vpop.f32.mrb[0].mxu0
      %v1815 = vadd.f32 %v1607, %v1814
      %v1816 = vpop.f32.mrb[0].mxu0
      %1817 = vmatprep.mubr.f32.mxu0 0.0
      %1818 = vmatmul.mubr.f32.gmra.mrb[0].mxu0 %v1650
      %v1819 = vpop.f32.mrb[0].mxu0
      %v1820 = vadd.f32 %v1607, %v1819
      %v1821 = vpop.f32.mrb[0].mxu0
      %1822 = vmatprep.mubr.f32.mxu0 0.0
      %1823 = vmatmul.mubr.f32.gmra.mrb[0].mxu0 %v1652
      %v1824 = vpop.f32.mrb[0].mxu0
      %v1825 = vadd.f32 %v1607, %v1824
      %v1826 = vpop.f32.mrb[0].mxu0
      %1827 = vmatprep.mubr.f32.mxu0 0.0
      %1828 = vmatmul.mubr.f32.gmra.mrb[0].mxu0 %v1655
      %v1829 = vpop.f32.mrb[0].mxu0
      %v1830 = vadd.f32 %v1607, %v1829
      %v1831 = vpop.f32.mrb[0].mxu0
      %1832 = vmatprep.mubr.f32.mxu0 0.0
      %1833 = vmatmul.mubr.f32.gmra.mrb[0].mxu0 %v1657
      %v1834 = vpop.f32.mrb[0].mxu0
      %v1835 = vadd.f32 %v1607, %v1834
      %v1836 = vpop.f32.mrb[0].mxu0
      %1837 = vmatprep.mubr.f32.mxu0 0.0
      %1838 = vmatmul.mubr.f32.gmra.mrb[0].mxu0 %v1660
      %v1839 = vpop.f32.mrb[0].mxu0
      %v1840 = vadd.f32 %v1607, %v1839
      %v1841 = vpop.f32.mrb[0].mxu0
      %1842 = vmatprep.mubr.f32.mxu0 0.0
      %1843 = vmatmul.mubr.f32.gmra.mrb[0].mxu0 %v1662
      %v1844 = vpop.f32.mrb[0].mxu0
      %v1845 = vadd.f32 %v1607, %v1844
      %v1846 = vpop.f32.mrb[0].mxu0
      %1847 = vmatprep.mubr.f32.mxu0 0.0
      %1848 = vmatmul.mubr.f32.gmra.mrb[0].mxu0 %v1665
      %v1849 = vpop.f32.mrb[0].mxu0
      %v1850 = vadd.f32 %v1607, %v1849
      %v1851 = vpop.f32.mrb[0].mxu0
      %1852 = vmatprep.mubr.f32.mxu0 0.0
      %1853 = vmatmul.mubr.f32.gmra.mrb[0].mxu0 %v1668
      %v1854 = vpop.f32.mrb[0].mxu0
      %v1855 = vadd.f32 %v1607, %v1854
      %v1856 = vpop.f32.mrb[0].mxu0
      %1857 = vmatprep.mubr.f32.mxu0 0.0
      %1858 = vmatmul.mubr.f32.gmra.mrb[0].mxu0 %v1670
      %v1859 = vpop.f32.mrb[0].mxu0
      %v1860 = vadd.f32 %v1607, %v1859
      %v1861 = vpop.f32.mrb[0].mxu0
      %1862 = vmatprep.mubr.f32.mxu0 0.0
      %1863 = vmatmul.mubr.f32.gmra.mrb[0].mxu0 %v1672
      %v1864 = vpop.f32.mrb[0].mxu0
      %v1865 = vadd.f32 %v1607, %v1864
      %v1866 = vpop.f32.mrb[0].mxu0
      %1867 = vdwg.mxu0
      %vm1868 = vcmp.gt.f32.partialorder %v1745, 0.0
      %vm1869 = vcmp.gt.f32.partialorder %v1750, 0.0
      %vm1870 = vcmp.gt.f32.partialorder %v1755, 0.0
      %vm1871 = vcmp.gt.f32.partialorder %v1760, 0.0
      %vm1872 = vcmp.gt.f32.partialorder %v1765, 0.0
      %vm1873 = vcmp.gt.f32.partialorder %v1770, 0.0
      %vm1874 = vcmp.gt.f32.partialorder %v1775, 0.0
      %vm1875 = vcmp.gt.f32.partialorder %v1780, 0.0
      %vm1876 = vcmp.gt.f32.partialorder %v1785, 0.0
      %vm1877 = vcmp.gt.f32.partialorder %v1790, 0.0
      %vm1878 = vcmp.gt.f32.partialorder %v1795, 0.0
      %vm1879 = vcmp.gt.f32.partialorder %v1800, 0.0
      %vm1880 = vcmp.gt.f32.partialorder %v1805, 0.0
      %vm1881 = vcmp.gt.f32.partialorder %v1810, 0.0
      %vm1882 = vcmp.gt.f32.partialorder %v1815, 0.0
      %vm1883 = vcmp.gt.f32.partialorder %v1820, 0.0
      %vm1884 = vcmp.gt.f32.partialorder %v1825, 0.0
      %vm1885 = vcmp.gt.f32.partialorder %v1830, 0.0
      %vm1886 = vcmp.gt.f32.partialorder %v1835, 0.0
      %vm1887 = vcmp.gt.f32.partialorder %v1840, 0.0
      %vm1888 = vcmp.gt.f32.partialorder %v1845, 0.0
      %vm1889 = vcmp.gt.f32.partialorder %v1850, 0.0
      %vm1890 = vcmp.gt.f32.partialorder %v1855, 0.0
      %vm1891 = vcmp.gt.f32.partialorder %v1860, 0.0
      %vm1892 = vcmp.gt.f32.partialorder %v1865, 0.0
      %v1894 = vlaneseq
      %v1895 = vshrl.u32 %v1894, 7
      %v1896 = vsub.s32 0, %v1895
      %v1897 = vrot.slane %v419, %v1896
      %v1899 = vmul.f32 %v1745, %v1897
      %v1900 = vmul.f32 %v1750, %v1897
      %v1901 = vmul.f32 %v1755, %v1897
      %v1902 = vmul.f32 %v1760, %v1897
      %v1903 = vmul.f32 %v1765, %v1897
      %v1904 = vmul.f32 %v1770, %v1897
      %v1905 = vmul.f32 %v1775, %v1897
      %v1906 = vmul.f32 %v1780, %v1897
      %v1907 = vmul.f32 %v1785, %v1897
      %v1908 = vmul.f32 %v1790, %v1897
      %v1909 = vmul.f32 %v1795, %v1897
      %v1910 = vmul.f32 %v1800, %v1897
      %v1911 = vmul.f32 %v1805, %v1897
      %v1912 = vmul.f32 %v1810, %v1897
      %v1913 = vmul.f32 %v1815, %v1897
      %v1914 = vmul.f32 %v1820, %v1897
      %v1915 = vmul.f32 %v1825, %v1897
      %v1916 = vmul.f32 %v1830, %v1897
      %v1917 = vmul.f32 %v1835, %v1897
      %v1918 = vmul.f32 %v1840, %v1897
      %v1919 = vmul.f32 %v1845, %v1897
      %v1920 = vmul.f32 %v1850, %v1897
      %v1921 = vmul.f32 %v1855, %v1897
      %v1922 = vmul.f32 %v1860, %v1897
      %v1923 = vmul.f32 %v1865, %v1897
      %v1924 = vsel %vm1868, %v1745, %v1899
      %v1925 = vsel %vm1869, %v1750, %v1900
      %v1926 = vsel %vm1870, %v1755, %v1901
      %v1927 = vsel %vm1871, %v1760, %v1902
      %v1928 = vsel %vm1872, %v1765, %v1903
      %v1929 = vsel %vm1873, %v1770, %v1904
      %v1930 = vsel %vm1874, %v1775, %v1905
      %v1931 = vsel %vm1875, %v1780, %v1906
      %v1932 = vsel %vm1876, %v1785, %v1907
      %v1933 = vsel %vm1877, %v1790, %v1908
      %v1934 = vsel %vm1878, %v1795, %v1909
      %v1935 = vsel %vm1879, %v1800, %v1910
      %v1936 = vsel %vm1880, %v1805, %v1911
      %v1937 = vsel %vm1881, %v1810, %v1912
      %v1938 = vsel %vm1882, %v1815, %v1913
      %v1939 = vsel %vm1883, %v1820, %v1914
      %v1940 = vsel %vm1884, %v1825, %v1915
      %v1941 = vsel %vm1885, %v1830, %v1916
      %v1942 = vsel %vm1886, %v1835, %v1917
      %v1943 = vsel %vm1887, %v1840, %v1918
      %v1944 = vsel %vm1888, %v1845, %v1919
      %v1945 = vsel %vm1889, %v1850, %v1920
      %v1946 = vsel %vm1890, %v1855, %v1921
      %v1947 = vsel %vm1891, %v1860, %v1922
      %v1948 = vsel %vm1892, %v1865, %v1923
      %v1952 = vrot.slane %v1925, 6
      %v1953 = vrot.slane %v1926, 6
      %v1954 = vsel %vm1542, %v1952, %v1953
      %v1955 = vrot.slane %v1927, 6
      %v1956 = vsel %vm1542, %v1953, %v1955
      %v1959 = vmax.f32 %v1924, %v1954
      %v1960 = vmax.f32 %v1925, %v1956
      %v1963 = vrot.slane %v1929, 6
      %v1964 = vrot.slane %v1930, 6
      %v1965 = vsel %vm1542, %v1963, %v1964
      %v1969 = vmax.f32 %v1927, %v1963
      %v1970 = vmax.f32 %v1928, %v1965
      %v1971 = vmax.f32 %v1929, %v1964
      %v1975 = vrot.slane %v1932, 6
      %v1976 = vrot.slane %v1933, 6
      %v1977 = vsel %vm1542, %v1975, %v1976
      %v1978 = vrot.slane %v1934, 6
      %v1979 = vsel %vm1542, %v1976, %v1978
      %v1982 = vmax.f32 %v1931, %v1977
      %v1983 = vmax.f32 %v1932, %v1979
      %v1986 = vrot.slane %v1936, 6
      %v1987 = vrot.slane %v1937, 6
      %v1988 = vsel %vm1542, %v1986, %v1987
      %v1992 = vmax.f32 %v1934, %v1986
      %v1993 = vmax.f32 %v1935, %v1988
      %v1994 = vmax.f32 %v1936, %v1987
      %v1998 = vrot.slane %v1939, 6
      %v1999 = vrot.slane %v1940, 6
      %v2000 = vsel %vm1542, %v1998, %v1999
      %v2001 = vrot.slane %v1941, 6
      %v2002 = vsel %vm1542, %v1999, %v2001
      %v2005 = vmax.f32 %v1938, %v2000
      %v2006 = vmax.f32 %v1939, %v2002
      %v2009 = vrot.slane %v1943, 6
      %v2010 = vrot.slane %v1944, 6
      %v2011 = vsel %vm1542, %v2009, %v2010
      %v2015 = vmax.f32 %v1941, %v2009
      %v2016 = vmax.f32 %v1942, %v2011
      %v2017 = vmax.f32 %v1943, %v2010
      %v2021 = vrot.slane %v1946, 6
      %v2022 = vrot.slane %v1947, 6
      %v2023 = vsel %vm1542, %v2021, %v2022
      %v2024 = vrot.slane %v1948, 6
      %v2025 = vsel %vm1542, %v2022, %v2024
      %v2028 = vmax.f32 %v1945, %v2023
      %v2029 = vmax.f32 %v1946, %v2025
      %v2033 = vrot.slane %v1969, 4
      %v2034 = vrot.slane %v1970, 4
      %v2035 = vsel %vm1534, %v2033, %v2034
      %v2036 = vrot.slane %v1971, 4
      %v2037 = vsel %vm1534, %v2034, %v2036
      %2038 = vrot.lane.b32.xlu0 %v2035, 10
      %v2039 = vpop.permute.xlu0 %2038
      %2040 = vrot.lane.b32.xlu0 %v2037, 10
      %v2041 = vpop.permute.xlu0 %2040
      %2046 = vrot.lane.b32.xlu0 %v1982, 20
      %v2047 = vpop.permute.xlu0 %2046
      %2048 = vrot.lane.b32.xlu0 %v1983, 20
      %v2049 = vpop.permute.xlu0 %2048
      %v2055 = vrot.slane %v1992, 4
      %v2056 = vrot.slane %v1993, 4
      %v2057 = vsel %vm1534, %v2055, %v2056
      %v2058 = vrot.slane %v1994, 4
      %v2059 = vsel %vm1534, %v2056, %v2058
      %2060 = vrot.lane.b32.xlu0 %v2057, 30
      %v2061 = vpop.permute.xlu0 %2060
      %2062 = vrot.lane.b32.xlu0 %v2059, 30
      %v2063 = vpop.permute.xlu0 %2062
      %2068 = vrot.lane.b32.xlu0 %v2005, 40
      %v2069 = vpop.permute.xlu0 %2068
      %2070 = vrot.lane.b32.xlu0 %v2006, 40
      %v2071 = vpop.permute.xlu0 %2070
      %v2077 = vrot.slane %v2015, 4
      %v2078 = vrot.slane %v2016, 4
      %v2079 = vsel %vm1534, %v2077, %v2078
      %v2080 = vrot.slane %v2017, 4
      %v2081 = vsel %vm1534, %v2078, %v2080
      %2082 = vrot.lane.b32.xlu0 %v2079, 50
      %v2083 = vpop.permute.xlu0 %2082
      %2084 = vrot.lane.b32.xlu0 %v2081, 50
      %v2085 = vpop.permute.xlu0 %2084
      %2090 = vrot.lane.b32.xlu0 %v2028, 60
      %v2091 = vpop.permute.xlu0 %2090
      %2092 = vrot.lane.b32.xlu0 %v2029, 60
      %v2093 = vpop.permute.xlu0 %2092
      %vm2096 = vcmask 80896
      %v2097 = vsel %vm2096, %v1959, %v2039
      %v2098 = vsel %vm2096, %v1960, %v2041
      %vm2099 = vcmask 162816
      %v2100 = vsel %vm2099, %v2097, %v2047
      %v2101 = vsel %vm2099, %v2098, %v2049
      %vm2102 = vcmask 244736
      %v2103 = vsel %vm2102, %v2100, %v2061
      %v2104 = vsel %vm2102, %v2101, %v2063
      %vm2105 = vcmask 326656
      %v2106 = vsel %vm2105, %v2103, %v2069
      %v2107 = vsel %vm2105, %v2104, %v2071
      %vm2108 = vcmask 408576
      %v2109 = vsel %vm2108, %v2106, %v2083
      %v2110 = vsel %vm2108, %v2107, %v2085
      %vm2111 = vcmask 490496
      %v2112 = vsel %vm2111, %v2109, %v2091
      %v2113 = vsel %vm2111, %v2110, %v2093
      %v2114 = vlaneseq
      %v2115 = vshrl.u32 %v2114, 7
      %v2116 = vlaneseq
      %v2117 = vand.u32 %v2116, 127
      %v2118 = vmul.u32 %v2115, 2
      %vm2119 = vcmp.eq.s32.totalorder %v2117, %v2118
      %v2120 = vsel %vm2119, 1, 0
      %v2121 = vcvt.s32.f32 %v2120
      %v2122 = vadd.s32 %v2118, 1
      %vm2123 = vcmp.eq.s32.totalorder %v2117, %v2122
      %v2124 = vsel %vm2123, 1, 0
      %v2125 = vcvt.s32.f32 %v2124
      %vm2126 = vcmask 113664
      %v2128 = vsel %vm2126, %v2121, 0
      %v2131 = vsel %vm503, %v2113, 0
      %2133 = vmatprep.subr.mxu0 0.0
      %2134 = vmatpush1.msra.mxu0 %v2112
      %2135 = vmatprep.subr.mxu0 0.0
      %2136 = vmatpush1.msra.mxu0 %v2131
      %2137 = vmatprep.subr.mxu0 0.0
      %2138 = vmatpush1.msra.mxu0 0.0
      %2139 = vmatprep.subr.mxu0 0.0
      %2140 = vmatpush1.msra.mxu0 0.0
      %2141 = vmatprep.subr.mxu0 0.0
      %2142 = vmatpush1.msra.mxu0 0.0
      %2143 = vmatprep.subr.mxu0 0.0
      %2144 = vmatpush1.msra.mxu0 0.0
      %2145 = vmatprep.subr.mxu0 0.0
      %2146 = vmatpush1.msra.mxu0 0.0
      %2147 = vmatprep.subr.mxu0 0.0
      %2148 = vmatpush1.msra.mxu0 0.0
      %2149 = vmatprep.subr.mxu0 0.0
      %2150 = vmatpush1.msra.mxu0 0.0
      %2151 = vmatprep.subr.mxu0 0.0
      %2152 = vmatpush1.msra.mxu0 0.0
      %2153 = vmatprep.subr.mxu0 0.0
      %2154 = vmatpush1.msra.mxu0 0.0
      %2155 = vmatprep.subr.mxu0 0.0
      %2156 = vmatpush1.msra.mxu0 0.0
      %2157 = vmatprep.subr.mxu0 0.0
      %2158 = vmatpush1.msra.mxu0 0.0
      %2159 = vmatprep.subr.mxu0 0.0
      %2160 = vmatpush1.msra.mxu0 0.0
      %2161 = vmatprep.subr.mxu0 0.0
      %2162 = vmatpush1.msra.mxu0 0.0
      %2163 = vmatprep.subr.mxu0 0.0
      %2164 = vmatpush1.msra.mxu0 0.0
      %2165 = vmatprep.subr.mxu0 0.0
      %2166 = vmatpush1.msra.mxu0 0.0
      %2167 = vmatprep.subr.mxu0 0.0
      %2168 = vmatpush1.msra.mxu0 0.0
      %2169 = vmatprep.subr.mxu0 0.0
      %2170 = vmatpush1.msra.mxu0 0.0
      %2171 = vmatprep.subr.mxu0 0.0
      %2172 = vmatpush1.msra.mxu0 0.0
      %2173 = vmatprep.subr.mxu0 0.0
      %2174 = vmatpush1.msra.mxu0 0.0
      %2175 = vmatprep.subr.mxu0 0.0
      %2176 = vmatpush1.msra.mxu0 0.0
      %2177 = vmatprep.subr.mxu0 0.0
      %2178 = vmatpush1.msra.mxu0 0.0
      %2179 = vmatprep.subr.mxu0 0.0
      %2180 = vmatpush1.msra.mxu0 0.0
      %2181 = vmatprep.subr.mxu0 0.0
      %2182 = vmatpush1.msra.mxu0 0.0
      %2183 = vmatprep.subr.mxu0 0.0
      %2184 = vmatpush1.msra.mxu0 0.0
      %2185 = vmatprep.subr.mxu0 0.0
      %2186 = vmatpush1.msra.mxu0 0.0
      %2187 = vmatprep.subr.mxu0 0.0
      %2188 = vmatpush1.msra.mxu0 0.0
      %2189 = vmatprep.subr.mxu0 0.0
      %2190 = vmatpush1.msra.mxu0 0.0
      %2191 = vmatprep.subr.mxu0 0.0
      %2192 = vmatpush1.msra.mxu0 0.0
      %2193 = vmatprep.subr.mxu0 0.0
      %2194 = vmatpush1.msra.mxu0 0.0
      %2195 = vmatprep.subr.mxu0 0.0
      %2196 = vmatpush1.msra.mxu0 0.0
      %2197 = vmatprep.mubr.f32.mxu0 0.0
      %2198 = vmatmul.mubr.f32.gmra.mrb[0].mxu0 %v2128
      %v2199 = vpop.f32.mrb[0].mxu0
      %v2200 = vadd.f32 0.0, %v2199
      %v2201 = vpop.f32.mrb[0].mxu0
      %2202 = vdwg.mxu0
      %v2204 = vsel %vm2126, %v2125, 0
      %2206 = vmatprep.subr.mxu0 0.0
      %2207 = vmatpush1.msra.mxu0 %v2112
      %2208 = vmatprep.subr.mxu0 0.0
      %2209 = vmatpush1.msra.mxu0 %v2131
      %2210 = vmatprep.subr.mxu0 0.0
      %2211 = vmatpush1.msra.mxu0 0.0
      %2212 = vmatprep.subr.mxu0 0.0
      %2213 = vmatpush1.msra.mxu0 0.0
      %2214 = vmatprep.subr.mxu0 0.0
      %2215 = vmatpush1.msra.mxu0 0.0
      %2216 = vmatprep.subr.mxu0 0.0
      %2217 = vmatpush1.msra.mxu0 0.0
      %2218 = vmatprep.subr.mxu0 0.0
      %2219 = vmatpush1.msra.mxu0 0.0
      %2220 = vmatprep.subr.mxu0 0.0
      %2221 = vmatpush1.msra.mxu0 0.0
      %2222 = vmatprep.subr.mxu0 0.0
      %2223 = vmatpush1.msra.mxu0 0.0
      %2224 = vmatprep.subr.mxu0 0.0
      %2225 = vmatpush1.msra.mxu0 0.0
      %2226 = vmatprep.subr.mxu0 0.0
      %2227 = vmatpush1.msra.mxu0 0.0
      %2228 = vmatprep.subr.mxu0 0.0
      %2229 = vmatpush1.msra.mxu0 0.0
      %2230 = vmatprep.subr.mxu0 0.0
      %2231 = vmatpush1.msra.mxu0 0.0
      %2232 = vmatprep.subr.mxu0 0.0
      %2233 = vmatpush1.msra.mxu0 0.0
      %2234 = vmatprep.subr.mxu0 0.0
      %2235 = vmatpush1.msra.mxu0 0.0
      %2236 = vmatprep.subr.mxu0 0.0
      %2237 = vmatpush1.msra.mxu0 0.0
      %2238 = vmatprep.subr.mxu0 0.0
      %2239 = vmatpush1.msra.mxu0 0.0
      %2240 = vmatprep.subr.mxu0 0.0
      %2241 = vmatpush1.msra.mxu0 0.0
      %2242 = vmatprep.subr.mxu0 0.0
      %2243 = vmatpush1.msra.mxu0 0.0
      %2244 = vmatprep.subr.mxu0 0.0
      %2245 = vmatpush1.msra.mxu0 0.0
      %2246 = vmatprep.subr.mxu0 0.0
      %2247 = vmatpush1.msra.mxu0 0.0
      %2248 = vmatprep.subr.mxu0 0.0
      %2249 = vmatpush1.msra.mxu0 0.0
      %2250 = vmatprep.subr.mxu0 0.0
      %2251 = vmatpush1.msra.mxu0 0.0
      %2252 = vmatprep.subr.mxu0 0.0
      %2253 = vmatpush1.msra.mxu0 0.0
      %2254 = vmatprep.subr.mxu0 0.0
      %2255 = vmatpush1.msra.mxu0 0.0
      %2256 = vmatprep.subr.mxu0 0.0
      %2257 = vmatpush1.msra.mxu0 0.0
      %2258 = vmatprep.subr.mxu0 0.0
      %2259 = vmatpush1.msra.mxu0 0.0
      %2260 = vmatprep.subr.mxu0 0.0
      %2261 = vmatpush1.msra.mxu0 0.0
      %2262 = vmatprep.subr.mxu0 0.0
      %2263 = vmatpush1.msra.mxu0 0.0
      %2264 = vmatprep.subr.mxu0 0.0
      %2265 = vmatpush1.msra.mxu0 0.0
      %2266 = vmatprep.subr.mxu0 0.0
      %2267 = vmatpush1.msra.mxu0 0.0
      %2268 = vmatprep.subr.mxu0 0.0
      %2269 = vmatpush1.msra.mxu0 0.0
      %2270 = vmatprep.mubr.f32.mxu0 0.0
      %2271 = vmatmul.mubr.f32.gmra.mrb[0].mxu0 %v2204
      %v2272 = vpop.f32.mrb[0].mxu0
      %v2273 = vadd.f32 0.0, %v2272
      %v2274 = vpop.f32.mrb[0].mxu0
      %2275 = vdwg.mxu0
      %v2276 = vmax.f32 %v2200, %v2273
      %v2278 = vrot.slane %v2276, 1
      %2279 = vrot.lane.b32.xlu0 %v2278, 10
      %v2280 = vpop.permute.xlu0 %2279
      %v2282 = vrot.slane %v2276, 2
      %2283 = vrot.lane.b32.xlu0 %v2282, 20
      %v2284 = vpop.permute.xlu0 %2283
      %2286 = vrot.lane.b32.xlu0 %v2276, 20
      %v2287 = vpop.permute.xlu0 %2286
      %2289 = vrot.lane.b32.xlu0 %v2278, 30
      %v2290 = vpop.permute.xlu0 %2289
      %2292 = vrot.lane.b32.xlu0 %v2282, 40
      %v2293 = vpop.permute.xlu0 %2292
      %2295 = vrot.lane.b32.xlu0 %v2276, 40
      %v2296 = vpop.permute.xlu0 %2295
      %2298 = vrot.lane.b32.xlu0 %v2278, 50
      %v2299 = vpop.permute.xlu0 %2298
      %2301 = vrot.lane.b32.xlu0 %v2282, 60
      %v2302 = vpop.permute.xlu0 %2301
      %v2304 = vsel %vm2096, %v2276, %v2280
      %v2305 = vsel %vm2099, %v2304, %v2284
      %v2306 = vsel %vm2102, %v2305, %v2287
      %v2307 = vsel %vm2105, %v2306, %v2290
      %v2308 = vsel %vm2108, %v2307, %v2293
      %v2309 = vsel %vm2111, %v2308, %v2296
      %vm2310 = vcmask 572416
      %v2311 = vsel %vm2310, %v2309, %v2299
      %vm2312 = vcmask 654336
      %v2313 = vsel %vm2312, %v2311, %v2302
      %2314 = vrot.lane.b32.xlu0 %v2276, 118
      %v2315 = vpop.permute.xlu0 %2314
      %2318 = vrot.lane.b32.xlu0 %v2282, 10
      %v2319 = vpop.permute.xlu0 %2318
      %2321 = vrot.lane.b32.xlu0 %v2276, 10
      %v2322 = vpop.permute.xlu0 %2321
      %2324 = vrot.lane.b32.xlu0 %v2278, 20
      %v2325 = vpop.permute.xlu0 %2324
      %2327 = vrot.lane.b32.xlu0 %v2282, 30
      %v2328 = vpop.permute.xlu0 %2327
      %2330 = vrot.lane.b32.xlu0 %v2276, 30
      %v2331 = vpop.permute.xlu0 %2330
      %2333 = vrot.lane.b32.xlu0 %v2278, 40
      %v2334 = vpop.permute.xlu0 %2333
      %2336 = vrot.lane.b32.xlu0 %v2282, 50
      %v2337 = vpop.permute.xlu0 %2336
      %v2339 = vsel %vm2096, %v2315, %v2278
      %v2340 = vsel %vm2099, %v2339, %v2319
      %v2341 = vsel %vm2102, %v2340, %v2322
      %v2342 = vsel %vm2105, %v2341, %v2325
      %v2343 = vsel %vm2108, %v2342, %v2328
      %v2344 = vsel %vm2111, %v2343, %v2331
      %v2345 = vsel %vm2310, %v2344, %v2334
      %v2346 = vsel %vm2312, %v2345, %v2337
      %2347 = vrot.lane.b32.xlu0 %v2276, 108
      %v2348 = vpop.permute.xlu0 %2347
      %2350 = vrot.lane.b32.xlu0 %v2278, 118
      %v2351 = vpop.permute.xlu0 %2350
      %v2354 = vsel %vm2096, %v2348, %v2351
      %v2355 = vsel %vm2099, %v2354, %v2282
      %v2356 = vsel %vm2102, %v2355, %v2276
      %v2357 = vsel %vm2105, %v2356, %v2280
      %v2358 = vsel %vm2108, %v2357, %v2284
      %v2359 = vsel %vm2111, %v2358, %v2287
      %v2360 = vsel %vm2310, %v2359, %v2290
      %v2361 = vsel %vm2312, %v2360, %v2293
      %2362 = vrot.lane.b32.xlu0 %v2276, 98
      %v2363 = vpop.permute.xlu0 %2362
      %2365 = vrot.lane.b32.xlu0 %v2278, 108
      %v2366 = vpop.permute.xlu0 %2365
      %2368 = vrot.lane.b32.xlu0 %v2282, 118
      %v2369 = vpop.permute.xlu0 %2368
      %v2371 = vsel %vm2096, %v2363, %v2366
      %v2372 = vsel %vm2099, %v2371, %v2369
      %v2373 = vsel %vm2102, %v2372, %v2315
      %v2374 = vsel %vm2105, %v2373, %v2278
      %v2375 = vsel %vm2108, %v2374, %v2319
      %v2376 = vsel %vm2111, %v2375, %v2322
      %v2377 = vsel %vm2310, %v2376, %v2325
      %v2378 = vsel %vm2312, %v2377, %v2328
      %2379 = vrot.lane.b32.xlu0 %v2276, 88
      %v2380 = vpop.permute.xlu0 %2379
      %2382 = vrot.lane.b32.xlu0 %v2278, 98
      %v2383 = vpop.permute.xlu0 %2382
      %2385 = vrot.lane.b32.xlu0 %v2282, 108
      %v2386 = vpop.permute.xlu0 %2385
      %v2388 = vsel %vm2096, %v2380, %v2383
      %v2389 = vsel %vm2099, %v2388, %v2386
      %v2390 = vsel %vm2102, %v2389, %v2348
      %v2391 = vsel %vm2105, %v2390, %v2351
      %v2392 = vsel %vm2108, %v2391, %v2282
      %v2393 = vsel %vm2111, %v2392, %v2276
      %v2394 = vsel %vm2310, %v2393, %v2280
      %v2395 = vsel %vm2312, %v2394, %v2284
      %v2397 = vrot.slane %v2346, 3
      %v2400 = vrot.slane %v2361, 6
      %v2403 = vrot.slane %v2378, 1
      %v2406 = vrot.slane %v2395, 4
      %vm2408 = vcmask 1044480
      %v2409 = vsel %vm2408, %v2313, %v2397
      %v2410 = vsel %vm1542, %v2397, %v2400
      %v2411 = vsel %vm493, %v2410, %v2403
      %v2412 = vsel %vm1534, %v2403, %v2406
      %v2414 = vlaneseq
      %v2415 = vshrl.u32 %v2414, 7
      %v2416 = vsub.s32 0, %v2415
      %v2417 = vrot.slane %v432, %v2416
      %vm2419 = vcmask 736256
      %v2421 = vsel %vm2419, %v2409, 0
      %v2424 = vsel %vm2419, %v2411, 0
      %v2427 = vsel %vm2419, %v2412, 0
      %v2429 = vsel %vm2419, %v2406, 0
      %v2432 = vsel %vm1542, %v431, 0
      %2434 = vmatprep.subr.mxu0 0.0
      %2435 = vmatpush1.msra.mxu0 %v420
      %2436 = vmatprep.subr.mxu0 0.0
      %2437 = vmatpush1.msra.mxu0 %v421
      %2438 = vmatprep.subr.mxu0 0.0
      %2439 = vmatpush1.msra.mxu0 %v422
      %2440 = vmatprep.subr.mxu0 0.0
      %2441 = vmatpush1.msra.mxu0 %v423
      %2442 = vmatprep.subr.mxu0 0.0
      %2443 = vmatpush1.msra.mxu0 %v424
      %2444 = vmatprep.subr.mxu0 0.0
      %2445 = vmatpush1.msra.mxu0 %v425
      %2446 = vmatprep.subr.mxu0 0.0
      %2447 = vmatpush1.msra.mxu0 %v426
      %2448 = vmatprep.subr.mxu0 0.0
      %2449 = vmatpush1.msra.mxu0 %v427
      %2450 = vmatprep.subr.mxu0 0.0
      %2451 = vmatpush1.msra.mxu0 %v428
      %2452 = vmatprep.subr.mxu0 0.0
      %2453 = vmatpush1.msra.mxu0 %v429
      %2454 = vmatprep.subr.mxu0 0.0
      %2455 = vmatpush1.msra.mxu0 %v430
      %2456 = vmatprep.subr.mxu0 0.0
      %2457 = vmatpush1.msra.mxu0 %v2432
      %2458 = vmatprep.subr.mxu0 0.0
      %2459 = vmatpush1.msra.mxu0 0.0
      %2460 = vmatprep.subr.mxu0 0.0
      %2461 = vmatpush1.msra.mxu0 0.0
      %2462 = vmatprep.subr.mxu0 0.0
      %2463 = vmatpush1.msra.mxu0 0.0
      %2464 = vmatprep.subr.mxu0 0.0
      %2465 = vmatpush1.msra.mxu0 0.0
      %2466 = vmatprep.subr.mxu0 0.0
      %2467 = vmatpush1.msra.mxu0 0.0
      %2468 = vmatprep.subr.mxu0 0.0
      %2469 = vmatpush1.msra.mxu0 0.0
      %2470 = vmatprep.subr.mxu0 0.0
      %2471 = vmatpush1.msra.mxu0 0.0
      %2472 = vmatprep.subr.mxu0 0.0
      %2473 = vmatpush1.msra.mxu0 0.0
      %2474 = vmatprep.subr.mxu0 0.0
      %2475 = vmatpush1.msra.mxu0 0.0
      %2476 = vmatprep.subr.mxu0 0.0
      %2477 = vmatpush1.msra.mxu0 0.0
      %2478 = vmatprep.subr.mxu0 0.0
      %2479 = vmatpush1.msra.mxu0 0.0
      %2480 = vmatprep.subr.mxu0 0.0
      %2481 = vmatpush1.msra.mxu0 0.0
      %2482 = vmatprep.subr.mxu0 0.0
      %2483 = vmatpush1.msra.mxu0 0.0
      %2484 = vmatprep.subr.mxu0 0.0
      %2485 = vmatpush1.msra.mxu0 0.0
      %2486 = vmatprep.subr.mxu0 0.0
      %2487 = vmatpush1.msra.mxu0 0.0
      %2488 = vmatprep.subr.mxu0 0.0
      %2489 = vmatpush1.msra.mxu0 0.0
      %2490 = vmatprep.subr.mxu0 0.0
      %2491 = vmatpush1.msra.mxu0 0.0
      %2492 = vmatprep.subr.mxu0 0.0
      %2493 = vmatpush1.msra.mxu0 0.0
      %2494 = vmatprep.subr.mxu0 0.0
      %2495 = vmatpush1.msra.mxu0 0.0
      %2496 = vmatprep.subr.mxu0 0.0
      %2497 = vmatpush1.msra.mxu0 0.0
      %2498 = vmatprep.mubr.f32.mxu0 0.0
      %2499 = vmatmul.mubr.f32.gmra.mrb[0].mxu0 %v2421
      %v2500 = vpop.f32.mrb[0].mxu0
      %v2501 = vadd.f32 %v2417, %v2500
      %v2502 = vpop.f32.mrb[0].mxu0
      %2503 = vmatprep.mubr.f32.mxu0 0.0
      %2504 = vmatmul.mubr.f32.gmra.mrb[0].mxu0 %v2424
      %v2505 = vpop.f32.mrb[0].mxu0
      %v2506 = vadd.f32 %v2417, %v2505
      %v2507 = vpop.f32.mrb[0].mxu0
      %2508 = vmatprep.mubr.f32.mxu0 0.0
      %2509 = vmatmul.mubr.f32.gmra.mrb[0].mxu0 %v2427
      %v2510 = vpop.f32.mrb[0].mxu0
      %v2511 = vadd.f32 %v2417, %v2510
      %v2512 = vpop.f32.mrb[0].mxu0
      %2513 = vmatprep.mubr.f32.mxu0 0.0
      %2514 = vmatmul.mubr.f32.gmra.mrb[0].mxu0 %v2429
      %v2515 = vpop.f32.mrb[0].mxu0
      %v2516 = vadd.f32 %v2417, %v2515
      %v2517 = vpop.f32.mrb[0].mxu0
      %2518 = vdwg.mxu0
      %vm2519 = vcmp.gt.f32.partialorder %v2501, 0.0
      %vm2520 = vcmp.gt.f32.partialorder %v2506, 0.0
      %vm2521 = vcmp.gt.f32.partialorder %v2511, 0.0
      %vm2522 = vcmp.gt.f32.partialorder %v2516, 0.0
      %v2524 = vlaneseq
      %v2525 = vshrl.u32 %v2524, 7
      %v2526 = vsub.s32 0, %v2525
      %v2527 = vrot.slane %v433, %v2526
      %v2529 = vmul.f32 %v2501, %v2527
      %v2530 = vmul.f32 %v2506, %v2527
      %v2531 = vmul.f32 %v2511, %v2527
      %v2532 = vmul.f32 %v2516, %v2527
      %v2533 = vsel %vm2519, %v2501, %v2529
      %v2534 = vsel %vm2520, %v2506, %v2530
      %v2535 = vsel %vm2521, %v2511, %v2531
      %v2536 = vsel %vm2522, %v2516, %v2532
      %v2538 = vrot.slane %v2533, 1
      %2539 = vrot.lane.b32.xlu0 %v2538, 16
      %v2540 = vpop.permute.xlu0 %2539
      %v2542 = vrot.slane %v2533, 2
      %2543 = vrot.lane.b32.xlu0 %v2542, 32
      %v2544 = vpop.permute.xlu0 %2543
      %v2546 = vrot.slane %v2533, 5
      %2547 = vrot.lane.b32.xlu0 %v2546, 48
      %v2548 = vpop.permute.xlu0 %2547
      %v2551 = vrot.slane %v2533, 6
      %v2552 = vrot.slane %v2534, 6
      %v2553 = vsel %vm1542, %v2551, %v2552
      %2554 = vrot.lane.b32.xlu0 %v2553, 64
      %v2555 = vpop.permute.xlu0 %2554
      %vm2557 = vcmask 1040384
      %v2558 = vrot.slane %v2533, 7
      %v2559 = vrot.slane %v2534, 7
      %v2560 = vsel %vm2557, %v2558, %v2559
      %2561 = vrot.lane.b32.xlu0 %v2560, 80
      %v2562 = vpop.permute.xlu0 %2561
      %v2564 = vrot.slane %v2534, 2
      %2565 = vrot.lane.b32.xlu0 %v2564, 96
      %v2566 = vpop.permute.xlu0 %2565
      %v2568 = vrot.slane %v2534, 3
      %2569 = vrot.lane.b32.xlu0 %v2568, 112
      %v2570 = vpop.permute.xlu0 %2569
      %v2572 = vrot.slane %v2534, 4
      %vm2574 = vcmask 130048
      %v2575 = vsel %vm2574, %v2533, %v2540
      %vm2576 = vcmask 261120
      %v2577 = vsel %vm2576, %v2575, %v2544
      %vm2578 = vcmask 392192
      %v2579 = vsel %vm2578, %v2577, %v2548
      %vm2580 = vcmask 523264
      %v2581 = vsel %vm2580, %v2579, %v2555
      %v2582 = vsel %vm2312, %v2581, %v2562
      %vm2583 = vcmask 785408
      %v2584 = vsel %vm2583, %v2582, %v2566
      %vm2585 = vcmask 916480
      %v2586 = vsel %vm2585, %v2584, %v2570
      %v2587 = vrot.slane %v2534, 1
      %v2588 = vsel %vm493, %v2538, %v2587
      %2589 = vrot.lane.b32.xlu0 %v2588, 16
      %v2590 = vpop.permute.xlu0 %2589
      %v2592 = vsel %vm503, %v2542, %v2564
      %2593 = vrot.lane.b32.xlu0 %v2592, 32
      %v2594 = vpop.permute.xlu0 %2593
      %v2596 = vrot.slane %v2534, 5
      %2597 = vrot.lane.b32.xlu0 %v2596, 48
      %v2598 = vpop.permute.xlu0 %2597
      %2600 = vrot.lane.b32.xlu0 %v2552, 64
      %v2601 = vpop.permute.xlu0 %2600
      %2603 = vrot.lane.b32.xlu0 %v2559, 80
      %v2604 = vpop.permute.xlu0 %2603
      %v2607 = vrot.slane %v2535, 2
      %v2608 = vsel %vm503, %v2564, %v2607
      %2609 = vrot.lane.b32.xlu0 %v2608, 96
      %v2610 = vpop.permute.xlu0 %2609
      %v2612 = vrot.slane %v2535, 3
      %2613 = vrot.lane.b32.xlu0 %v2612, 112
      %v2614 = vpop.permute.xlu0 %2613
      %v2616 = vrot.slane %v2535, 4
      %v2617 = vsel %vm2574, %v2533, %v2590
      %v2618 = vsel %vm2576, %v2617, %v2594
      %v2619 = vsel %vm2578, %v2618, %v2598
      %v2620 = vsel %vm2580, %v2619, %v2601
      %v2621 = vsel %vm2312, %v2620, %v2604
      %v2622 = vsel %vm2583, %v2621, %v2610
      %v2623 = vsel %vm2585, %v2622, %v2614
      %2624 = vrot.lane.b32.xlu0 %v2587, 16
      %v2625 = vpop.permute.xlu0 %2624
      %2627 = vrot.lane.b32.xlu0 %v2564, 32
      %v2628 = vpop.permute.xlu0 %2627
      %v2630 = vrot.slane %v2535, 5
      %v2631 = vsel %vm1674, %v2596, %v2630
      %2632 = vrot.lane.b32.xlu0 %v2631, 48
      %v2633 = vpop.permute.xlu0 %2632
      %v2635 = vrot.slane %v2535, 6
      %2636 = vrot.lane.b32.xlu0 %v2635, 64
      %v2637 = vpop.permute.xlu0 %2636
      %v2639 = vrot.slane %v2535, 7
      %2640 = vrot.lane.b32.xlu0 %v2639, 80
      %v2641 = vpop.permute.xlu0 %2640
      %2643 = vrot.lane.b32.xlu0 %v2607, 96
      %v2644 = vpop.permute.xlu0 %2643
      %v2647 = vrot.slane %v2536, 4
      %v2648 = vsel %vm1534, %v2616, %v2647
      %v2649 = vsel %vm2574, %v2534, %v2625
      %v2650 = vsel %vm2576, %v2649, %v2628
      %v2651 = vsel %vm2578, %v2650, %v2633
      %v2652 = vsel %vm2580, %v2651, %v2637
      %v2653 = vsel %vm2312, %v2652, %v2641
      %v2654 = vsel %vm2583, %v2653, %v2644
      %v2655 = vsel %vm2585, %v2654, %v2614
      %v2657 = vrot.slane %v2623, 2
      %v2658 = vrot.slane %v2616, 2
      %v2662 = vrot.slane %v2655, 4
      %v2663 = vrot.slane %v2648, 4
      %v2666 = vsel %vm1674, %v2586, %v2657
      %v2667 = vsel %vm1674, %v2572, %v2658
      %v2668 = vsel %vm503, %v2666, %v2662
      %v2669 = vsel %vm503, %v2667, %v2663
      %v2671 = vlaneseq
      %v2672 = vshrl.u32 %v2671, 7
      %v2673 = vsub.s32 0, %v2672
      %v2674 = vrot.slane %v452, %v2673
      %v2677 = vsel %vm2574, %v2669, 0
      %v2679 = vsel %vm2574, %v2663, 0
      %2681 = vmatprep.subr.mxu0 0.0
      %2682 = vmatpush1.msra.mxu0 %v434
      %2683 = vmatprep.subr.mxu0 0.0
      %2684 = vmatpush1.msra.mxu0 %v435
      %2685 = vmatprep.subr.mxu0 0.0
      %2686 = vmatpush1.msra.mxu0 %v436
      %2687 = vmatprep.subr.mxu0 0.0
      %2688 = vmatpush1.msra.mxu0 %v437
      %2689 = vmatprep.subr.mxu0 0.0
      %2690 = vmatpush1.msra.mxu0 %v438
      %2691 = vmatprep.subr.mxu0 0.0
      %2692 = vmatpush1.msra.mxu0 %v439
      %2693 = vmatprep.subr.mxu0 0.0
      %2694 = vmatpush1.msra.mxu0 %v440
      %2695 = vmatprep.subr.mxu0 0.0
      %2696 = vmatpush1.msra.mxu0 %v441
      %2697 = vmatprep.subr.mxu0 0.0
      %2698 = vmatpush1.msra.mxu0 %v442
      %2699 = vmatprep.subr.mxu0 0.0
      %2700 = vmatpush1.msra.mxu0 %v443
      %2701 = vmatprep.subr.mxu0 0.0
      %2702 = vmatpush1.msra.mxu0 %v444
      %2703 = vmatprep.subr.mxu0 0.0
      %2704 = vmatpush1.msra.mxu0 %v445
      %2705 = vmatprep.subr.mxu0 0.0
      %2706 = vmatpush1.msra.mxu0 %v446
      %2707 = vmatprep.subr.mxu0 0.0
      %2708 = vmatpush1.msra.mxu0 %v447
      %2709 = vmatprep.subr.mxu0 0.0
      %2710 = vmatpush1.msra.mxu0 %v448
      %2711 = vmatprep.subr.mxu0 0.0
      %2712 = vmatpush1.msra.mxu0 %v449
      %2713 = vmatprep.subr.mxu0 0.0
      %2714 = vmatpush1.msra.mxu0 %v450
      %2715 = vmatprep.subr.mxu0 0.0
      %2716 = vmatpush1.msra.mxu0 %v451
      %2717 = vmatprep.subr.mxu0 0.0
      %2718 = vmatpush1.msra.mxu0 0.0
      %2719 = vmatprep.subr.mxu0 0.0
      %2720 = vmatpush1.msra.mxu0 0.0
      %2721 = vmatprep.subr.mxu0 0.0
      %2722 = vmatpush1.msra.mxu0 0.0
      %2723 = vmatprep.subr.mxu0 0.0
      %2724 = vmatpush1.msra.mxu0 0.0
      %2725 = vmatprep.subr.mxu0 0.0
      %2726 = vmatpush1.msra.mxu0 0.0
      %2727 = vmatprep.subr.mxu0 0.0
      %2728 = vmatpush1.msra.mxu0 0.0
      %2729 = vmatprep.subr.mxu0 0.0
      %2730 = vmatpush1.msra.mxu0 0.0
      %2731 = vmatprep.subr.mxu0 0.0
      %2732 = vmatpush1.msra.mxu0 0.0
      %2733 = vmatprep.subr.mxu0 0.0
      %2734 = vmatpush1.msra.mxu0 0.0
      %2735 = vmatprep.subr.mxu0 0.0
      %2736 = vmatpush1.msra.mxu0 0.0
      %2737 = vmatprep.subr.mxu0 0.0
      %2738 = vmatpush1.msra.mxu0 0.0
      %2739 = vmatprep.subr.mxu0 0.0
      %2740 = vmatpush1.msra.mxu0 0.0
      %2741 = vmatprep.subr.mxu0 0.0
      %2742 = vmatpush1.msra.mxu0 0.0
      %2743 = vmatprep.subr.mxu0 0.0
      %2744 = vmatpush1.msra.mxu0 0.0
      %2745 = vmatprep.mubr.f32.mxu0 %v2677
      %2746 = vmatmul.mubr.f32.gmra.mrb[0].mxu0 %v2668
      %v2747 = vpop.f32.mrb[0].mxu0
      %v2748 = vadd.f32 %v2674, %v2747
      %v2749 = vpop.f32.mrb[0].mxu0
      %2750 = vmatprep.mubr.f32.mxu0 %v2679
      %2751 = vmatmul.mubr.f32.gmra.mrb[0].mxu0 %v2662
      %v2752 = vpop.f32.mrb[0].mxu0
      %v2753 = vadd.f32 %v2674, %v2752
      %v2754 = vpop.f32.mrb[0].mxu0
      %2755 = vdwg.mxu0
      %vm2756 = vcmp.gt.f32.partialorder %v2748, 0.0
      %vm2757 = vcmp.gt.f32.partialorder %v2753, 0.0
      %v2759 = vlaneseq
      %v2760 = vshrl.u32 %v2759, 7
      %v2761 = vsub.s32 0, %v2760
      %v2762 = vrot.slane %v453, %v2761
      %v2764 = vmul.f32 %v2748, %v2762
      %v2765 = vmul.f32 %v2753, %v2762
      %v2766 = vsel %vm2756, %v2748, %v2764
      %v2767 = vsel %vm2757, %v2753, %v2765
      %v2769 = vlaneseq
      %v2770 = vshrl.u32 %v2769, 7
      %v2771 = vsub.s32 0, %v2770
      %v2772 = vrot.slane %v458, %v2771
      %v2775 = vsel %vm2576, %v2766, 0
      %v2778 = vsel %vm2576, %v2767, 0
      %2780 = vmatprep.subr.mxu0 0.0
      %2781 = vmatpush1.msra.mxu0 %v454
      %2782 = vmatprep.subr.mxu0 0.0
      %2783 = vmatpush1.msra.mxu0 %v455
      %2784 = vmatprep.subr.mxu0 0.0
      %2785 = vmatpush1.msra.mxu0 %v456
      %2786 = vmatprep.subr.mxu0 0.0
      %2787 = vmatpush1.msra.mxu0 %v457
      %2788 = vmatprep.subr.mxu0 0.0
      %2789 = vmatpush1.msra.mxu0 0.0
      %2790 = vmatprep.subr.mxu0 0.0
      %2791 = vmatpush1.msra.mxu0 0.0
      %2792 = vmatprep.subr.mxu0 0.0
      %2793 = vmatpush1.msra.mxu0 0.0
      %2794 = vmatprep.subr.mxu0 0.0
      %2795 = vmatpush1.msra.mxu0 0.0
      %2796 = vmatprep.subr.mxu0 0.0
      %2797 = vmatpush1.msra.mxu0 0.0
      %2798 = vmatprep.subr.mxu0 0.0
      %2799 = vmatpush1.msra.mxu0 0.0
      %2800 = vmatprep.subr.mxu0 0.0
      %2801 = vmatpush1.msra.mxu0 0.0
      %2802 = vmatprep.subr.mxu0 0.0
      %2803 = vmatpush1.msra.mxu0 0.0
      %2804 = vmatprep.subr.mxu0 0.0
      %2805 = vmatpush1.msra.mxu0 0.0
      %2806 = vmatprep.subr.mxu0 0.0
      %2807 = vmatpush1.msra.mxu0 0.0
      %2808 = vmatprep.subr.mxu0 0.0
      %2809 = vmatpush1.msra.mxu0 0.0
      %2810 = vmatprep.subr.mxu0 0.0
      %2811 = vmatpush1.msra.mxu0 0.0
      %2812 = vmatprep.subr.mxu0 0.0
      %2813 = vmatpush1.msra.mxu0 0.0
      %2814 = vmatprep.subr.mxu0 0.0
      %2815 = vmatpush1.msra.mxu0 0.0
      %2816 = vmatprep.subr.mxu0 0.0
      %2817 = vmatpush1.msra.mxu0 0.0
      %2818 = vmatprep.subr.mxu0 0.0
      %2819 = vmatpush1.msra.mxu0 0.0
      %2820 = vmatprep.subr.mxu0 0.0
      %2821 = vmatpush1.msra.mxu0 0.0
      %2822 = vmatprep.subr.mxu0 0.0
      %2823 = vmatpush1.msra.mxu0 0.0
      %2824 = vmatprep.subr.mxu0 0.0
      %2825 = vmatpush1.msra.mxu0 0.0
      %2826 = vmatprep.subr.mxu0 0.0
      %2827 = vmatpush1.msra.mxu0 0.0
      %2828 = vmatprep.subr.mxu0 0.0
      %2829 = vmatpush1.msra.mxu0 0.0
      %2830 = vmatprep.subr.mxu0 0.0
      %2831 = vmatpush1.msra.mxu0 0.0
      %2832 = vmatprep.subr.mxu0 0.0
      %2833 = vmatpush1.msra.mxu0 0.0
      %2834 = vmatprep.subr.mxu0 0.0
      %2835 = vmatpush1.msra.mxu0 0.0
      %2836 = vmatprep.subr.mxu0 0.0
      %2837 = vmatpush1.msra.mxu0 0.0
      %2838 = vmatprep.subr.mxu0 0.0
      %2839 = vmatpush1.msra.mxu0 0.0
      %2840 = vmatprep.subr.mxu0 0.0
      %2841 = vmatpush1.msra.mxu0 0.0
      %2842 = vmatprep.subr.mxu0 0.0
      %2843 = vmatpush1.msra.mxu0 0.0
      %2844 = vmatprep.mubr.f32.mxu0 0.0
      %2845 = vmatmul.mubr.f32.gmra.mrb[0].mxu0 %v2775
      %v2846 = vpop.f32.mrb[0].mxu0
      %v2847 = vadd.f32 %v2772, %v2846
      %v2848 = vpop.f32.mrb[0].mxu0
      %2849 = vmatprep.mubr.f32.mxu0 0.0
      %2850 = vmatmul.mubr.f32.gmra.mrb[0].mxu0 %v2778
      %v2851 = vpop.f32.mrb[0].mxu0
      %v2852 = vadd.f32 %v2772, %v2851
      %v2853 = vpop.f32.mrb[0].mxu0
      %2854 = vdwg.mxu0
      %vm2855 = vcmask 48160
      %v2856 = vsel %vm2855, %v2847, -inf
      %2857 = vmax.xlane.f32.xlu0 %v2856
      %v2858 = vpop.xlane.xlu0 %2857
      %vm2859 = vcmask 40992
      %v2860 = vsel %vm2859, %v2852, -inf
      %2861 = vmax.xlane.f32.xlu0 %v2860
      %v2862 = vpop.xlane.xlu0 %2861
      %v2863 = vsub.f32 %v2847, %v2858
      %v2864 = vsub.f32 %v2852, %v2862
      %v2865 = vmul.f32 %v2863, 1.442695
      %v2866 = vpow.pop %v2865
      %v2867 = vmul.f32 %v2864, 1.442695
      %v2868 = vpow.pop %v2867
      %2871 = vrot.lane.b32.xlu0 %v2866, 124
      %v2872 = vpop.permute.xlu0 %2871
      %2873 = vrot.lane.b32.xlu0 %v2868, 124
      %v2874 = vpop.permute.xlu0 %2873
      %vm2877 = vcmask 15360
      %v2878 = vsel %vm2877, %v2872, 0.0
      %2879 = vadd.xlane.f32.xlu0 %v2878
      %v2880 = vpop.xlane.xlu0 %2879
      %vm2881 = vcmask 8192
      %v2882 = vsel %vm2881, %v2874, 0.0
      %2883 = vadd.xlane.f32.xlu0 %v2882
      %v2884 = vpop.xlane.xlu0 %2883
      %v2885 = vrcp.pop %v2880
      %v2886 = vmul.f32 %v2866, %v2885
      %v2887 = vrcp.pop %v2884
      %v2888 = vmul.f32 %v2868, %v2887
      %vm2889 = vcmask 31744
      %v2890 = vsel %vm2889, %v2847, %v2886
      %v2891 = vsel %vm2889, %v2852, %v2888
      %v2892 = vsel %vm568, %v2890, 0.0
      %v2893 = vsel %vm568, %v2891, 0.0
      %vm2894 = vcmask 64512
      %2895 = vst.msk [vmem:[%s413] sm:$0xff] %vm2894, %v2892
      %vm2896 = vcmask 57344
      %2897 = vst.msk [vmem:[%s413 + $0x8] sm:$0x1] %vm2896, %v2893
      %p2898 = scmp.lt.s32.totalorder %s23, 1
      %s2899 = scalar_select %p2898, %s23, 1
      %s2900 = smul.addr %s2899, 2
      %s2901 = smul.addr %s2900, 8
      %s2902 = scalar_lea.vmem %s12, %s2901
      // Predicated region
      $region69: #{pnet_forward.1} parent=67 // pred_check
        %p2903 = pneg %p298
      $region70: #{pnet_forward.1} parent=67 // pred_check_branch
        %2905 = sbr.rel (%p2903) target = $region72
      $region71: #{pnet_forward.1} parent=67 // pred_region
        _
      $region72: #{pnet_forward.1} parent=67 // pred_fallthru
        _
    $region68: #{pnet_forward.1} parent=5 // pred_fallthru
      _
    %p2906 = scmp.le.s32.totalorder 2, %s18
    // Predicated region
    $region73: #{pnet_forward.1} parent=5 // pred_check
      %p2907 = pneg %p2906
    $region74: #{pnet_forward.1} parent=5 // pred_check_branch
      %2909 = sbr.rel (%p2907) target = $region76
    $region75: #{pnet_forward.1} parent=5 // pred_region
      %s2910 = ssub.s32 %s18, 2
      // Predicated region
      $region77: #{pnet_forward.1} parent=75 // pred_check
        %p2911 = pneg %p304
      $region78: #{pnet_forward.1} parent=75 // pred_check_branch
        %2913 = sbr.rel (%p2911) target = $region80
      $region79: #{pnet_forward.1} parent=75 // pred_region
        %p2914 = scmp.lt.s32.totalorder %s24, 1
        %s2915 = scalar_select %p2914, %s24, 1
        %s2916 = smul.addr %s2915, 2
        %s2917 = smul.addr %s2916, 8
        %s2918 = scalar_lea.vmem %s12, %s2917
      $region80: #{pnet_forward.1} parent=75 // pred_fallthru
        _
    $region76: #{pnet_forward.1} parent=5 // pred_fallthru
      _
  $region6: #{pnet_forward.1} parent=0 // loop_footer
    %s22 = sadd.s32 1, %s18
  $region7: #{pnet_forward.1} parent=0 // loop_footer_branch
    %17 = sbr.rel target = $region3
  $region8: #{pnet_forward.1} parent=0 // loop_exit
    _

</llo_original>
